<compile_context>
chip_gen: v6e
topology: v6e:2x2x1
jax: 0.10.0
libtpu: 0.0.40
codegen_flags: <defaults>
</compile_context>

<pallas_src>
import functools

import jax
import jax.numpy as jnp
from jax import lax
from jax.experimental import pallas as pl
from jax.experimental.pallas import tpu as pltpu


IN_DIM = 4             # motion channels
INTER_DIM = 8          # inter_dim
OUT_DIM = 8            # out_dim (== inter_dim, required by the residual add)
DIM_INTERMEDIATE = 32  # ResBlk dim_intermediate
CIN_PAD = 8            # layer-1 input channels zero-padded 4 -> 8 (sublane align)


# ----------------------------------------------------------------------------
# Fused kernel: one batch element per grid step, everything VMEM-resident.
# ----------------------------------------------------------------------------
def _motion_extractor_kernel(x_ref, w1_ref, w2_ref, w3_ref, w4_ref,
                             o_ref, ext_ref, *, H, W, amp,
                             c_in, c_inter, c_mid, c_out):
    HW = H * W

    def conv3x3_reflect(act, w_ref, cin, cout, relu, scale=1.0):
        """3x3 conv, stride 1, reflection pad 1, no bias.  act: (cin, H*W) f32."""
        # Row-reflected extension of the flattened image:
        #   ext[c, 1 + (y+1)*W + x] == act[c, reflect(y)*W + x]  for y in [-1, H]
        # with rows -1 -> 1 and H -> H-2 (PyTorch ReflectionPad2d(1) semantics).
        ext_ref[0:cin, 1:1 + W] = act[:, W:2 * W]                       # row  1
        ext_ref[0:cin, 1 + W:1 + W + HW] = act                          # rows 0..H-1
        ext_ref[0:cin, 1 + W + HW:1 + 2 * W + HW] = act[:, (H - 2) * W:(H - 1) * W]

        col = lax.broadcasted_iota(jnp.int32, (cin, HW), 1) % W
        left_edge = col == 0             # x == 0   -> reflect to column 1
        right_edge = col == W - 1        # x == W-1 -> reflect to column W-2

        acc = jnp.zeros((cout, HW), jnp.float32)
        for dy in (-1, 0, 1):
            for dx in (-1, 0, 1):
                t = (dy + 1) * 3 + (dx + 1)
                o = 1 + (dy + 1) * W + dx
                main = ext_ref[0:cin, o:o + HW]
                if dx == -1:
                    tap = jnp.where(left_edge,
                                    ext_ref[0:cin, o + 2:o + 2 + HW], main)
                elif dx == 1:
                    tap = jnp.where(right_edge,
                                    ext_ref[0:cin, o - 2:o - 2 + HW], main)
                else:
                    tap = main
                acc = acc + jnp.dot(w_ref[t], tap,
                                    preferred_element_type=jnp.float32)

        if relu:
            acc = jnp.maximum(acc, 0.0)
        if scale != 1.0:
            acc = acc * jnp.float32(scale)
        return acc

    x = x_ref[0].astype(jnp.float32)                                    # (c_in, HW)
    # motion_delta = relu(g(motion)) * amp_factor
    md = conv3x3_reflect(x, w1_ref, c_in, c_inter, relu=True, scale=amp)
    # motion_delta = h_conv(motion_delta)           (no activation)
    md = conv3x3_reflect(md, w2_ref, c_inter, c_inter, relu=False)
    # ResBlk: y = cba_2(relu(cba_1(md))) + md
    y = conv3x3_reflect(md, w3_ref, c_inter, c_mid, relu=True)
    y = conv3x3_reflect(y, w4_ref, c_mid, c_out, relu=False)
    o_ref[0] = (y + md).astype(o_ref.dtype)


# ----------------------------------------------------------------------------
# Parameters + wrapper
# ----------------------------------------------------------------------------
def init_motion_extractor_params(key, in_dim, inter_dim, out_dim,
                                 dim_intermediate=DIM_INTERMEDIATE):
    """Deterministic synthetic weights, HWIO layout (kh, kw, Cin, Cout)."""
    def conv_w(k, cin, cout):
        fan_in = cin * 9
        return (jax.random.normal(k, (3, 3, cin, cout), jnp.float32)
                / jnp.sqrt(fan_in))

    k1, k2, k3, k4 = jax.random.split(key, 4)
    return {
        "g":        conv_w(k1, in_dim, inter_dim),
        "h_conv":   conv_w(k2, inter_dim, inter_dim),
        "res_cba1": conv_w(k3, inter_dim, dim_intermediate),
        "res_cba2": conv_w(k4, dim_intermediate, out_dim),
    }


def _prep_weight(w_hwio, cin_pad=None):
    """HWIO (3,3,Cin,Cout) -> tap-major matmul weights (9, Cout, Cin[_pad])."""
    kh, kw, cin, cout = w_hwio.shape
    w = jnp.transpose(w_hwio, (0, 1, 3, 2)).reshape(kh * kw, cout, cin)
    if cin_pad is not None and cin_pad > cin:
        w = jnp.pad(w, ((0, 0), (0, 0), (0, cin_pad - cin)))
    return w


def motion_extractor_forward(params, motion_nchw, amp_factor=1.0):
    """Exact semantics of MotionExtractor.forward (NCHW in / NCHW out)."""
    N, C, H, W = motion_nchw.shape
    HW = H * W

    # NCHW -> (N, C, H*W): a pure reshape, no transpose.  Zero-pad channels to
    # 8 so every tap operand is sublane aligned (padded channels and matching
    # weight columns are zero -> result unchanged).
    x = motion_nchw.reshape(N, C, HW)
    if C < CIN_PAD:
        x = jnp.pad(x, ((0, 0), (0, CIN_PAD - C), (0, 0)))

    w1 = _prep_weight(params["g"], cin_pad=CIN_PAD)        # (9, inter, 8)
    w2 = _prep_weight(params["h_conv"])                    # (9, inter, inter)
    w3 = _prep_weight(params["res_cba1"])                  # (9, mid,   inter)
    w4 = _prep_weight(params["res_cba2"])                  # (9, out,   mid)

    c_in, c_inter, c_mid, c_out = w1.shape[2], w1.shape[1], w3.shape[1], w4.shape[1]
    assert c_out == c_inter, "ResBlk residual add requires out_dim == inter_dim"

    kernel = functools.partial(
        _motion_extractor_kernel, H=H, W=W, amp=float(amp_factor),
        c_in=c_in, c_inter=c_inter, c_mid=c_mid, c_out=c_out)

    const3 = lambda n: (0, 0, 0)
    out = pl.pallas_call(
        kernel,
        out_shape=jax.ShapeDtypeStruct((N, c_out, HW), jnp.float32),
        grid=(N,),
        in_specs=[
            pl.BlockSpec((1, c_in, HW), lambda n: (n, 0, 0)),
            pl.BlockSpec(w1.shape, const3),
            pl.BlockSpec(w2.shape, const3),
            pl.BlockSpec(w3.shape, const3),
            pl.BlockSpec(w4.shape, const3),
        ],
        out_specs=pl.BlockSpec((1, c_out, HW), lambda n: (n, 0, 0)),
        scratch_shapes=[
            pltpu.VMEM((max(c_in, c_inter, c_mid), HW + 2 * W + 2), jnp.float32),
        ],
        compiler_params=pltpu.CompilerParams(
            dimension_semantics=("parallel",)),
    )(x, w1, w2, w3, w4)

    return out.reshape(N, c_out, H, W)


# ----------------------------------------------------------------------------
# Pure-JAX reference (correctness check only)
# ----------------------------------------------------------------------------
def _ref_conv(x_nhwc, w_hwio):
    xp = jnp.pad(x_nhwc, ((0, 0), (1, 1), (1, 1), (0, 0)), mode="reflect")
    return lax.conv_general_dilated(
        xp, w_hwio, window_strides=(1, 1), padding="VALID",
        dimension_numbers=("NHWC", "HWIO", "NHWC"))


def _ref_forward(params, motion_nchw, amp_factor=1.0):
    x = jnp.transpose(motion_nchw, (0, 2, 3, 1))
    md = jnp.maximum(_ref_conv(x, params["g"]), 0.0) * amp_factor
    md = _ref_conv(md, params["h_conv"])
    y = jnp.maximum(_ref_conv(md, params["res_cba1"]), 0.0)
    y = _ref_conv(y, params["res_cba2"]) + md
    return jnp.transpose(y, (0, 3, 1, 2))


# ----------------------------------------------------------------------------
if __name__ == "__main__":
    N, H, W = 2, 16, 16
    AMP = 2.0

    key = jax.random.PRNGKey(0)
    k_x, k_p = jax.random.split(key)
    motion = jax.random.normal(k_x, (N, IN_DIM, H, W), jnp.float32)   # NCHW
    params = init_motion_extractor_params(k_p, IN_DIM, INTER_DIM, OUT_DIM)

    out = motion_extractor_forward(params, motion, amp_factor=AMP)
    out = jax.block_until_ready(out)

    ref = _ref_forward(params, motion, amp_factor=AMP)
    assert out.shape == (N, OUT_DIM, H, W)
    max_err = float(jnp.max(jnp.abs(out - ref)))
    assert jnp.allclose(out, ref, atol=5e-4, rtol=5e-4), max_err

    print("KERNEL_OK")
</pallas_src>

<mosaic_0001>
module attributes {stable_mosaic.version = 11 : i64} {
  func.func @_motion_extractor_kernel(%arg0: i32, %arg1: memref<1x8x256xf32, #tpu.memory_space<vmem>>, %arg2: memref<9x8x8xf32, #tpu.memory_space<vmem>>, %arg3: memref<9x8x8xf32, #tpu.memory_space<vmem>>, %arg4: memref<9x32x8xf32, #tpu.memory_space<vmem>>, %arg5: memref<9x8x32xf32, #tpu.memory_space<vmem>>, %arg6: memref<1x8x256xf32, #tpu.memory_space<vmem>>, %arg7: memref<32x290xf32, #tpu.memory_space<vmem>>) attributes {dimension_semantics = [#tpu.dimension_semantics<parallel>], iteration_bounds = array<i64: 2>, scalar_prefetch = 0 : i64, scratch_operands = 1 : i64, tpu.core_type = #tpu.core_type<tc>, window_params = [{transform_indices = @transform_0, window_bounds = array<i64: 1, 8, 256>}, {pipeline_mode = #tpu.pipeline_mode<synchronous>, transform_indices = @transform_1, window_bounds = array<i64: 9, 8, 8>}, {pipeline_mode = #tpu.pipeline_mode<synchronous>, transform_indices = @transform_2, window_bounds = array<i64: 9, 8, 8>}, {pipeline_mode = #tpu.pipeline_mode<synchronous>, transform_indices = @transform_3, window_bounds = array<i64: 9, 32, 8>}, {pipeline_mode = #tpu.pipeline_mode<synchronous>, transform_indices = @transform_4, window_bounds = array<i64: 9, 8, 32>}, {transform_indices = @transform_5, window_bounds = array<i64: 1, 8, 256>}]} {
    %c0 = arith.constant 0 : index
    %c0_0 = arith.constant 0 : index
    %c0_1 = arith.constant 0 : index
    %0 = vector.load %arg1[%c0, %c0_0, %c0_1] : memref<1x8x256xf32, #tpu.memory_space<vmem>>, vector<1x8x256xf32>
    %1 = vector.shape_cast %0 : vector<1x8x256xf32> to vector<8x256xf32>
    %2 = vector.extract_strided_slice %1 {offsets = [0, 16], sizes = [8, 16], strides = [1, 1]} : vector<8x256xf32> to vector<8x16xf32>
    %c0_2 = arith.constant 0 : index
    %c1 = arith.constant 1 : index
    %3 = vector.load %arg7[%c0_2, %c1] : memref<32x290xf32, #tpu.memory_space<vmem>>, vector<8x16xf32>
    tpu.vector_store %arg7[%c0_2, %c1], %2 {strides = array<i32>} : memref<32x290xf32, #tpu.memory_space<vmem>>, vector<8x16xf32>,
    %c0_3 = arith.constant 0 : index
    %c17 = arith.constant 17 : index
    %4 = vector.load %arg7[%c0_3, %c17] : memref<32x290xf32, #tpu.memory_space<vmem>>, vector<8x256xf32>
    tpu.vector_store %arg7[%c0_3, %c17], %1 {strides = array<i32>} : memref<32x290xf32, #tpu.memory_space<vmem>>, vector<8x256xf32>,
    %5 = vector.extract_strided_slice %1 {offsets = [0, 224], sizes = [8, 16], strides = [1, 1]} : vector<8x256xf32> to vector<8x16xf32>
    %c0_4 = arith.constant 0 : index
    %c273 = arith.constant 273 : index
    %6 = vector.load %arg7[%c0_4, %c273] : memref<32x290xf32, #tpu.memory_space<vmem>>, vector<8x16xf32>
    tpu.vector_store %arg7[%c0_4, %c273], %5 {strides = array<i32>} : memref<32x290xf32, #tpu.memory_space<vmem>>, vector<8x16xf32>,
    %7 = tpu.iota {dimensions = array<i32: 1>} : vector<8x256xi32>
    %c16_i32 = arith.constant 16 : i32
    %c0_i32 = arith.constant 0 : i32
    %8 = arith.cmpi eq, %c16_i32, %c0_i32 : i32
    %c1_i32 = arith.constant 1 : i32
    %9 = arith.select %8, %c1_i32, %c16_i32 : i32
    %10 = vector.broadcast %9 : i32 to vector<8x256xi32>
    %11 = arith.remsi %7, %10 : vector<8x256xi32>
    %c0_i32_5 = arith.constant 0 : i32
    %12 = vector.broadcast %c0_i32_5 : i32 to vector<8x256xi32>
    %13 = arith.cmpi ne, %11, %12 : vector<8x256xi32>
    %c0_i32_6 = arith.constant 0 : i32
    %14 = vector.broadcast %c0_i32_6 : i32 to vector<8x256xi32>
    %15 = arith.cmpi slt, %11, %14 : vector<8x256xi32>
    %c0_i32_7 = arith.constant 0 : i32
    %16 = arith.cmpi slt, %9, %c0_i32_7 : i32
    %17 = vector.broadcast %16 : i1 to vector<8x256xi1>
    %18 = vector.broadcast %17 : vector<8x256xi1> to vector<8x256xi1>
    %19 = arith.xori %15, %18 : vector<8x256xi1>
    %20 = arith.andi %19, %13 : vector<8x256xi1>
    %21 = vector.broadcast %9 : i32 to vector<8x256xi32>
    %22 = arith.addi %11, %21 : vector<8x256xi32>
    %23 = arith.select %20, %22, %11 : vector<8x256xi1>, vector<8x256xi32>
    %c0_i32_8 = arith.constant 0 : i32
    %24 = vector.broadcast %c0_i32_8 : i32 to vector<8x256xi32>
    %25 = arith.cmpi eq, %23, %24 : vector<8x256xi32>
    %c15_i32 = arith.constant 15 : i32
    %26 = vector.broadcast %c15_i32 : i32 to vector<8x256xi32>
    %27 = arith.cmpi eq, %23, %26 : vector<8x256xi32>
    %cst = arith.constant 0.000000e+00 : f32
    %28 = vector.broadcast %cst : f32 to vector<8x256xf32>
    %c0_9 = arith.constant 0 : index
    %c0_10 = arith.constant 0 : index
    %29 = vector.load %arg7[%c0_9, %c0_10] : memref<32x290xf32, #tpu.memory_space<vmem>>, vector<8x256xf32>
    %c0_11 = arith.constant 0 : index
    %c2 = arith.constant 2 : index
    %30 = vector.load %arg7[%c0_11, %c2] : memref<32x290xf32, #tpu.memory_space<vmem>>, vector<8x256xf32>
    %31 = arith.select %25, %30, %29 : vector<8x256xi1>, vector<8x256xf32>
    %c0_12 = arith.constant 0 : index
    %c0_13 = arith.constant 0 : index
    %c0_14 = arith.constant 0 : index
    %32 = vector.load %arg2[%c0_12, %c0_13, %c0_14] : memref<9x8x8xf32, #tpu.memory_space<vmem>>, vector<1x8x8xf32>
    %33 = vector.shape_cast %32 : vector<1x8x8xf32> to vector<8x8xf32>
    %cst_15 = arith.constant dense<0.000000e+00> : vector<8x256xf32>
    %34 = tpu.matmul %33, %31, %cst_15 {dimension_numbers = #tpu.dot_dimension_numbers<[1], [0], [0], [1], [0, 0, 1, 1], [], []>} : vector<8x8xf32>, vector<8x256xf32>, vector<8x256xf32> -> vector<8x256xf32>
    %35 = arith.addf %28, %34 : vector<8x256xf32>
    %c0_16 = arith.constant 0 : index
    %c1_17 = arith.constant 1 : index
    %36 = vector.load %arg7[%c0_16, %c1_17] : memref<32x290xf32, #tpu.memory_space<vmem>>, vector<8x256xf32>
    %c1_18 = arith.constant 1 : index
    %c0_19 = arith.constant 0 : index
    %c0_20 = arith.constant 0 : index
    %37 = vector.load %arg2[%c1_18, %c0_19, %c0_20] : memref<9x8x8xf32, #tpu.memory_space<vmem>>, vector<1x8x8xf32>
    %38 = vector.shape_cast %37 : vector<1x8x8xf32> to vector<8x8xf32>
    %cst_21 = arith.constant dense<0.000000e+00> : vector<8x256xf32>
    %39 = tpu.matmul %38, %36, %cst_21 {dimension_numbers = #tpu.dot_dimension_numbers<[1], [0], [0], [1], [0, 0, 1, 1], [], []>} : vector<8x8xf32>, vector<8x256xf32>, vector<8x256xf32> -> vector<8x256xf32>
    %40 = arith.addf %35, %39 : vector<8x256xf32>
    %c0_22 = arith.constant 0 : index
    %c2_23 = arith.constant 2 : index
    %41 = vector.load %arg7[%c0_22, %c2_23] : memref<32x290xf32, #tpu.memory_space<vmem>>, vector<8x256xf32>
    %c0_24 = arith.constant 0 : index
    %c0_25 = arith.constant 0 : index
    %42 = vector.load %arg7[%c0_24, %c0_25] : memref<32x290xf32, #tpu.memory_space<vmem>>, vector<8x256xf32>
    %43 = arith.select %27, %42, %41 : vector<8x256xi1>, vector<8x256xf32>
    %c2_26 = arith.constant 2 : index
    %c0_27 = arith.constant 0 : index
    %c0_28 = arith.constant 0 : index
    %44 = vector.load %arg2[%c2_26, %c0_27, %c0_28] : memref<9x8x8xf32, #tpu.memory_space<vmem>>, vector<1x8x8xf32>
    %45 = vector.shape_cast %44 : vector<1x8x8xf32> to vector<8x8xf32>
    %cst_29 = arith.constant dense<0.000000e+00> : vector<8x256xf32>
    %46 = tpu.matmul %45, %43, %cst_29 {dimension_numbers = #tpu.dot_dimension_numbers<[1], [0], [0], [1], [0, 0, 1, 1], [], []>} : vector<8x8xf32>, vector<8x256xf32>, vector<8x256xf32> -> vector<8x256xf32>
    %47 = arith.addf %40, %46 : vector<8x256xf32>
    %c0_30 = arith.constant 0 : index
    %c16 = arith.constant 16 : index
    %48 = vector.load %arg7[%c0_30, %c16] : memref<32x290xf32, #tpu.memory_space<vmem>>, vector<8x256xf32>
    %c0_31 = arith.constant 0 : index
    %c18 = arith.constant 18 : index
    %49 = vector.load %arg7[%c0_31, %c18] : memref<32x290xf32, #tpu.memory_space<vmem>>, vector<8x256xf32>
    %50 = arith.select %25, %49, %48 : vector<8x256xi1>, vector<8x256xf32>
    %c3 = arith.constant 3 : index
    %c0_32 = arith.constant 0 : index
    %c0_33 = arith.constant 0 : index
    %51 = vector.load %arg2[%c3, %c0_32, %c0_33] : memref<9x8x8xf32, #tpu.memory_space<vmem>>, vector<1x8x8xf32>
    %52 = vector.shape_cast %51 : vector<1x8x8xf32> to vector<8x8xf32>
    %cst_34 = arith.constant dense<0.000000e+00> : vector<8x256xf32>
    %53 = tpu.matmul %52, %50, %cst_34 {dimension_numbers = #tpu.dot_dimension_numbers<[1], [0], [0], [1], [0, 0, 1, 1], [], []>} : vector<8x8xf32>, vector<8x256xf32>, vector<8x256xf32> -> vector<8x256xf32>
    %54 = arith.addf %47, %53 : vector<8x256xf32>
    %c0_35 = arith.constant 0 : index
    %c17_36 = arith.constant 17 : index
    %55 = vector.load %arg7[%c0_35, %c17_36] : memref<32x290xf32, #tpu.memory_space<vmem>>, vector<8x256xf32>
    %c4 = arith.constant 4 : index
    %c0_37 = arith.constant 0 : index
    %c0_38 = arith.constant 0 : index
    %56 = vector.load %arg2[%c4, %c0_37, %c0_38] : memref<9x8x8xf32, #tpu.memory_space<vmem>>, vector<1x8x8xf32>
    %57 = vector.shape_cast %56 : vector<1x8x8xf32> to vector<8x8xf32>
    %cst_39 = arith.constant dense<0.000000e+00> : vector<8x256xf32>
    %58 = tpu.matmul %57, %55, %cst_39 {dimension_numbers = #tpu.dot_dimension_numbers<[1], [0], [0], [1], [0, 0, 1, 1], [], []>} : vector<8x8xf32>, vector<8x256xf32>, vector<8x256xf32> -> vector<8x256xf32>
    %59 = arith.addf %54, %58 : vector<8x256xf32>
    %c0_40 = arith.constant 0 : index
    %c18_41 = arith.constant 18 : index
    %60 = vector.load %arg7[%c0_40, %c18_41] : memref<32x290xf32, #tpu.memory_space<vmem>>, vector<8x256xf32>
    %c0_42 = arith.constant 0 : index
    %c16_43 = arith.constant 16 : index
    %61 = vector.load %arg7[%c0_42, %c16_43] : memref<32x290xf32, #tpu.memory_space<vmem>>, vector<8x256xf32>
    %62 = arith.select %27, %61, %60 : vector<8x256xi1>, vector<8x256xf32>
    %c5 = arith.constant 5 : index
    %c0_44 = arith.constant 0 : index
    %c0_45 = arith.constant 0 : index
    %63 = vector.load %arg2[%c5, %c0_44, %c0_45] : memref<9x8x8xf32, #tpu.memory_space<vmem>>, vector<1x8x8xf32>
    %64 = vector.shape_cast %63 : vector<1x8x8xf32> to vector<8x8xf32>
    %cst_46 = arith.constant dense<0.000000e+00> : vector<8x256xf32>
    %65 = tpu.matmul %64, %62, %cst_46 {dimension_numbers = #tpu.dot_dimension_numbers<[1], [0], [0], [1], [0, 0, 1, 1], [], []>} : vector<8x8xf32>, vector<8x256xf32>, vector<8x256xf32> -> vector<8x256xf32>
    %66 = arith.addf %59, %65 : vector<8x256xf32>
    %c0_47 = arith.constant 0 : index
    %c32 = arith.constant 32 : index
    %67 = vector.load %arg7[%c0_47, %c32] : memref<32x290xf32, #tpu.memory_space<vmem>>, vector<8x256xf32>
    %c0_48 = arith.constant 0 : index
    %c34 = arith.constant 34 : index
    %68 = vector.load %arg7[%c0_48, %c34] : memref<32x290xf32, #tpu.memory_space<vmem>>, vector<8x256xf32>
    %69 = arith.select %25, %68, %67 : vector<8x256xi1>, vector<8x256xf32>
    %c6 = arith.constant 6 : index
    %c0_49 = arith.constant 0 : index
    %c0_50 = arith.constant 0 : index
    %70 = vector.load %arg2[%c6, %c0_49, %c0_50] : memref<9x8x8xf32, #tpu.memory_space<vmem>>, vector<1x8x8xf32>
    %71 = vector.shape_cast %70 : vector<1x8x8xf32> to vector<8x8xf32>
    %cst_51 = arith.constant dense<0.000000e+00> : vector<8x256xf32>
    %72 = tpu.matmul %71, %69, %cst_51 {dimension_numbers = #tpu.dot_dimension_numbers<[1], [0], [0], [1], [0, 0, 1, 1], [], []>} : vector<8x8xf32>, vector<8x256xf32>, vector<8x256xf32> -> vector<8x256xf32>
    %73 = arith.addf %66, %72 : vector<8x256xf32>
    %c0_52 = arith.constant 0 : index
    %c33 = arith.constant 33 : index
    %74 = vector.load %arg7[%c0_52, %c33] : memref<32x290xf32, #tpu.memory_space<vmem>>, vector<8x256xf32>
    %c7 = arith.constant 7 : index
    %c0_53 = arith.constant 0 : index
    %c0_54 = arith.constant 0 : index
    %75 = vector.load %arg2[%c7, %c0_53, %c0_54] : memref<9x8x8xf32, #tpu.memory_space<vmem>>, vector<1x8x8xf32>
    %76 = vector.shape_cast %75 : vector<1x8x8xf32> to vector<8x8xf32>
    %cst_55 = arith.constant dense<0.000000e+00> : vector<8x256xf32>
    %77 = tpu.matmul %76, %74, %cst_55 {dimension_numbers = #tpu.dot_dimension_numbers<[1], [0], [0], [1], [0, 0, 1, 1], [], []>} : vector<8x8xf32>, vector<8x256xf32>, vector<8x256xf32> -> vector<8x256xf32>
    %78 = arith.addf %73, %77 : vector<8x256xf32>
    %c0_56 = arith.constant 0 : index
    %c34_57 = arith.constant 34 : index
    %79 = vector.load %arg7[%c0_56, %c34_57] : memref<32x290xf32, #tpu.memory_space<vmem>>, vector<8x256xf32>
    %c0_58 = arith.constant 0 : index
    %c32_59 = arith.constant 32 : index
    %80 = vector.load %arg7[%c0_58, %c32_59] : memref<32x290xf32, #tpu.memory_space<vmem>>, vector<8x256xf32>
    %81 = arith.select %27, %80, %79 : vector<8x256xi1>, vector<8x256xf32>
    %c8 = arith.constant 8 : index
    %c0_60 = arith.constant 0 : index
    %c0_61 = arith.constant 0 : index
    %82 = vector.load %arg2[%c8, %c0_60, %c0_61] : memref<9x8x8xf32, #tpu.memory_space<vmem>>, vector<1x8x8xf32>
    %83 = vector.shape_cast %82 : vector<1x8x8xf32> to vector<8x8xf32>
    %cst_62 = arith.constant dense<0.000000e+00> : vector<8x256xf32>
    %84 = tpu.matmul %83, %81, %cst_62 {dimension_numbers = #tpu.dot_dimension_numbers<[1], [0], [0], [1], [0, 0, 1, 1], [], []>} : vector<8x8xf32>, vector<8x256xf32>, vector<8x256xf32> -> vector<8x256xf32>
    %85 = arith.addf %78, %84 : vector<8x256xf32>
    %cst_63 = arith.constant 0.000000e+00 : f32
    %86 = vector.broadcast %cst_63 : f32 to vector<8x256xf32>
    %87 = arith.maximumf %85, %86 : vector<8x256xf32>
    %cst_64 = arith.constant 2.000000e+00 : f32
    %88 = vector.broadcast %cst_64 : f32 to vector<8x256xf32>
    %89 = arith.mulf %87, %88 : vector<8x256xf32>
    %90 = vector.extract_strided_slice %89 {offsets = [0, 16], sizes = [8, 16], strides = [1, 1]} : vector<8x256xf32> to vector<8x16xf32>
    %c0_65 = arith.constant 0 : index
    %c1_66 = arith.constant 1 : index
    %91 = vector.load %arg7[%c0_65, %c1_66] : memref<32x290xf32, #tpu.memory_space<vmem>>, vector<8x16xf32>
    tpu.vector_store %arg7[%c0_65, %c1_66], %90 {strides = array<i32>} : memref<32x290xf32, #tpu.memory_space<vmem>>, vector<8x16xf32>,
    %c0_67 = arith.constant 0 : index
    %c17_68 = arith.constant 17 : index
    %92 = vector.load %arg7[%c0_67, %c17_68] : memref<32x290xf32, #tpu.memory_space<vmem>>, vector<8x256xf32>
    tpu.vector_store %arg7[%c0_67, %c17_68], %89 {strides = array<i32>} : memref<32x290xf32, #tpu.memory_space<vmem>>, vector<8x256xf32>,
    %93 = vector.extract_strided_slice %89 {offsets = [0, 224], sizes = [8, 16], strides = [1, 1]} : vector<8x256xf32> to vector<8x16xf32>
    %c0_69 = arith.constant 0 : index
    %c273_70 = arith.constant 273 : index
    %94 = vector.load %arg7[%c0_69, %c273_70] : memref<32x290xf32, #tpu.memory_space<vmem>>, vector<8x16xf32>
    tpu.vector_store %arg7[%c0_69, %c273_70], %93 {strides = array<i32>} : memref<32x290xf32, #tpu.memory_space<vmem>>, vector<8x16xf32>,
    %95 = tpu.iota {dimensions = array<i32: 1>} : vector<8x256xi32>
    %c16_i32_71 = arith.constant 16 : i32
    %c0_i32_72 = arith.constant 0 : i32
    %96 = arith.cmpi eq, %c16_i32_71, %c0_i32_72 : i32
    %c1_i32_73 = arith.constant 1 : i32
    %97 = arith.select %96, %c1_i32_73, %c16_i32_71 : i32
    %98 = vector.broadcast %97 : i32 to vector<8x256xi32>
    %99 = arith.remsi %95, %98 : vector<8x256xi32>
    %c0_i32_74 = arith.constant 0 : i32
    %100 = vector.broadcast %c0_i32_74 : i32 to vector<8x256xi32>
    %101 = arith.cmpi ne, %99, %100 : vector<8x256xi32>
    %c0_i32_75 = arith.constant 0 : i32
    %102 = vector.broadcast %c0_i32_75 : i32 to vector<8x256xi32>
    %103 = arith.cmpi slt, %99, %102 : vector<8x256xi32>
    %c0_i32_76 = arith.constant 0 : i32
    %104 = arith.cmpi slt, %97, %c0_i32_76 : i32
    %105 = vector.broadcast %104 : i1 to vector<8x256xi1>
    %106 = vector.broadcast %105 : vector<8x256xi1> to vector<8x256xi1>
    %107 = arith.xori %103, %106 : vector<8x256xi1>
    %108 = arith.andi %107, %101 : vector<8x256xi1>
    %109 = vector.broadcast %97 : i32 to vector<8x256xi32>
    %110 = arith.addi %99, %109 : vector<8x256xi32>
    %111 = arith.select %108, %110, %99 : vector<8x256xi1>, vector<8x256xi32>
    %c0_i32_77 = arith.constant 0 : i32
    %112 = vector.broadcast %c0_i32_77 : i32 to vector<8x256xi32>
    %113 = arith.cmpi eq, %111, %112 : vector<8x256xi32>
    %c15_i32_78 = arith.constant 15 : i32
    %114 = vector.broadcast %c15_i32_78 : i32 to vector<8x256xi32>
    %115 = arith.cmpi eq, %111, %114 : vector<8x256xi32>
    %cst_79 = arith.constant 0.000000e+00 : f32
    %116 = vector.broadcast %cst_79 : f32 to vector<8x256xf32>
    %c0_80 = arith.constant 0 : index
    %c0_81 = arith.constant 0 : index
    %117 = vector.load %arg7[%c0_80, %c0_81] : memref<32x290xf32, #tpu.memory_space<vmem>>, vector<8x256xf32>
    %c0_82 = arith.constant 0 : index
    %c2_83 = arith.constant 2 : index
    %118 = vector.load %arg7[%c0_82, %c2_83] : memref<32x290xf32, #tpu.memory_space<vmem>>, vector<8x256xf32>
    %119 = arith.select %113, %118, %117 : vector<8x256xi1>, vector<8x256xf32>
    %c0_84 = arith.constant 0 : index
    %c0_85 = arith.constant 0 : index
    %c0_86 = arith.constant 0 : index
    %120 = vector.load %arg3[%c0_84, %c0_85, %c0_86] : memref<9x8x8xf32, #tpu.memory_space<vmem>>, vector<1x8x8xf32>
    %121 = vector.shape_cast %120 : vector<1x8x8xf32> to vector<8x8xf32>
    %cst_87 = arith.constant dense<0.000000e+00> : vector<8x256xf32>
    %122 = tpu.matmul %121, %119, %cst_87 {dimension_numbers = #tpu.dot_dimension_numbers<[1], [0], [0], [1], [0, 0, 1, 1], [], []>} : vector<8x8xf32>, vector<8x256xf32>, vector<8x256xf32> -> vector<8x256xf32>
    %123 = arith.addf %116, %122 : vector<8x256xf32>
    %c0_88 = arith.constant 0 : index
    %c1_89 = arith.constant 1 : index
    %124 = vector.load %arg7[%c0_88, %c1_89] : memref<32x290xf32, #tpu.memory_space<vmem>>, vector<8x256xf32>
    %c1_90 = arith.constant 1 : index
    %c0_91 = arith.constant 0 : index
    %c0_92 = arith.constant 0 : index
    %125 = vector.load %arg3[%c1_90, %c0_91, %c0_92] : memref<9x8x8xf32, #tpu.memory_space<vmem>>, vector<1x8x8xf32>
    %126 = vector.shape_cast %125 : vector<1x8x8xf32> to vector<8x8xf32>
    %cst_93 = arith.constant dense<0.000000e+00> : vector<8x256xf32>
    %127 = tpu.matmul %126, %124, %cst_93 {dimension_numbers = #tpu.dot_dimension_numbers<[1], [0], [0], [1], [0, 0, 1, 1], [], []>} : vector<8x8xf32>, vector<8x256xf32>, vector<8x256xf32> -> vector<8x256xf32>
    %128 = arith.addf %123, %127 : vector<8x256xf32>
    %c0_94 = arith.constant 0 : index
    %c2_95 = arith.constant 2 : index
    %129 = vector.load %arg7[%c0_94, %c2_95] : memref<32x290xf32, #tpu.memory_space<vmem>>, vector<8x256xf32>
    %c0_96 = arith.constant 0 : index
    %c0_97 = arith.constant 0 : index
    %130 = vector.load %arg7[%c0_96, %c0_97] : memref<32x290xf32, #tpu.memory_space<vmem>>, vector<8x256xf32>
    %131 = arith.select %115, %130, %129 : vector<8x256xi1>, vector<8x256xf32>
    %c2_98 = arith.constant 2 : index
    %c0_99 = arith.constant 0 : index
    %c0_100 = arith.constant 0 : index
    %132 = vector.load %arg3[%c2_98, %c0_99, %c0_100] : memref<9x8x8xf32, #tpu.memory_space<vmem>>, vector<1x8x8xf32>
    %133 = vector.shape_cast %132 : vector<1x8x8xf32> to vector<8x8xf32>
    %cst_101 = arith.constant dense<0.000000e+00> : vector<8x256xf32>
    %134 = tpu.matmul %133, %131, %cst_101 {dimension_numbers = #tpu.dot_dimension_numbers<[1], [0], [0], [1], [0, 0, 1, 1], [], []>} : vector<8x8xf32>, vector<8x256xf32>, vector<8x256xf32> -> vector<8x256xf32>
    %135 = arith.addf %128, %134 : vector<8x256xf32>
    %c0_102 = arith.constant 0 : index
    %c16_103 = arith.constant 16 : index
    %136 = vector.load %arg7[%c0_102, %c16_103] : memref<32x290xf32, #tpu.memory_space<vmem>>, vector<8x256xf32>
    %c0_104 = arith.constant 0 : index
    %c18_105 = arith.constant 18 : index
    %137 = vector.load %arg7[%c0_104, %c18_105] : memref<32x290xf32, #tpu.memory_space<vmem>>, vector<8x256xf32>
    %138 = arith.select %113, %137, %136 : vector<8x256xi1>, vector<8x256xf32>
    %c3_106 = arith.constant 3 : index
    %c0_107 = arith.constant 0 : index
    %c0_108 = arith.constant 0 : index
    %139 = vector.load %arg3[%c3_106, %c0_107, %c0_108] : memref<9x8x8xf32, #tpu.memory_space<vmem>>, vector<1x8x8xf32>
    %140 = vector.shape_cast %139 : vector<1x8x8xf32> to vector<8x8xf32>
    %cst_109 = arith.constant dense<0.000000e+00> : vector<8x256xf32>
    %141 = tpu.matmul %140, %138, %cst_109 {dimension_numbers = #tpu.dot_dimension_numbers<[1], [0], [0], [1], [0, 0, 1, 1], [], []>} : vector<8x8xf32>, vector<8x256xf32>, vector<8x256xf32> -> vector<8x256xf32>
    %142 = arith.addf %135, %141 : vector<8x256xf32>
    %c0_110 = arith.constant 0 : index
    %c17_111 = arith.constant 17 : index
    %143 = vector.load %arg7[%c0_110, %c17_111] : memref<32x290xf32, #tpu.memory_space<vmem>>, vector<8x256xf32>
    %c4_112 = arith.constant 4 : index
    %c0_113 = arith.constant 0 : index
    %c0_114 = arith.constant 0 : index
    %144 = vector.load %arg3[%c4_112, %c0_113, %c0_114] : memref<9x8x8xf32, #tpu.memory_space<vmem>>, vector<1x8x8xf32>
    %145 = vector.shape_cast %144 : vector<1x8x8xf32> to vector<8x8xf32>
    %cst_115 = arith.constant dense<0.000000e+00> : vector<8x256xf32>
    %146 = tpu.matmul %145, %143, %cst_115 {dimension_numbers = #tpu.dot_dimension_numbers<[1], [0], [0], [1], [0, 0, 1, 1], [], []>} : vector<8x8xf32>, vector<8x256xf32>, vector<8x256xf32> -> vector<8x256xf32>
    %147 = arith.addf %142, %146 : vector<8x256xf32>
    %c0_116 = arith.constant 0 : index
    %c18_117 = arith.constant 18 : index
    %148 = vector.load %arg7[%c0_116, %c18_117] : memref<32x290xf32, #tpu.memory_space<vmem>>, vector<8x256xf32>
    %c0_118 = arith.constant 0 : index
    %c16_119 = arith.constant 16 : index
    %149 = vector.load %arg7[%c0_118, %c16_119] : memref<32x290xf32, #tpu.memory_space<vmem>>, vector<8x256xf32>
    %150 = arith.select %115, %149, %148 : vector<8x256xi1>, vector<8x256xf32>
    %c5_120 = arith.constant 5 : index
    %c0_121 = arith.constant 0 : index
    %c0_122 = arith.constant 0 : index
    %151 = vector.load %arg3[%c5_120, %c0_121, %c0_122] : memref<9x8x8xf32, #tpu.memory_space<vmem>>, vector<1x8x8xf32>
    %152 = vector.shape_cast %151 : vector<1x8x8xf32> to vector<8x8xf32>
    %cst_123 = arith.constant dense<0.000000e+00> : vector<8x256xf32>
    %153 = tpu.matmul %152, %150, %cst_123 {dimension_numbers = #tpu.dot_dimension_numbers<[1], [0], [0], [1], [0, 0, 1, 1], [], []>} : vector<8x8xf32>, vector<8x256xf32>, vector<8x256xf32> -> vector<8x256xf32>
    %154 = arith.addf %147, %153 : vector<8x256xf32>
    %c0_124 = arith.constant 0 : index
    %c32_125 = arith.constant 32 : index
    %155 = vector.load %arg7[%c0_124, %c32_125] : memref<32x290xf32, #tpu.memory_space<vmem>>, vector<8x256xf32>
    %c0_126 = arith.constant 0 : index
    %c34_127 = arith.constant 34 : index
    %156 = vector.load %arg7[%c0_126, %c34_127] : memref<32x290xf32, #tpu.memory_space<vmem>>, vector<8x256xf32>
    %157 = arith.select %113, %156, %155 : vector<8x256xi1>, vector<8x256xf32>
    %c6_128 = arith.constant 6 : index
    %c0_129 = arith.constant 0 : index
    %c0_130 = arith.constant 0 : index
    %158 = vector.load %arg3[%c6_128, %c0_129, %c0_130] : memref<9x8x8xf32, #tpu.memory_space<vmem>>, vector<1x8x8xf32>
    %159 = vector.shape_cast %158 : vector<1x8x8xf32> to vector<8x8xf32>
    %cst_131 = arith.constant dense<0.000000e+00> : vector<8x256xf32>
    %160 = tpu.matmul %159, %157, %cst_131 {dimension_numbers = #tpu.dot_dimension_numbers<[1], [0], [0], [1], [0, 0, 1, 1], [], []>} : vector<8x8xf32>, vector<8x256xf32>, vector<8x256xf32> -> vector<8x256xf32>
    %161 = arith.addf %154, %160 : vector<8x256xf32>
    %c0_132 = arith.constant 0 : index
    %c33_133 = arith.constant 33 : index
    %162 = vector.load %arg7[%c0_132, %c33_133] : memref<32x290xf32, #tpu.memory_space<vmem>>, vector<8x256xf32>
    %c7_134 = arith.constant 7 : index
    %c0_135 = arith.constant 0 : index
    %c0_136 = arith.constant 0 : index
    %163 = vector.load %arg3[%c7_134, %c0_135, %c0_136] : memref<9x8x8xf32, #tpu.memory_space<vmem>>, vector<1x8x8xf32>
    %164 = vector.shape_cast %163 : vector<1x8x8xf32> to vector<8x8xf32>
    %cst_137 = arith.constant dense<0.000000e+00> : vector<8x256xf32>
    %165 = tpu.matmul %164, %162, %cst_137 {dimension_numbers = #tpu.dot_dimension_numbers<[1], [0], [0], [1], [0, 0, 1, 1], [], []>} : vector<8x8xf32>, vector<8x256xf32>, vector<8x256xf32> -> vector<8x256xf32>
    %166 = arith.addf %161, %165 : vector<8x256xf32>
    %c0_138 = arith.constant 0 : index
    %c34_139 = arith.constant 34 : index
    %167 = vector.load %arg7[%c0_138, %c34_139] : memref<32x290xf32, #tpu.memory_space<vmem>>, vector<8x256xf32>
    %c0_140 = arith.constant 0 : index
    %c32_141 = arith.constant 32 : index
    %168 = vector.load %arg7[%c0_140, %c32_141] : memref<32x290xf32, #tpu.memory_space<vmem>>, vector<8x256xf32>
    %169 = arith.select %115, %168, %167 : vector<8x256xi1>, vector<8x256xf32>
    %c8_142 = arith.constant 8 : index
    %c0_143 = arith.constant 0 : index
    %c0_144 = arith.constant 0 : index
    %170 = vector.load %arg3[%c8_142, %c0_143, %c0_144] : memref<9x8x8xf32, #tpu.memory_space<vmem>>, vector<1x8x8xf32>
    %171 = vector.shape_cast %170 : vector<1x8x8xf32> to vector<8x8xf32>
    %cst_145 = arith.constant dense<0.000000e+00> : vector<8x256xf32>
    %172 = tpu.matmul %171, %169, %cst_145 {dimension_numbers = #tpu.dot_dimension_numbers<[1], [0], [0], [1], [0, 0, 1, 1], [], []>} : vector<8x8xf32>, vector<8x256xf32>, vector<8x256xf32> -> vector<8x256xf32>
    %173 = arith.addf %166, %172 : vector<8x256xf32>
    %174 = vector.extract_strided_slice %173 {offsets = [0, 16], sizes = [8, 16], strides = [1, 1]} : vector<8x256xf32> to vector<8x16xf32>
    %c0_146 = arith.constant 0 : index
    %c1_147 = arith.constant 1 : index
    %175 = vector.load %arg7[%c0_146, %c1_147] : memref<32x290xf32, #tpu.memory_space<vmem>>, vector<8x16xf32>
    tpu.vector_store %arg7[%c0_146, %c1_147], %174 {strides = array<i32>} : memref<32x290xf32, #tpu.memory_space<vmem>>, vector<8x16xf32>,
    %c0_148 = arith.constant 0 : index
    %c17_149 = arith.constant 17 : index
    %176 = vector.load %arg7[%c0_148, %c17_149] : memref<32x290xf32, #tpu.memory_space<vmem>>, vector<8x256xf32>
    tpu.vector_store %arg7[%c0_148, %c17_149], %173 {strides = array<i32>} : memref<32x290xf32, #tpu.memory_space<vmem>>, vector<8x256xf32>,
    %177 = vector.extract_strided_slice %173 {offsets = [0, 224], sizes = [8, 16], strides = [1, 1]} : vector<8x256xf32> to vector<8x16xf32>
    %c0_150 = arith.constant 0 : index
    %c273_151 = arith.constant 273 : index
    %178 = vector.load %arg7[%c0_150, %c273_151] : memref<32x290xf32, #tpu.memory_space<vmem>>, vector<8x16xf32>
    tpu.vector_store %arg7[%c0_150, %c273_151], %177 {strides = array<i32>} : memref<32x290xf32, #tpu.memory_space<vmem>>, vector<8x16xf32>,
    %179 = tpu.iota {dimensions = array<i32: 1>} : vector<8x256xi32>
    %c16_i32_152 = arith.constant 16 : i32
    %c0_i32_153 = arith.constant 0 : i32
    %180 = arith.cmpi eq, %c16_i32_152, %c0_i32_153 : i32
    %c1_i32_154 = arith.constant 1 : i32
    %181 = arith.select %180, %c1_i32_154, %c16_i32_152 : i32
    %182 = vector.broadcast %181 : i32 to vector<8x256xi32>
    %183 = arith.remsi %179, %182 : vector<8x256xi32>
    %c0_i32_155 = arith.constant 0 : i32
    %184 = vector.broadcast %c0_i32_155 : i32 to vector<8x256xi32>
    %185 = arith.cmpi ne, %183, %184 : vector<8x256xi32>
    %c0_i32_156 = arith.constant 0 : i32
    %186 = vector.broadcast %c0_i32_156 : i32 to vector<8x256xi32>
    %187 = arith.cmpi slt, %183, %186 : vector<8x256xi32>
    %c0_i32_157 = arith.constant 0 : i32
    %188 = arith.cmpi slt, %181, %c0_i32_157 : i32
    %189 = vector.broadcast %188 : i1 to vector<8x256xi1>
    %190 = vector.broadcast %189 : vector<8x256xi1> to vector<8x256xi1>
    %191 = arith.xori %187, %190 : vector<8x256xi1>
    %192 = arith.andi %191, %185 : vector<8x256xi1>
    %193 = vector.broadcast %181 : i32 to vector<8x256xi32>
    %194 = arith.addi %183, %193 : vector<8x256xi32>
    %195 = arith.select %192, %194, %183 : vector<8x256xi1>, vector<8x256xi32>
    %c0_i32_158 = arith.constant 0 : i32
    %196 = vector.broadcast %c0_i32_158 : i32 to vector<8x256xi32>
    %197 = arith.cmpi eq, %195, %196 : vector<8x256xi32>
    %c15_i32_159 = arith.constant 15 : i32
    %198 = vector.broadcast %c15_i32_159 : i32 to vector<8x256xi32>
    %199 = arith.cmpi eq, %195, %198 : vector<8x256xi32>
    %cst_160 = arith.constant 0.000000e+00 : f32
    %200 = vector.broadcast %cst_160 : f32 to vector<32x256xf32>
    %c0_161 = arith.constant 0 : index
    %c0_162 = arith.constant 0 : index
    %201 = vector.load %arg7[%c0_161, %c0_162] : memref<32x290xf32, #tpu.memory_space<vmem>>, vector<8x256xf32>
    %c0_163 = arith.constant 0 : index
    %c2_164 = arith.constant 2 : index
    %202 = vector.load %arg7[%c0_163, %c2_164] : memref<32x290xf32, #tpu.memory_space<vmem>>, vector<8x256xf32>
    %203 = arith.select %197, %202, %201 : vector<8x256xi1>, vector<8x256xf32>
    %c0_165 = arith.constant 0 : index
    %c0_166 = arith.constant 0 : index
    %c0_167 = arith.constant 0 : index
    %204 = vector.load %arg4[%c0_165, %c0_166, %c0_167] : memref<9x32x8xf32, #tpu.memory_space<vmem>>, vector<1x32x8xf32>
    %205 = vector.shape_cast %204 : vector<1x32x8xf32> to vector<32x8xf32>
    %cst_168 = arith.constant dense<0.000000e+00> : vector<32x256xf32>
    %206 = tpu.matmul %205, %203, %cst_168 {dimension_numbers = #tpu.dot_dimension_numbers<[1], [0], [0], [1], [0, 0, 1, 1], [], []>} : vector<32x8xf32>, vector<8x256xf32>, vector<32x256xf32> -> vector<32x256xf32>
    %207 = arith.addf %200, %206 : vector<32x256xf32>
    %c0_169 = arith.constant 0 : index
    %c1_170 = arith.constant 1 : index
    %208 = vector.load %arg7[%c0_169, %c1_170] : memref<32x290xf32, #tpu.memory_space<vmem>>, vector<8x256xf32>
    %c1_171 = arith.constant 1 : index
    %c0_172 = arith.constant 0 : index
    %c0_173 = arith.constant 0 : index
    %209 = vector.load %arg4[%c1_171, %c0_172, %c0_173] : memref<9x32x8xf32, #tpu.memory_space<vmem>>, vector<1x32x8xf32>
    %210 = vector.shape_cast %209 : vector<1x32x8xf32> to vector<32x8xf32>
    %cst_174 = arith.constant dense<0.000000e+00> : vector<32x256xf32>
    %211 = tpu.matmul %210, %208, %cst_174 {dimension_numbers = #tpu.dot_dimension_numbers<[1], [0], [0], [1], [0, 0, 1, 1], [], []>} : vector<32x8xf32>, vector<8x256xf32>, vector<32x256xf32> -> vector<32x256xf32>
    %212 = arith.addf %207, %211 : vector<32x256xf32>
    %c0_175 = arith.constant 0 : index
    %c2_176 = arith.constant 2 : index
    %213 = vector.load %arg7[%c0_175, %c2_176] : memref<32x290xf32, #tpu.memory_space<vmem>>, vector<8x256xf32>
    %c0_177 = arith.constant 0 : index
    %c0_178 = arith.constant 0 : index
    %214 = vector.load %arg7[%c0_177, %c0_178] : memref<32x290xf32, #tpu.memory_space<vmem>>, vector<8x256xf32>
    %215 = arith.select %199, %214, %213 : vector<8x256xi1>, vector<8x256xf32>
    %c2_179 = arith.constant 2 : index
    %c0_180 = arith.constant 0 : index
    %c0_181 = arith.constant 0 : index
    %216 = vector.load %arg4[%c2_179, %c0_180, %c0_181] : memref<9x32x8xf32, #tpu.memory_space<vmem>>, vector<1x32x8xf32>
    %217 = vector.shape_cast %216 : vector<1x32x8xf32> to vector<32x8xf32>
    %cst_182 = arith.constant dense<0.000000e+00> : vector<32x256xf32>
    %218 = tpu.matmul %217, %215, %cst_182 {dimension_numbers = #tpu.dot_dimension_numbers<[1], [0], [0], [1], [0, 0, 1, 1], [], []>} : vector<32x8xf32>, vector<8x256xf32>, vector<32x256xf32> -> vector<32x256xf32>
    %219 = arith.addf %212, %218 : vector<32x256xf32>
    %c0_183 = arith.constant 0 : index
    %c16_184 = arith.constant 16 : index
    %220 = vector.load %arg7[%c0_183, %c16_184] : memref<32x290xf32, #tpu.memory_space<vmem>>, vector<8x256xf32>
    %c0_185 = arith.constant 0 : index
    %c18_186 = arith.constant 18 : index
    %221 = vector.load %arg7[%c0_185, %c18_186] : memref<32x290xf32, #tpu.memory_space<vmem>>, vector<8x256xf32>
    %222 = arith.select %197, %221, %220 : vector<8x256xi1>, vector<8x256xf32>
    %c3_187 = arith.constant 3 : index
    %c0_188 = arith.constant 0 : index
    %c0_189 = arith.constant 0 : index
    %223 = vector.load %arg4[%c3_187, %c0_188, %c0_189] : memref<9x32x8xf32, #tpu.memory_space<vmem>>, vector<1x32x8xf32>
    %224 = vector.shape_cast %223 : vector<1x32x8xf32> to vector<32x8xf32>
    %cst_190 = arith.constant dense<0.000000e+00> : vector<32x256xf32>
    %225 = tpu.matmul %224, %222, %cst_190 {dimension_numbers = #tpu.dot_dimension_numbers<[1], [0], [0], [1], [0, 0, 1, 1], [], []>} : vector<32x8xf32>, vector<8x256xf32>, vector<32x256xf32> -> vector<32x256xf32>
    %226 = arith.addf %219, %225 : vector<32x256xf32>
    %c0_191 = arith.constant 0 : index
    %c17_192 = arith.constant 17 : index
    %227 = vector.load %arg7[%c0_191, %c17_192] : memref<32x290xf32, #tpu.memory_space<vmem>>, vector<8x256xf32>
    %c4_193 = arith.constant 4 : index
    %c0_194 = arith.constant 0 : index
    %c0_195 = arith.constant 0 : index
    %228 = vector.load %arg4[%c4_193, %c0_194, %c0_195] : memref<9x32x8xf32, #tpu.memory_space<vmem>>, vector<1x32x8xf32>
    %229 = vector.shape_cast %228 : vector<1x32x8xf32> to vector<32x8xf32>
    %cst_196 = arith.constant dense<0.000000e+00> : vector<32x256xf32>
    %230 = tpu.matmul %229, %227, %cst_196 {dimension_numbers = #tpu.dot_dimension_numbers<[1], [0], [0], [1], [0, 0, 1, 1], [], []>} : vector<32x8xf32>, vector<8x256xf32>, vector<32x256xf32> -> vector<32x256xf32>
    %231 = arith.addf %226, %230 : vector<32x256xf32>
    %c0_197 = arith.constant 0 : index
    %c18_198 = arith.constant 18 : index
    %232 = vector.load %arg7[%c0_197, %c18_198] : memref<32x290xf32, #tpu.memory_space<vmem>>, vector<8x256xf32>
    %c0_199 = arith.constant 0 : index
    %c16_200 = arith.constant 16 : index
    %233 = vector.load %arg7[%c0_199, %c16_200] : memref<32x290xf32, #tpu.memory_space<vmem>>, vector<8x256xf32>
    %234 = arith.select %199, %233, %232 : vector<8x256xi1>, vector<8x256xf32>
    %c5_201 = arith.constant 5 : index
    %c0_202 = arith.constant 0 : index
    %c0_203 = arith.constant 0 : index
    %235 = vector.load %arg4[%c5_201, %c0_202, %c0_203] : memref<9x32x8xf32, #tpu.memory_space<vmem>>, vector<1x32x8xf32>
    %236 = vector.shape_cast %235 : vector<1x32x8xf32> to vector<32x8xf32>
    %cst_204 = arith.constant dense<0.000000e+00> : vector<32x256xf32>
    %237 = tpu.matmul %236, %234, %cst_204 {dimension_numbers = #tpu.dot_dimension_numbers<[1], [0], [0], [1], [0, 0, 1, 1], [], []>} : vector<32x8xf32>, vector<8x256xf32>, vector<32x256xf32> -> vector<32x256xf32>
    %238 = arith.addf %231, %237 : vector<32x256xf32>
    %c0_205 = arith.constant 0 : index
    %c32_206 = arith.constant 32 : index
    %239 = vector.load %arg7[%c0_205, %c32_206] : memref<32x290xf32, #tpu.memory_space<vmem>>, vector<8x256xf32>
    %c0_207 = arith.constant 0 : index
    %c34_208 = arith.constant 34 : index
    %240 = vector.load %arg7[%c0_207, %c34_208] : memref<32x290xf32, #tpu.memory_space<vmem>>, vector<8x256xf32>
    %241 = arith.select %197, %240, %239 : vector<8x256xi1>, vector<8x256xf32>
    %c6_209 = arith.constant 6 : index
    %c0_210 = arith.constant 0 : index
    %c0_211 = arith.constant 0 : index
    %242 = vector.load %arg4[%c6_209, %c0_210, %c0_211] : memref<9x32x8xf32, #tpu.memory_space<vmem>>, vector<1x32x8xf32>
    %243 = vector.shape_cast %242 : vector<1x32x8xf32> to vector<32x8xf32>
    %cst_212 = arith.constant dense<0.000000e+00> : vector<32x256xf32>
    %244 = tpu.matmul %243, %241, %cst_212 {dimension_numbers = #tpu.dot_dimension_numbers<[1], [0], [0], [1], [0, 0, 1, 1], [], []>} : vector<32x8xf32>, vector<8x256xf32>, vector<32x256xf32> -> vector<32x256xf32>
    %245 = arith.addf %238, %244 : vector<32x256xf32>
    %c0_213 = arith.constant 0 : index
    %c33_214 = arith.constant 33 : index
    %246 = vector.load %arg7[%c0_213, %c33_214] : memref<32x290xf32, #tpu.memory_space<vmem>>, vector<8x256xf32>
    %c7_215 = arith.constant 7 : index
    %c0_216 = arith.constant 0 : index
    %c0_217 = arith.constant 0 : index
    %247 = vector.load %arg4[%c7_215, %c0_216, %c0_217] : memref<9x32x8xf32, #tpu.memory_space<vmem>>, vector<1x32x8xf32>
    %248 = vector.shape_cast %247 : vector<1x32x8xf32> to vector<32x8xf32>
    %cst_218 = arith.constant dense<0.000000e+00> : vector<32x256xf32>
    %249 = tpu.matmul %248, %246, %cst_218 {dimension_numbers = #tpu.dot_dimension_numbers<[1], [0], [0], [1], [0, 0, 1, 1], [], []>} : vector<32x8xf32>, vector<8x256xf32>, vector<32x256xf32> -> vector<32x256xf32>
    %250 = arith.addf %245, %249 : vector<32x256xf32>
    %c0_219 = arith.constant 0 : index
    %c34_220 = arith.constant 34 : index
    %251 = vector.load %arg7[%c0_219, %c34_220] : memref<32x290xf32, #tpu.memory_space<vmem>>, vector<8x256xf32>
    %c0_221 = arith.constant 0 : index
    %c32_222 = arith.constant 32 : index
    %252 = vector.load %arg7[%c0_221, %c32_222] : memref<32x290xf32, #tpu.memory_space<vmem>>, vector<8x256xf32>
    %253 = arith.select %199, %252, %251 : vector<8x256xi1>, vector<8x256xf32>
    %c8_223 = arith.constant 8 : index
    %c0_224 = arith.constant 0 : index
    %c0_225 = arith.constant 0 : index
    %254 = vector.load %arg4[%c8_223, %c0_224, %c0_225] : memref<9x32x8xf32, #tpu.memory_space<vmem>>, vector<1x32x8xf32>
    %255 = vector.shape_cast %254 : vector<1x32x8xf32> to vector<32x8xf32>
    %cst_226 = arith.constant dense<0.000000e+00> : vector<32x256xf32>
    %256 = tpu.matmul %255, %253, %cst_226 {dimension_numbers = #tpu.dot_dimension_numbers<[1], [0], [0], [1], [0, 0, 1, 1], [], []>} : vector<32x8xf32>, vector<8x256xf32>, vector<32x256xf32> -> vector<32x256xf32>
    %257 = arith.addf %250, %256 : vector<32x256xf32>
    %cst_227 = arith.constant 0.000000e+00 : f32
    %258 = vector.broadcast %cst_227 : f32 to vector<32x256xf32>
    %259 = arith.maximumf %257, %258 : vector<32x256xf32>
    %260 = vector.extract_strided_slice %259 {offsets = [0, 16], sizes = [32, 16], strides = [1, 1]} : vector<32x256xf32> to vector<32x16xf32>
    %c0_228 = arith.constant 0 : index
    %c1_229 = arith.constant 1 : index
    %261 = vector.load %arg7[%c0_228, %c1_229] : memref<32x290xf32, #tpu.memory_space<vmem>>, vector<32x16xf32>
    tpu.vector_store %arg7[%c0_228, %c1_229], %260 {strides = array<i32>} : memref<32x290xf32, #tpu.memory_space<vmem>>, vector<32x16xf32>,
    %c0_230 = arith.constant 0 : index
    %c17_231 = arith.constant 17 : index
    %262 = vector.load %arg7[%c0_230, %c17_231] : memref<32x290xf32, #tpu.memory_space<vmem>>, vector<32x256xf32>
    tpu.vector_store %arg7[%c0_230, %c17_231], %259 {strides = array<i32>} : memref<32x290xf32, #tpu.memory_space<vmem>>, vector<32x256xf32>,
    %263 = vector.extract_strided_slice %259 {offsets = [0, 224], sizes = [32, 16], strides = [1, 1]} : vector<32x256xf32> to vector<32x16xf32>
    %c0_232 = arith.constant 0 : index
    %c273_233 = arith.constant 273 : index
    %264 = vector.load %arg7[%c0_232, %c273_233] : memref<32x290xf32, #tpu.memory_space<vmem>>, vector<32x16xf32>
    tpu.vector_store %arg7[%c0_232, %c273_233], %263 {strides = array<i32>} : memref<32x290xf32, #tpu.memory_space<vmem>>, vector<32x16xf32>,
    %265 = tpu.iota {dimensions = array<i32: 1>} : vector<32x256xi32>
    %c16_i32_234 = arith.constant 16 : i32
    %c0_i32_235 = arith.constant 0 : i32
    %266 = arith.cmpi eq, %c16_i32_234, %c0_i32_235 : i32
    %c1_i32_236 = arith.constant 1 : i32
    %267 = arith.select %266, %c1_i32_236, %c16_i32_234 : i32
    %268 = vector.broadcast %267 : i32 to vector<32x256xi32>
    %269 = arith.remsi %265, %268 : vector<32x256xi32>
    %c0_i32_237 = arith.constant 0 : i32
    %270 = vector.broadcast %c0_i32_237 : i32 to vector<32x256xi32>
    %271 = arith.cmpi ne, %269, %270 : vector<32x256xi32>
    %c0_i32_238 = arith.constant 0 : i32
    %272 = vector.broadcast %c0_i32_238 : i32 to vector<32x256xi32>
    %273 = arith.cmpi slt, %269, %272 : vector<32x256xi32>
    %c0_i32_239 = arith.constant 0 : i32
    %274 = arith.cmpi slt, %267, %c0_i32_239 : i32
    %275 = vector.broadcast %274 : i1 to vector<32x256xi1>
    %276 = vector.broadcast %275 : vector<32x256xi1> to vector<32x256xi1>
    %277 = arith.xori %273, %276 : vector<32x256xi1>
    %278 = arith.andi %277, %271 : vector<32x256xi1>
    %279 = vector.broadcast %267 : i32 to vector<32x256xi32>
    %280 = arith.addi %269, %279 : vector<32x256xi32>
    %281 = arith.select %278, %280, %269 : vector<32x256xi1>, vector<32x256xi32>
    %c0_i32_240 = arith.constant 0 : i32
    %282 = vector.broadcast %c0_i32_240 : i32 to vector<32x256xi32>
    %283 = arith.cmpi eq, %281, %282 : vector<32x256xi32>
    %c15_i32_241 = arith.constant 15 : i32
    %284 = vector.broadcast %c15_i32_241 : i32 to vector<32x256xi32>
    %285 = arith.cmpi eq, %281, %284 : vector<32x256xi32>
    %cst_242 = arith.constant 0.000000e+00 : f32
    %286 = vector.broadcast %cst_242 : f32 to vector<8x256xf32>
    %c0_243 = arith.constant 0 : index
    %c0_244 = arith.constant 0 : index
    %287 = vector.load %arg7[%c0_243, %c0_244] : memref<32x290xf32, #tpu.memory_space<vmem>>, vector<32x256xf32>
    %c0_245 = arith.constant 0 : index
    %c2_246 = arith.constant 2 : index
    %288 = vector.load %arg7[%c0_245, %c2_246] : memref<32x290xf32, #tpu.memory_space<vmem>>, vector<32x256xf32>
    %289 = arith.select %283, %288, %287 : vector<32x256xi1>, vector<32x256xf32>
    %c0_247 = arith.constant 0 : index
    %c0_248 = arith.constant 0 : index
    %c0_249 = arith.constant 0 : index
    %290 = vector.load %arg5[%c0_247, %c0_248, %c0_249] : memref<9x8x32xf32, #tpu.memory_space<vmem>>, vector<1x8x32xf32>
    %291 = vector.shape_cast %290 : vector<1x8x32xf32> to vector<8x32xf32>
    %cst_250 = arith.constant dense<0.000000e+00> : vector<8x256xf32>
    %292 = tpu.matmul %291, %289, %cst_250 {dimension_numbers = #tpu.dot_dimension_numbers<[1], [0], [0], [1], [0, 0, 1, 1], [], []>} : vector<8x32xf32>, vector<32x256xf32>, vector<8x256xf32> -> vector<8x256xf32>
    %293 = arith.addf %286, %292 : vector<8x256xf32>
    %c0_251 = arith.constant 0 : index
    %c1_252 = arith.constant 1 : index
    %294 = vector.load %arg7[%c0_251, %c1_252] : memref<32x290xf32, #tpu.memory_space<vmem>>, vector<32x256xf32>
    %c1_253 = arith.constant 1 : index
    %c0_254 = arith.constant 0 : index
    %c0_255 = arith.constant 0 : index
    %295 = vector.load %arg5[%c1_253, %c0_254, %c0_255] : memref<9x8x32xf32, #tpu.memory_space<vmem>>, vector<1x8x32xf32>
    %296 = vector.shape_cast %295 : vector<1x8x32xf32> to vector<8x32xf32>
    %cst_256 = arith.constant dense<0.000000e+00> : vector<8x256xf32>
    %297 = tpu.matmul %296, %294, %cst_256 {dimension_numbers = #tpu.dot_dimension_numbers<[1], [0], [0], [1], [0, 0, 1, 1], [], []>} : vector<8x32xf32>, vector<32x256xf32>, vector<8x256xf32> -> vector<8x256xf32>
    %298 = arith.addf %293, %297 : vector<8x256xf32>
    %c0_257 = arith.constant 0 : index
    %c2_258 = arith.constant 2 : index
    %299 = vector.load %arg7[%c0_257, %c2_258] : memref<32x290xf32, #tpu.memory_space<vmem>>, vector<32x256xf32>
    %c0_259 = arith.constant 0 : index
    %c0_260 = arith.constant 0 : index
    %300 = vector.load %arg7[%c0_259, %c0_260] : memref<32x290xf32, #tpu.memory_space<vmem>>, vector<32x256xf32>
    %301 = arith.select %285, %300, %299 : vector<32x256xi1>, vector<32x256xf32>
    %c2_261 = arith.constant 2 : index
    %c0_262 = arith.constant 0 : index
    %c0_263 = arith.constant 0 : index
    %302 = vector.load %arg5[%c2_261, %c0_262, %c0_263] : memref<9x8x32xf32, #tpu.memory_space<vmem>>, vector<1x8x32xf32>
    %303 = vector.shape_cast %302 : vector<1x8x32xf32> to vector<8x32xf32>
    %cst_264 = arith.constant dense<0.000000e+00> : vector<8x256xf32>
    %304 = tpu.matmul %303, %301, %cst_264 {dimension_numbers = #tpu.dot_dimension_numbers<[1], [0], [0], [1], [0, 0, 1, 1], [], []>} : vector<8x32xf32>, vector<32x256xf32>, vector<8x256xf32> -> vector<8x256xf32>
    %305 = arith.addf %298, %304 : vector<8x256xf32>
    %c0_265 = arith.constant 0 : index
    %c16_266 = arith.constant 16 : index
    %306 = vector.load %arg7[%c0_265, %c16_266] : memref<32x290xf32, #tpu.memory_space<vmem>>, vector<32x256xf32>
    %c0_267 = arith.constant 0 : index
    %c18_268 = arith.constant 18 : index
    %307 = vector.load %arg7[%c0_267, %c18_268] : memref<32x290xf32, #tpu.memory_space<vmem>>, vector<32x256xf32>
    %308 = arith.select %283, %307, %306 : vector<32x256xi1>, vector<32x256xf32>
    %c3_269 = arith.constant 3 : index
    %c0_270 = arith.constant 0 : index
    %c0_271 = arith.constant 0 : index
    %309 = vector.load %arg5[%c3_269, %c0_270, %c0_271] : memref<9x8x32xf32, #tpu.memory_space<vmem>>, vector<1x8x32xf32>
    %310 = vector.shape_cast %309 : vector<1x8x32xf32> to vector<8x32xf32>
    %cst_272 = arith.constant dense<0.000000e+00> : vector<8x256xf32>
    %311 = tpu.matmul %310, %308, %cst_272 {dimension_numbers = #tpu.dot_dimension_numbers<[1], [0], [0], [1], [0, 0, 1, 1], [], []>} : vector<8x32xf32>, vector<32x256xf32>, vector<8x256xf32> -> vector<8x256xf32>
    %312 = arith.addf %305, %311 : vector<8x256xf32>
    %c0_273 = arith.constant 0 : index
    %c17_274 = arith.constant 17 : index
    %313 = vector.load %arg7[%c0_273, %c17_274] : memref<32x290xf32, #tpu.memory_space<vmem>>, vector<32x256xf32>
    %c4_275 = arith.constant 4 : index
    %c0_276 = arith.constant 0 : index
    %c0_277 = arith.constant 0 : index
    %314 = vector.load %arg5[%c4_275, %c0_276, %c0_277] : memref<9x8x32xf32, #tpu.memory_space<vmem>>, vector<1x8x32xf32>
    %315 = vector.shape_cast %314 : vector<1x8x32xf32> to vector<8x32xf32>
    %cst_278 = arith.constant dense<0.000000e+00> : vector<8x256xf32>
    %316 = tpu.matmul %315, %313, %cst_278 {dimension_numbers = #tpu.dot_dimension_numbers<[1], [0], [0], [1], [0, 0, 1, 1], [], []>} : vector<8x32xf32>, vector<32x256xf32>, vector<8x256xf32> -> vector<8x256xf32>
    %317 = arith.addf %312, %316 : vector<8x256xf32>
    %c0_279 = arith.constant 0 : index
    %c18_280 = arith.constant 18 : index
    %318 = vector.load %arg7[%c0_279, %c18_280] : memref<32x290xf32, #tpu.memory_space<vmem>>, vector<32x256xf32>
    %c0_281 = arith.constant 0 : index
    %c16_282 = arith.constant 16 : index
    %319 = vector.load %arg7[%c0_281, %c16_282] : memref<32x290xf32, #tpu.memory_space<vmem>>, vector<32x256xf32>
    %320 = arith.select %285, %319, %318 : vector<32x256xi1>, vector<32x256xf32>
    %c5_283 = arith.constant 5 : index
    %c0_284 = arith.constant 0 : index
    %c0_285 = arith.constant 0 : index
    %321 = vector.load %arg5[%c5_283, %c0_284, %c0_285] : memref<9x8x32xf32, #tpu.memory_space<vmem>>, vector<1x8x32xf32>
    %322 = vector.shape_cast %321 : vector<1x8x32xf32> to vector<8x32xf32>
    %cst_286 = arith.constant dense<0.000000e+00> : vector<8x256xf32>
    %323 = tpu.matmul %322, %320, %cst_286 {dimension_numbers = #tpu.dot_dimension_numbers<[1], [0], [0], [1], [0, 0, 1, 1], [], []>} : vector<8x32xf32>, vector<32x256xf32>, vector<8x256xf32> -> vector<8x256xf32>
    %324 = arith.addf %317, %323 : vector<8x256xf32>
    %c0_287 = arith.constant 0 : index
    %c32_288 = arith.constant 32 : index
    %325 = vector.load %arg7[%c0_287, %c32_288] : memref<32x290xf32, #tpu.memory_space<vmem>>, vector<32x256xf32>
    %c0_289 = arith.constant 0 : index
    %c34_290 = arith.constant 34 : index
    %326 = vector.load %arg7[%c0_289, %c34_290] : memref<32x290xf32, #tpu.memory_space<vmem>>, vector<32x256xf32>
    %327 = arith.select %283, %326, %325 : vector<32x256xi1>, vector<32x256xf32>
    %c6_291 = arith.constant 6 : index
    %c0_292 = arith.constant 0 : index
    %c0_293 = arith.constant 0 : index
    %328 = vector.load %arg5[%c6_291, %c0_292, %c0_293] : memref<9x8x32xf32, #tpu.memory_space<vmem>>, vector<1x8x32xf32>
    %329 = vector.shape_cast %328 : vector<1x8x32xf32> to vector<8x32xf32>
    %cst_294 = arith.constant dense<0.000000e+00> : vector<8x256xf32>
    %330 = tpu.matmul %329, %327, %cst_294 {dimension_numbers = #tpu.dot_dimension_numbers<[1], [0], [0], [1], [0, 0, 1, 1], [], []>} : vector<8x32xf32>, vector<32x256xf32>, vector<8x256xf32> -> vector<8x256xf32>
    %331 = arith.addf %324, %330 : vector<8x256xf32>
    %c0_295 = arith.constant 0 : index
    %c33_296 = arith.constant 33 : index
    %332 = vector.load %arg7[%c0_295, %c33_296] : memref<32x290xf32, #tpu.memory_space<vmem>>, vector<32x256xf32>
    %c7_297 = arith.constant 7 : index
    %c0_298 = arith.constant 0 : index
    %c0_299 = arith.constant 0 : index
    %333 = vector.load %arg5[%c7_297, %c0_298, %c0_299] : memref<9x8x32xf32, #tpu.memory_space<vmem>>, vector<1x8x32xf32>
    %334 = vector.shape_cast %333 : vector<1x8x32xf32> to vector<8x32xf32>
    %cst_300 = arith.constant dense<0.000000e+00> : vector<8x256xf32>
    %335 = tpu.matmul %334, %332, %cst_300 {dimension_numbers = #tpu.dot_dimension_numbers<[1], [0], [0], [1], [0, 0, 1, 1], [], []>} : vector<8x32xf32>, vector<32x256xf32>, vector<8x256xf32> -> vector<8x256xf32>
    %336 = arith.addf %331, %335 : vector<8x256xf32>
    %c0_301 = arith.constant 0 : index
    %c34_302 = arith.constant 34 : index
    %337 = vector.load %arg7[%c0_301, %c34_302] : memref<32x290xf32, #tpu.memory_space<vmem>>, vector<32x256xf32>
    %c0_303 = arith.constant 0 : index
    %c32_304 = arith.constant 32 : index
    %338 = vector.load %arg7[%c0_303, %c32_304] : memref<32x290xf32, #tpu.memory_space<vmem>>, vector<32x256xf32>
    %339 = arith.select %285, %338, %337 : vector<32x256xi1>, vector<32x256xf32>
    %c8_305 = arith.constant 8 : index
    %c0_306 = arith.constant 0 : index
    %c0_307 = arith.constant 0 : index
    %340 = vector.load %arg5[%c8_305, %c0_306, %c0_307] : memref<9x8x32xf32, #tpu.memory_space<vmem>>, vector<1x8x32xf32>
    %341 = vector.shape_cast %340 : vector<1x8x32xf32> to vector<8x32xf32>
    %cst_308 = arith.constant dense<0.000000e+00> : vector<8x256xf32>
    %342 = tpu.matmul %341, %339, %cst_308 {dimension_numbers = #tpu.dot_dimension_numbers<[1], [0], [0], [1], [0, 0, 1, 1], [], []>} : vector<8x32xf32>, vector<32x256xf32>, vector<8x256xf32> -> vector<8x256xf32>
    %343 = arith.addf %336, %342 : vector<8x256xf32>
    %344 = arith.addf %343, %173 : vector<8x256xf32>
    %c0_309 = arith.constant 0 : index
    %c0_310 = arith.constant 0 : index
    %c0_311 = arith.constant 0 : index
    %345 = vector.load %arg6[%c0_309, %c0_310, %c0_311] : memref<1x8x256xf32, #tpu.memory_space<vmem>>, vector<1x8x256xf32>
    %346 = vector.shape_cast %345 : vector<1x8x256xf32> to vector<8x256xf32>
    %347 = vector.shape_cast %344 : vector<8x256xf32> to vector<1x8x256xf32>
    tpu.vector_store %arg6[%c0_309, %c0_310, %c0_311], %347 {strides = array<i32>} : memref<1x8x256xf32, #tpu.memory_space<vmem>>, vector<1x8x256xf32>,
    return
  }
  func.func @transform_0(%arg0: i32) -> (i32, i32, i32) {
    %c0_i32 = arith.constant 0 : i32
    %c0_i32_0 = arith.constant 0 : i32
    %c0_i32_1 = arith.constant 0 : i32
    return %arg0, %c0_i32, %c0_i32_0 : i32, i32, i32
  }
  func.func @transform_1(%arg0: i32) -> (i32, i32, i32) {
    %c0_i32 = arith.constant 0 : i32
    %c0_i32_0 = arith.constant 0 : i32
    %c0_i32_1 = arith.constant 0 : i32
    %c0_i32_2 = arith.constant 0 : i32
    return %c0_i32, %c0_i32_0, %c0_i32_1 : i32, i32, i32
  }
  func.func @transform_2(%arg0: i32) -> (i32, i32, i32) {
    %c0_i32 = arith.constant 0 : i32
    %c0_i32_0 = arith.constant 0 : i32
    %c0_i32_1 = arith.constant 0 : i32
    %c0_i32_2 = arith.constant 0 : i32
    return %c0_i32, %c0_i32_0, %c0_i32_1 : i32, i32, i32
  }
  func.func @transform_3(%arg0: i32) -> (i32, i32, i32) {
    %c0_i32 = arith.constant 0 : i32
    %c0_i32_0 = arith.constant 0 : i32
    %c0_i32_1 = arith.constant 0 : i32
    %c0_i32_2 = arith.constant 0 : i32
    return %c0_i32, %c0_i32_0, %c0_i32_1 : i32, i32, i32
  }
  func.func @transform_4(%arg0: i32) -> (i32, i32, i32) {
    %c0_i32 = arith.constant 0 : i32
    %c0_i32_0 = arith.constant 0 : i32
    %c0_i32_1 = arith.constant 0 : i32
    %c0_i32_2 = arith.constant 0 : i32
    return %c0_i32, %c0_i32_0, %c0_i32_1 : i32, i32, i32
  }
  func.func @transform_5(%arg0: i32) -> (i32, i32, i32) {
    %c0_i32 = arith.constant 0 : i32
    %c0_i32_0 = arith.constant 0 : i32
    %c0_i32_1 = arith.constant 0 : i32
    return %arg0, %c0_i32, %c0_i32_0 : i32, i32, i32
  }
}

</mosaic_0001>

<llo_original>
// kernel: tpu_custom_call.1
$region0: #{tpu_custom_call.1}
  #allocation0 [shape = 'u32[]', space=smem, size = 0x4, offset = 0x4, fixed_abs, tag = 'smem constant byte address 0x4 - core index']
  #allocation1 [shape = 'u32[144,128]{1,0:T(1,128)}', space=vmem, size = 0x12000, scoped, tag = 'internal scratch']
  #allocation2 [shape = 'f32[32,290]{1,0:T(8,128)}', space=vmem, size = 0xc000, scoped, tag = 'scratch operand']
  %s0 = inlined_call_operand.vmem [shape: f32[2,8,256], index: 0, kind: input, shape index: {}]
  %s1 = inlined_call_operand.vmem [shape: f32[9,8,8], index: 1, kind: input, shape index: {}]
  %s2 = inlined_call_operand.vmem [shape: f32[9,8,8], index: 2, kind: input, shape index: {}]
  %s3 = inlined_call_operand.vmem [shape: f32[9,32,8], index: 3, kind: input, shape index: {}]
  %s4 = inlined_call_operand.vmem [shape: f32[9,8,32], index: 4, kind: input, shape index: {}]
  %s5 = inlined_call_operand.hbm [shape: f32[2,8,256], index: 5, kind: output, shape index: {}]
  %s6 = sld [smem:[#allocation0]]
  $region53: #{tpu_custom_call.1} parent=0
    _
  %s8 = ssub.s32 1, %s6
  %s9 = scalar_select 0, %s8, %s6
  $region1: #{tpu_custom_call.1} parent=0
    #allocation3 [shape = 'u8[16384]{0}', space=vmem, size = 0x4000, scoped, tag = 'output window, operand 0']
    #allocation4 [shape = 's32[2]{0}', space=sflag, size = 0x8, scoped, tag = 'scoped memory for tpu_custom_call.1']
    %10 = vsyncpa [#allocation4], 0
    %s11 = scalar_lea.sflag [#allocation4], 1
    %12 = vsyncpa %s11, 0
    loop: start=0, step=1, limit=4
    $region2: #{tpu_custom_call.1} parent=1 // loop_pre_header
      _
    $region3: #{tpu_custom_call.1} parent=1 // loop_header
      %s14 = sphi 0, %s18
      %p15 = scmp.ge.s32.totalorder %s14, 4
      %s24 = sphi 0, %s26
      %s27 = sphi 0, %s24
      %s28 = sphi 0, %s27
      %s44 = sphi 0, %s28
      %s48 = sphi 0, %s48
      %s50 = sphi 0, %s48
      %s51 = sphi 0, %s50
      %s65 = sphi 0, %s51
      %s69 = sphi 0, %s69
      %s71 = sphi 0, %s69
      %s72 = sphi 0, %s71
      %s86 = sphi 0, %s72
      %s90 = sphi 0, %s90
      %s92 = sphi 0, %s90
      %s93 = sphi 0, %s92
      %s107 = sphi 0, %s93
      %s111 = sphi 0, %s111
      %s113 = sphi 0, %s111
      %s114 = sphi 0, %s113
      %s128 = sphi 0, %s114
      %s134 = sphi 0, %s136
      %s137 = sphi 0, %s134
      %s138 = sphi 0, %s137
      %s154 = sphi 0, %s138
    $region4: #{tpu_custom_call.1} parent=1 // loop_header_branch
      %17 = sbr.rel (%p15) target = $region8
    $region5: #{tpu_custom_call.1} parent=1 // loop_body
      %s19 = ssub.s32 %s14, 1
      %s20 = ssub.s32 %s14, 2
      %s21 = sadd.s32 %s14, 1
      %s22 = ssub.s32 %s14, %s21
      %p23 = scmp.eq.s32.totalorder %s22, 0
      %s25 = sadd.s32 %s24, 1
      %s26 = scalar_select %p23, %s24, %s25
      %p29 = pneg %p23
      %p30 = scmp.eq.s32.totalorder %s14, 1
      %p31 = por %p29, %p30
      %p32 = scmp.ne.s32.totalorder %s24, %s27
      %p33 = scmp.eq.s32.totalorder %s14, 0
      %p34 = por %p32, %p33
      %p35 = scmp.ne.s32.totalorder %s24, %s27
      %p36 = scmp.eq.s32.totalorder %s19, 1
      %p37 = por %p35, %p36
      %p38 = scmp.ne.s32.totalorder %s27, %s28
      %p39 = scmp.eq.s32.totalorder %s19, 0
      %p40 = por %p38, %p39
      %p41 = scmp.ne.s32.totalorder %s27, %s28
      %p42 = scmp.eq.s32.totalorder %s20, 1
      %p43 = por %p41, %p42
      %p45 = scmp.ne.s32.totalorder %s28, %s44
      %p46 = scmp.eq.s32.totalorder %s20, 0
      %p47 = por %p45, %p46
      %s49 = sadd.s32 %s48, 1
      %p52 = scmp.eq.s32.totalorder %s14, 1
      %p53 = scmp.ne.s32.totalorder %s48, %s50
      %p54 = scmp.eq.s32.totalorder %s14, 0
      %p55 = por %p53, %p54
      %p56 = scmp.ne.s32.totalorder %s48, %s50
      %p57 = scmp.eq.s32.totalorder %s19, 1
      %p58 = por %p56, %p57
      %p59 = scmp.ne.s32.totalorder %s50, %s51
      %p60 = scmp.eq.s32.totalorder %s19, 0
      %p61 = por %p59, %p60
      %p62 = scmp.ne.s32.totalorder %s50, %s51
      %p63 = scmp.eq.s32.totalorder %s20, 1
      %p64 = por %p62, %p63
      %p66 = scmp.ne.s32.totalorder %s51, %s65
      %p67 = scmp.eq.s32.totalorder %s20, 0
      %p68 = por %p66, %p67
      %s70 = sadd.s32 %s69, 1
      %p73 = scmp.eq.s32.totalorder %s14, 1
      %p74 = scmp.ne.s32.totalorder %s69, %s71
      %p75 = scmp.eq.s32.totalorder %s14, 0
      %p76 = por %p74, %p75
      %p77 = scmp.ne.s32.totalorder %s69, %s71
      %p78 = scmp.eq.s32.totalorder %s19, 1
      %p79 = por %p77, %p78
      %p80 = scmp.ne.s32.totalorder %s71, %s72
      %p81 = scmp.eq.s32.totalorder %s19, 0
      %p82 = por %p80, %p81
      %p83 = scmp.ne.s32.totalorder %s71, %s72
      %p84 = scmp.eq.s32.totalorder %s20, 1
      %p85 = por %p83, %p84
      %p87 = scmp.ne.s32.totalorder %s72, %s86
      %p88 = scmp.eq.s32.totalorder %s20, 0
      %p89 = por %p87, %p88
      %s91 = sadd.s32 %s90, 1
      %p94 = scmp.eq.s32.totalorder %s14, 1
      %p95 = scmp.ne.s32.totalorder %s90, %s92
      %p96 = scmp.eq.s32.totalorder %s14, 0
      %p97 = por %p95, %p96
      %p98 = scmp.ne.s32.totalorder %s90, %s92
      %p99 = scmp.eq.s32.totalorder %s19, 1
      %p100 = por %p98, %p99
      %p101 = scmp.ne.s32.totalorder %s92, %s93
      %p102 = scmp.eq.s32.totalorder %s19, 0
      %p103 = por %p101, %p102
      %p104 = scmp.ne.s32.totalorder %s92, %s93
      %p105 = scmp.eq.s32.totalorder %s20, 1
      %p106 = por %p104, %p105
      %p108 = scmp.ne.s32.totalorder %s93, %s107
      %p109 = scmp.eq.s32.totalorder %s20, 0
      %p110 = por %p108, %p109
      %s112 = sadd.s32 %s111, 1
      %p115 = scmp.eq.s32.totalorder %s14, 1
      %p116 = scmp.ne.s32.totalorder %s111, %s113
      %p117 = scmp.eq.s32.totalorder %s14, 0
      %p118 = por %p116, %p117
      %p119 = scmp.ne.s32.totalorder %s111, %s113
      %p120 = scmp.eq.s32.totalorder %s19, 1
      %p121 = por %p119, %p120
      %p122 = scmp.ne.s32.totalorder %s113, %s114
      %p123 = scmp.eq.s32.totalorder %s19, 0
      %p124 = por %p122, %p123
      %p125 = scmp.ne.s32.totalorder %s113, %s114
      %p126 = scmp.eq.s32.totalorder %s20, 1
      %p127 = por %p125, %p126
      %p129 = scmp.ne.s32.totalorder %s114, %s128
      %p130 = scmp.eq.s32.totalorder %s20, 0
      %p131 = por %p129, %p130
      %s132 = ssub.s32 %s14, %s21
      %p133 = scmp.eq.s32.totalorder %s132, 0
      %s135 = sadd.s32 %s134, 1
      %s136 = scalar_select %p133, %s134, %s135
      %p139 = pneg %p133
      %p140 = scmp.eq.s32.totalorder %s14, 1
      %p141 = por %p139, %p140
      %p142 = scmp.ne.s32.totalorder %s134, %s137
      %p143 = scmp.eq.s32.totalorder %s14, 0
      %p144 = por %p142, %p143
      %p145 = scmp.ne.s32.totalorder %s134, %s137
      %p146 = scmp.eq.s32.totalorder %s19, 1
      %p147 = por %p145, %p146
      %p148 = scmp.ne.s32.totalorder %s137, %s138
      %p149 = scmp.eq.s32.totalorder %s19, 0
      %p150 = por %p148, %p149
      %p151 = scmp.ne.s32.totalorder %s137, %s138
      %p152 = scmp.eq.s32.totalorder %s20, 1
      %p153 = por %p151, %p152
      %p155 = scmp.ne.s32.totalorder %s138, %s154
      %p156 = scmp.eq.s32.totalorder %s20, 0
      %p157 = por %p155, %p156
      %p158 = scmp.le.s32.totalorder 1, %s14
      %p159 = scmp.lt.s32.totalorder %s14, 3
      %p160 = pnand %p158, %p159
      %p161 = pneg %p160
      // Predicated region
      $region9: #{tpu_custom_call.1} parent=5 // pred_check
        _
      $region10: #{tpu_custom_call.1} parent=5 // pred_check_branch
        %163 = sbr.rel (%p160) target = $region12
      $region11: #{tpu_custom_call.1} parent=5 // pred_region
        %s164 = ssub.s32 %s14, 1
        // Predicated region
        $region13: #{tpu_custom_call.1} parent=11 // pred_check
          %p165 = pneg %p61
        $region14: #{tpu_custom_call.1} parent=11 // pred_check_branch
          %167 = sbr.rel (%p165) target = $region16
        $region15: #{tpu_custom_call.1} parent=11 // pred_region
          _
        $region16: #{tpu_custom_call.1} parent=11 // pred_fallthru
          _
        // Predicated region
        $region17: #{tpu_custom_call.1} parent=11 // pred_check
          %p168 = pneg %p82
        $region18: #{tpu_custom_call.1} parent=11 // pred_check_branch
          %170 = sbr.rel (%p168) target = $region20
        $region19: #{tpu_custom_call.1} parent=11 // pred_region
          _
        $region20: #{tpu_custom_call.1} parent=11 // pred_fallthru
          _
        // Predicated region
        $region21: #{tpu_custom_call.1} parent=11 // pred_check
          %p171 = pneg %p103
        $region22: #{tpu_custom_call.1} parent=11 // pred_check_branch
          %173 = sbr.rel (%p171) target = $region24
        $region23: #{tpu_custom_call.1} parent=11 // pred_region
          _
        $region24: #{tpu_custom_call.1} parent=11 // pred_fallthru
          _
        // Predicated region
        $region25: #{tpu_custom_call.1} parent=11 // pred_check
          %p174 = pneg %p124
        $region26: #{tpu_custom_call.1} parent=11 // pred_check_branch
          %176 = sbr.rel (%p174) target = $region28
        $region27: #{tpu_custom_call.1} parent=11 // pred_region
          _
        $region28: #{tpu_custom_call.1} parent=11 // pred_fallthru
          _
      $region12: #{tpu_custom_call.1} parent=5 // pred_fallthru
        _
      %p177 = scmp.lt.s32.totalorder %s14, 2
      // Predicated region
      $region29: #{tpu_custom_call.1} parent=5 // pred_check
        %p178 = pneg %p177
      $region30: #{tpu_custom_call.1} parent=5 // pred_check_branch
        %180 = sbr.rel (%p178) target = $region32
      $region31: #{tpu_custom_call.1} parent=5 // pred_region
        // Predicated region
        $region33: #{tpu_custom_call.1} parent=31 // pred_check
          %p181 = pneg %p34
        $region34: #{tpu_custom_call.1} parent=31 // pred_check_branch
          %183 = sbr.rel (%p181) target = $region36
        $region35: #{tpu_custom_call.1} parent=31 // pred_region
          %p184 = scmp.lt.s32.totalorder %s14, 1
          %s185 = scalar_select %p184, %s14, 1
          %s186 = smul.addr %s185, 2
          %s187 = smul.addr %s186, 8
          %s188 = scalar_lea.vmem %s0, %s187
        $region36: #{tpu_custom_call.1} parent=31 // pred_fallthru
          _
      $region32: #{tpu_custom_call.1} parent=5 // pred_fallthru
        _
      %p189 = scmp.le.s32.totalorder 1, %s14
      %p190 = scmp.lt.s32.totalorder %s14, 3
      %p191 = pnand %p189, %p190
      %p192 = pneg %p191
      // Predicated region
      $region37: #{tpu_custom_call.1} parent=5 // pred_check
        _
      $region38: #{tpu_custom_call.1} parent=5 // pred_check_branch
        %194 = sbr.rel (%p191) target = $region40
      $region39: #{tpu_custom_call.1} parent=5 // pred_region
        %s195 = ssub.s32 %s14, 1
        %p196 = scmp.lt.s32.totalorder %s19, 1
        %s197 = scalar_select %p196, %s19, 1
        %s198 = smul.addr %s197, 2
        %s199 = smul.addr %s198, 8
        %s200 = scalar_lea.vmem %s0, %s199
        %p201 = pneg %p40
        %p202 = pneg %p37
        %p203 = pneg %p61
        %p204 = pneg %p58
        %p205 = pneg %p82
        %p206 = pneg %p79
        %p207 = pneg %p103
        %p208 = pneg %p100
        %p209 = pneg %p124
        %p210 = pneg %p121
        %p211 = pneg %p150
        %p212 = pneg %p147
        %s213 = sand.u32 %s137, 1
        %s214 = scalar_lea.sflag [#allocation4], %s213
        %s215 = sand.u32 %s137, 1
        %s216 = smul.addr %s215, 16
        %s217 = scalar_lea.vmem [#allocation3], %s216
        %p218 = scmp.lt.s32.totalorder %s19, 1
        %s219 = scalar_select %p218, %s19, 1
        %s220 = smul.addr %s219, 2
        %s221 = smul.addr %s220, 8
        %s222 = scalar_lea.vmem %s0, %s221
        %v223 = vld [vmem:[%s222] sm:$0xff]
        %v224 = vld [vmem:[%s222 + $0x8] sm:$0xff]
        %226 = vrot.lane.b32.xlu0 %v223, 113
        %v227 = vpop.permute.xlu0 %226
        %vm229 = vcmask 138248
        %230 = vst.msk [vmem:[#allocation2] sm:$0xff] %vm229, %v227
        %232 = vrot.lane.b32.xlu0 %v223, 17
        %v233 = vpop.permute.xlu0 %232
        %234 = vrot.lane.b32.xlu0 %v224, 17
        %v235 = vpop.permute.xlu0 %234
        %vm236 = vcmask 138240
        %v237 = vsel %vm236, %v233, %v235
        %vm241 = vcmask 1047688
        %242 = vst.msk [vmem:[#allocation2] sm:$0xff] %vm241, %v233
        %243 = vst [vmem:[#allocation2 + $0x8] sm:$0xff] %v237
        %244 = vst.msk [vmem:[#allocation2 + $0x10] sm:$0xff] %vm236, %v235
        %245 = vrot.lane.b32.xlu0 %v224, 49
        %v246 = vpop.permute.xlu0 %245
        %vm248 = vcmask 269448
        %249 = vst.msk [vmem:[#allocation2 + $0x10] sm:$0xff] %vm248, %v246
        %v250 = vlaneseq
        %v251 = vand.u32 %v250, 127
        %v252 = vadd.s32 %v251, 128
        %vm253 = vcmp.lt.s32.totalorder %v251, 0
        %v254 = vsub.s32 0, %v251
        %v255 = vsel %vm253, %v254, %v251
        %v256 = vshrl.u32 %v255, 4
        %v257 = vand.u32 %v255, 15
        %v258 = vsub.s32 0, %v257
        %v259 = vsel %vm253, %v258, %v257
        %vm260 = vcmp.lt.s32.totalorder %v252, 0
        %v261 = vsub.s32 0, %v252
        %v262 = vsel %vm260, %v261, %v252
        %v263 = vshrl.u32 %v262, 4
        %v264 = vand.u32 %v262, 15
        %v265 = vsub.s32 0, %v264
        %v266 = vsel %vm260, %v265, %v264
        %vm267 = vcmp.ne.s32.totalorder %v259, 0
        %vm268 = vcmp.ne.s32.totalorder %v266, 0
        %vm269 = vcmp.lt.s32.totalorder %v259, 0
        %vm270 = vcmp.lt.s32.totalorder %v266, 0
        %vm271 = vmand %vm269, %vm267
        %vm272 = vmand %vm270, %vm268
        %v273 = vadd.s32 %v259, 16
        %v274 = vadd.s32 %v266, 16
        %v275 = vsel %vm271, %v273, %v259
        %v276 = vsel %vm272, %v274, %v266
        %vm277 = vcmp.eq.s32.totalorder %v275, 0
        %vm278 = vcmp.eq.s32.totalorder %v276, 0
        %vm279 = vcmp.eq.s32.totalorder %v275, 15
        %vm280 = vcmp.eq.s32.totalorder %v276, 15
        %v281 = vld [vmem:[#allocation2] sm:$0xff]
        %v282 = vld [vmem:[#allocation2 + $0x8] sm:$0xff]
        %v283 = vld [vmem:[#allocation2 + $0x10] sm:$0xff]
        %287 = vrot.lane.b32.xlu0 %v281, 126
        %v288 = vpop.permute.xlu0 %287
        %289 = vrot.lane.b32.xlu0 %v282, 126
        %v290 = vpop.permute.xlu0 %289
        %291 = vrot.lane.b32.xlu0 %v283, 126
        %v292 = vpop.permute.xlu0 %291
        %vm293 = vcmask 1031168
        %v294 = vsel %vm293, %v288, %v290
        %v295 = vsel %vm293, %v290, %v292
        %v298 = vsel %vm277, %v294, %v281
        %v299 = vsel %vm278, %v295, %v282
        %v300 = vld [vmem:[%s1] sm:$0xff]
        %s301 = scalar_lea.vmem %s1, 8
        %v302 = vld [vmem:[%s301] sm:$0xff]
        %303 = vrot.lane.b32.xlu0 %v281, 127
        %v304 = vpop.permute.xlu0 %303
        %305 = vrot.lane.b32.xlu0 %v282, 127
        %v306 = vpop.permute.xlu0 %305
        %307 = vrot.lane.b32.xlu0 %v283, 127
        %v308 = vpop.permute.xlu0 %307
        %vm309 = vcmask 1039360
        %v310 = vsel %vm309, %v304, %v306
        %v311 = vsel %vm309, %v306, %v308
        %vm314 = vcmask 64512
        %v316 = vsel %vm314, %v302, 0
        %318 = vmatprep.subr.mxu0 0.0
        %319 = vmatpush1.msra.mxu0 0.0
        %320 = vmatprep.subr.mxu0 0.0
        %321 = vmatpush1.msra.mxu0 0.0
        %322 = vmatprep.subr.mxu0 0.0
        %323 = vmatpush1.msra.mxu0 0.0
        %324 = vmatprep.subr.mxu0 0.0
        %325 = vmatpush1.msra.mxu0 0.0
        %326 = vmatprep.subr.mxu0 0.0
        %327 = vmatpush1.msra.mxu0 0.0
        %328 = vmatprep.subr.mxu0 0.0
        %329 = vmatpush1.msra.mxu0 0.0
        %330 = vmatprep.subr.mxu0 0.0
        %331 = vmatpush1.msra.mxu0 0.0
        %332 = vmatprep.subr.mxu0 0.0
        %333 = vmatpush1.msra.mxu0 0.0
        %334 = vmatprep.subr.mxu0 0.0
        %335 = vmatpush1.msra.mxu0 0.0
        %336 = vmatprep.subr.mxu0 0.0
        %337 = vmatpush1.msra.mxu0 0.0
        %338 = vmatprep.subr.mxu0 0.0
        %339 = vmatpush1.msra.mxu0 0.0
        %340 = vmatprep.subr.mxu0 0.0
        %341 = vmatpush1.msra.mxu0 0.0
        %342 = vmatprep.subr.mxu0 0.0
        %343 = vmatpush1.msra.mxu0 0.0
        %344 = vmatprep.subr.mxu0 0.0
        %345 = vmatpush1.msra.mxu0 0.0
        %346 = vmatprep.subr.mxu0 0.0
        %347 = vmatpush1.msra.mxu0 0.0
        %348 = vmatprep.subr.mxu0 %v311
        %349 = vmatpush1.msra.mxu0 %v310
        %350 = vmatprep.subr.mxu0 0.0
        %351 = vmatpush2.msra.mxu0 0.0
        %352 = vmatprep.subr.mxu0 0.0
        %353 = vmatpush2.msra.mxu0 0.0
        %354 = vmatprep.subr.mxu0 0.0
        %355 = vmatpush2.msra.mxu0 0.0
        %356 = vmatprep.subr.mxu0 0.0
        %357 = vmatpush2.msra.mxu0 0.0
        %358 = vmatprep.subr.mxu0 0.0
        %359 = vmatpush2.msra.mxu0 0.0
        %360 = vmatprep.subr.mxu0 0.0
        %361 = vmatpush2.msra.mxu0 0.0
        %362 = vmatprep.subr.mxu0 0.0
        %363 = vmatpush2.msra.mxu0 0.0
        %364 = vmatprep.subr.mxu0 0.0
        %365 = vmatpush2.msra.mxu0 0.0
        %366 = vmatprep.subr.mxu0 0.0
        %367 = vmatpush2.msra.mxu0 0.0
        %368 = vmatprep.subr.mxu0 0.0
        %369 = vmatpush2.msra.mxu0 0.0
        %370 = vmatprep.subr.mxu0 0.0
        %371 = vmatpush2.msra.mxu0 0.0
        %372 = vmatprep.subr.mxu0 0.0
        %373 = vmatpush2.msra.mxu0 0.0
        %374 = vmatprep.subr.mxu0 0.0
        %375 = vmatpush2.msra.mxu0 0.0
        %376 = vmatprep.subr.mxu0 0.0
        %377 = vmatpush2.msra.mxu0 0.0
        %378 = vmatprep.subr.mxu0 0.0
        %379 = vmatpush2.msra.mxu0 0.0
        %380 = vmatprep.subr.mxu0 0.0
        %381 = vmatpush2.msra.mxu0 0.0
        %382 = vmatprep.mubr.f32.mxu0 0.0
        %383 = vmatmul.mubr.f32.gmra.mxu0 %v316
        %v384 = vpop.f32.mrf.mxu0
        %v385 = vadd.f32 0.0, %v384
        %v386 = vpop.f32.mrf.mxu0
        %v387 = vadd.f32 0.0, %v386
        %388 = vdwg.mxu0
        %v390 = vsel %vm314, %v300, 0
        %392 = vmatprep.subr.mxu0 0.0
        %393 = vmatpush1.msra.mxu0 0.0
        %394 = vmatprep.subr.mxu0 0.0
        %395 = vmatpush1.msra.mxu0 0.0
        %396 = vmatprep.subr.mxu0 0.0
        %397 = vmatpush1.msra.mxu0 0.0
        %398 = vmatprep.subr.mxu0 0.0
        %399 = vmatpush1.msra.mxu0 0.0
        %400 = vmatprep.subr.mxu0 0.0
        %401 = vmatpush1.msra.mxu0 0.0
        %402 = vmatprep.subr.mxu0 0.0
        %403 = vmatpush1.msra.mxu0 0.0
        %404 = vmatprep.subr.mxu0 0.0
        %405 = vmatpush1.msra.mxu0 0.0
        %406 = vmatprep.subr.mxu0 0.0
        %407 = vmatpush1.msra.mxu0 0.0
        %408 = vmatprep.subr.mxu0 0.0
        %409 = vmatpush1.msra.mxu0 0.0
        %410 = vmatprep.subr.mxu0 0.0
        %411 = vmatpush1.msra.mxu0 0.0
        %412 = vmatprep.subr.mxu0 0.0
        %413 = vmatpush1.msra.mxu0 0.0
        %414 = vmatprep.subr.mxu0 0.0
        %415 = vmatpush1.msra.mxu0 0.0
        %416 = vmatprep.subr.mxu0 0.0
        %417 = vmatpush1.msra.mxu0 0.0
        %418 = vmatprep.subr.mxu0 0.0
        %419 = vmatpush1.msra.mxu0 0.0
        %420 = vmatprep.subr.mxu0 0.0
        %421 = vmatpush1.msra.mxu0 0.0
        %422 = vmatprep.subr.mxu0 %v299
        %423 = vmatpush1.msra.mxu0 %v298
        %424 = vmatprep.subr.mxu0 0.0
        %425 = vmatpush2.msra.mxu0 0.0
        %426 = vmatprep.subr.mxu0 0.0
        %427 = vmatpush2.msra.mxu0 0.0
        %428 = vmatprep.subr.mxu0 0.0
        %429 = vmatpush2.msra.mxu0 0.0
        %430 = vmatprep.subr.mxu0 0.0
        %431 = vmatpush2.msra.mxu0 0.0
        %432 = vmatprep.subr.mxu0 0.0
        %433 = vmatpush2.msra.mxu0 0.0
        %434 = vmatprep.subr.mxu0 0.0
        %435 = vmatpush2.msra.mxu0 0.0
        %436 = vmatprep.subr.mxu0 0.0
        %437 = vmatpush2.msra.mxu0 0.0
        %438 = vmatprep.subr.mxu0 0.0
        %439 = vmatpush2.msra.mxu0 0.0
        %440 = vmatprep.subr.mxu0 0.0
        %441 = vmatpush2.msra.mxu0 0.0
        %442 = vmatprep.subr.mxu0 0.0
        %443 = vmatpush2.msra.mxu0 0.0
        %444 = vmatprep.subr.mxu0 0.0
        %445 = vmatpush2.msra.mxu0 0.0
        %446 = vmatprep.subr.mxu0 0.0
        %447 = vmatpush2.msra.mxu0 0.0
        %448 = vmatprep.subr.mxu0 0.0
        %449 = vmatpush2.msra.mxu0 0.0
        %450 = vmatprep.subr.mxu0 0.0
        %451 = vmatpush2.msra.mxu0 0.0
        %452 = vmatprep.subr.mxu0 0.0
        %453 = vmatpush2.msra.mxu0 0.0
        %454 = vmatprep.subr.mxu0 0.0
        %455 = vmatpush2.msra.mxu0 0.0
        %456 = vmatprep.mubr.f32.mxu0 0.0
        %457 = vmatmul.mubr.f32.gmra.mxu0 %v390
        %v458 = vpop.f32.mrf.mxu0
        %v459 = vadd.f32 %v385, %v458
        %v460 = vpop.f32.mrf.mxu0
        %v461 = vadd.f32 %v387, %v460
        %462 = vdwg.mxu0
        %v463 = vsel %vm279, %v281, %v294
        %v464 = vsel %vm280, %v282, %v295
        %s465 = scalar_lea.vmem %s1, 16
        %v466 = vld [vmem:[%s465] sm:$0xff]
        %v468 = vsel %vm314, %v466, 0
        %470 = vmatprep.subr.mxu0 0.0
        %471 = vmatpush1.msra.mxu0 0.0
        %472 = vmatprep.subr.mxu0 0.0
        %473 = vmatpush1.msra.mxu0 0.0
        %474 = vmatprep.subr.mxu0 0.0
        %475 = vmatpush1.msra.mxu0 0.0
        %476 = vmatprep.subr.mxu0 0.0
        %477 = vmatpush1.msra.mxu0 0.0
        %478 = vmatprep.subr.mxu0 0.0
        %479 = vmatpush1.msra.mxu0 0.0
        %480 = vmatprep.subr.mxu0 0.0
        %481 = vmatpush1.msra.mxu0 0.0
        %482 = vmatprep.subr.mxu0 0.0
        %483 = vmatpush1.msra.mxu0 0.0
        %484 = vmatprep.subr.mxu0 0.0
        %485 = vmatpush1.msra.mxu0 0.0
        %486 = vmatprep.subr.mxu0 0.0
        %487 = vmatpush1.msra.mxu0 0.0
        %488 = vmatprep.subr.mxu0 0.0
        %489 = vmatpush1.msra.mxu0 0.0
        %490 = vmatprep.subr.mxu0 0.0
        %491 = vmatpush1.msra.mxu0 0.0
        %492 = vmatprep.subr.mxu0 0.0
        %493 = vmatpush1.msra.mxu0 0.0
        %494 = vmatprep.subr.mxu0 0.0
        %495 = vmatpush1.msra.mxu0 0.0
        %496 = vmatprep.subr.mxu0 0.0
        %497 = vmatpush1.msra.mxu0 0.0
        %498 = vmatprep.subr.mxu0 0.0
        %499 = vmatpush1.msra.mxu0 0.0
        %500 = vmatprep.subr.mxu0 %v464
        %501 = vmatpush1.msra.mxu0 %v463
        %502 = vmatprep.subr.mxu0 0.0
        %503 = vmatpush2.msra.mxu0 0.0
        %504 = vmatprep.subr.mxu0 0.0
        %505 = vmatpush2.msra.mxu0 0.0
        %506 = vmatprep.subr.mxu0 0.0
        %507 = vmatpush2.msra.mxu0 0.0
        %508 = vmatprep.subr.mxu0 0.0
        %509 = vmatpush2.msra.mxu0 0.0
        %510 = vmatprep.subr.mxu0 0.0
        %511 = vmatpush2.msra.mxu0 0.0
        %512 = vmatprep.subr.mxu0 0.0
        %513 = vmatpush2.msra.mxu0 0.0
        %514 = vmatprep.subr.mxu0 0.0
        %515 = vmatpush2.msra.mxu0 0.0
        %516 = vmatprep.subr.mxu0 0.0
        %517 = vmatpush2.msra.mxu0 0.0
        %518 = vmatprep.subr.mxu0 0.0
        %519 = vmatpush2.msra.mxu0 0.0
        %520 = vmatprep.subr.mxu0 0.0
        %521 = vmatpush2.msra.mxu0 0.0
        %522 = vmatprep.subr.mxu0 0.0
        %523 = vmatpush2.msra.mxu0 0.0
        %524 = vmatprep.subr.mxu0 0.0
        %525 = vmatpush2.msra.mxu0 0.0
        %526 = vmatprep.subr.mxu0 0.0
        %527 = vmatpush2.msra.mxu0 0.0
        %528 = vmatprep.subr.mxu0 0.0
        %529 = vmatpush2.msra.mxu0 0.0
        %530 = vmatprep.subr.mxu0 0.0
        %531 = vmatpush2.msra.mxu0 0.0
        %532 = vmatprep.subr.mxu0 0.0
        %533 = vmatpush2.msra.mxu0 0.0
        %534 = vmatprep.mubr.f32.mxu0 0.0
        %535 = vmatmul.mubr.f32.gmra.mxu0 %v468
        %v536 = vpop.f32.mrf.mxu0
        %v537 = vadd.f32 0.0, %v536
        %v538 = vpop.f32.mrf.mxu0
        %v539 = vadd.f32 0.0, %v538
        %540 = vdwg.mxu0
        %v541 = vadd.f32 %v459, %v537
        %v542 = vadd.f32 %v461, %v539
        %543 = vrot.lane.b32.xlu0 %v281, 110
        %v544 = vpop.permute.xlu0 %543
        %545 = vrot.lane.b32.xlu0 %v282, 110
        %v546 = vpop.permute.xlu0 %545
        %547 = vrot.lane.b32.xlu0 %v283, 110
        %v548 = vpop.permute.xlu0 %547
        %vm549 = vcmask 900096
        %v550 = vsel %vm549, %v544, %v546
        %v551 = vsel %vm549, %v546, %v548
        %554 = vrot.lane.b32.xlu0 %v281, 112
        %v555 = vpop.permute.xlu0 %554
        %556 = vrot.lane.b32.xlu0 %v282, 112
        %v557 = vpop.permute.xlu0 %556
        %558 = vrot.lane.b32.xlu0 %v283, 112
        %v559 = vpop.permute.xlu0 %558
        %vm560 = vcmask 916480
        %v561 = vsel %vm560, %v555, %v557
        %v562 = vsel %vm560, %v557, %v559
        %v565 = vsel %vm277, %v550, %v561
        %v566 = vsel %vm278, %v551, %v562
        %s567 = scalar_lea.vmem %s1, 24
        %v568 = vld [vmem:[%s567] sm:$0xff]
        %v570 = vsel %vm314, %v568, 0
        %572 = vmatprep.subr.mxu0 0.0
        %573 = vmatpush1.msra.mxu0 0.0
        %574 = vmatprep.subr.mxu0 0.0
        %575 = vmatpush1.msra.mxu0 0.0
        %576 = vmatprep.subr.mxu0 0.0
        %577 = vmatpush1.msra.mxu0 0.0
        %578 = vmatprep.subr.mxu0 0.0
        %579 = vmatpush1.msra.mxu0 0.0
        %580 = vmatprep.subr.mxu0 0.0
        %581 = vmatpush1.msra.mxu0 0.0
        %582 = vmatprep.subr.mxu0 0.0
        %583 = vmatpush1.msra.mxu0 0.0
        %584 = vmatprep.subr.mxu0 0.0
        %585 = vmatpush1.msra.mxu0 0.0
        %586 = vmatprep.subr.mxu0 0.0
        %587 = vmatpush1.msra.mxu0 0.0
        %588 = vmatprep.subr.mxu0 0.0
        %589 = vmatpush1.msra.mxu0 0.0
        %590 = vmatprep.subr.mxu0 0.0
        %591 = vmatpush1.msra.mxu0 0.0
        %592 = vmatprep.subr.mxu0 0.0
        %593 = vmatpush1.msra.mxu0 0.0
        %594 = vmatprep.subr.mxu0 0.0
        %595 = vmatpush1.msra.mxu0 0.0
        %596 = vmatprep.subr.mxu0 0.0
        %597 = vmatpush1.msra.mxu0 0.0
        %598 = vmatprep.subr.mxu0 0.0
        %599 = vmatpush1.msra.mxu0 0.0
        %600 = vmatprep.subr.mxu0 0.0
        %601 = vmatpush1.msra.mxu0 0.0
        %602 = vmatprep.subr.mxu0 %v566
        %603 = vmatpush1.msra.mxu0 %v565
        %604 = vmatprep.subr.mxu0 0.0
        %605 = vmatpush2.msra.mxu0 0.0
        %606 = vmatprep.subr.mxu0 0.0
        %607 = vmatpush2.msra.mxu0 0.0
        %608 = vmatprep.subr.mxu0 0.0
        %609 = vmatpush2.msra.mxu0 0.0
        %610 = vmatprep.subr.mxu0 0.0
        %611 = vmatpush2.msra.mxu0 0.0
        %612 = vmatprep.subr.mxu0 0.0
        %613 = vmatpush2.msra.mxu0 0.0
        %614 = vmatprep.subr.mxu0 0.0
        %615 = vmatpush2.msra.mxu0 0.0
        %616 = vmatprep.subr.mxu0 0.0
        %617 = vmatpush2.msra.mxu0 0.0
        %618 = vmatprep.subr.mxu0 0.0
        %619 = vmatpush2.msra.mxu0 0.0
        %620 = vmatprep.subr.mxu0 0.0
        %621 = vmatpush2.msra.mxu0 0.0
        %622 = vmatprep.subr.mxu0 0.0
        %623 = vmatpush2.msra.mxu0 0.0
        %624 = vmatprep.subr.mxu0 0.0
        %625 = vmatpush2.msra.mxu0 0.0
        %626 = vmatprep.subr.mxu0 0.0
        %627 = vmatpush2.msra.mxu0 0.0
        %628 = vmatprep.subr.mxu0 0.0
        %629 = vmatpush2.msra.mxu0 0.0
        %630 = vmatprep.subr.mxu0 0.0
        %631 = vmatpush2.msra.mxu0 0.0
        %632 = vmatprep.subr.mxu0 0.0
        %633 = vmatpush2.msra.mxu0 0.0
        %634 = vmatprep.subr.mxu0 0.0
        %635 = vmatpush2.msra.mxu0 0.0
        %636 = vmatprep.mubr.f32.mxu0 0.0
        %637 = vmatmul.mubr.f32.gmra.mxu0 %v570
        %v638 = vpop.f32.mrf.mxu0
        %v639 = vadd.f32 0.0, %v638
        %v640 = vpop.f32.mrf.mxu0
        %v641 = vadd.f32 0.0, %v640
        %642 = vdwg.mxu0
        %v643 = vadd.f32 %v541, %v639
        %v644 = vadd.f32 %v542, %v641
        %s645 = scalar_lea.vmem %s1, 32
        %v646 = vld [vmem:[%s645] sm:$0xff]
        %647 = vrot.lane.b32.xlu0 %v281, 111
        %v648 = vpop.permute.xlu0 %647
        %649 = vrot.lane.b32.xlu0 %v282, 111
        %v650 = vpop.permute.xlu0 %649
        %651 = vrot.lane.b32.xlu0 %v283, 111
        %v652 = vpop.permute.xlu0 %651
        %vm653 = vcmask 908288
        %v654 = vsel %vm653, %v648, %v650
        %v655 = vsel %vm653, %v650, %v652
        %v659 = vsel %vm314, %v646, 0
        %661 = vmatprep.subr.mxu0 0.0
        %662 = vmatpush1.msra.mxu0 0.0
        %663 = vmatprep.subr.mxu0 0.0
        %664 = vmatpush1.msra.mxu0 0.0
        %665 = vmatprep.subr.mxu0 0.0
        %666 = vmatpush1.msra.mxu0 0.0
        %667 = vmatprep.subr.mxu0 0.0
        %668 = vmatpush1.msra.mxu0 0.0
        %669 = vmatprep.subr.mxu0 0.0
        %670 = vmatpush1.msra.mxu0 0.0
        %671 = vmatprep.subr.mxu0 0.0
        %672 = vmatpush1.msra.mxu0 0.0
        %673 = vmatprep.subr.mxu0 0.0
        %674 = vmatpush1.msra.mxu0 0.0
        %675 = vmatprep.subr.mxu0 0.0
        %676 = vmatpush1.msra.mxu0 0.0
        %677 = vmatprep.subr.mxu0 0.0
        %678 = vmatpush1.msra.mxu0 0.0
        %679 = vmatprep.subr.mxu0 0.0
        %680 = vmatpush1.msra.mxu0 0.0
        %681 = vmatprep.subr.mxu0 0.0
        %682 = vmatpush1.msra.mxu0 0.0
        %683 = vmatprep.subr.mxu0 0.0
        %684 = vmatpush1.msra.mxu0 0.0
        %685 = vmatprep.subr.mxu0 0.0
        %686 = vmatpush1.msra.mxu0 0.0
        %687 = vmatprep.subr.mxu0 0.0
        %688 = vmatpush1.msra.mxu0 0.0
        %689 = vmatprep.subr.mxu0 0.0
        %690 = vmatpush1.msra.mxu0 0.0
        %691 = vmatprep.subr.mxu0 %v655
        %692 = vmatpush1.msra.mxu0 %v654
        %693 = vmatprep.subr.mxu0 0.0
        %694 = vmatpush2.msra.mxu0 0.0
        %695 = vmatprep.subr.mxu0 0.0
        %696 = vmatpush2.msra.mxu0 0.0
        %697 = vmatprep.subr.mxu0 0.0
        %698 = vmatpush2.msra.mxu0 0.0
        %699 = vmatprep.subr.mxu0 0.0
        %700 = vmatpush2.msra.mxu0 0.0
        %701 = vmatprep.subr.mxu0 0.0
        %702 = vmatpush2.msra.mxu0 0.0
        %703 = vmatprep.subr.mxu0 0.0
        %704 = vmatpush2.msra.mxu0 0.0
        %705 = vmatprep.subr.mxu0 0.0
        %706 = vmatpush2.msra.mxu0 0.0
        %707 = vmatprep.subr.mxu0 0.0
        %708 = vmatpush2.msra.mxu0 0.0
        %709 = vmatprep.subr.mxu0 0.0
        %710 = vmatpush2.msra.mxu0 0.0
        %711 = vmatprep.subr.mxu0 0.0
        %712 = vmatpush2.msra.mxu0 0.0
        %713 = vmatprep.subr.mxu0 0.0
        %714 = vmatpush2.msra.mxu0 0.0
        %715 = vmatprep.subr.mxu0 0.0
        %716 = vmatpush2.msra.mxu0 0.0
        %717 = vmatprep.subr.mxu0 0.0
        %718 = vmatpush2.msra.mxu0 0.0
        %719 = vmatprep.subr.mxu0 0.0
        %720 = vmatpush2.msra.mxu0 0.0
        %721 = vmatprep.subr.mxu0 0.0
        %722 = vmatpush2.msra.mxu0 0.0
        %723 = vmatprep.subr.mxu0 0.0
        %724 = vmatpush2.msra.mxu0 0.0
        %725 = vmatprep.mubr.f32.mxu0 0.0
        %726 = vmatmul.mubr.f32.gmra.mxu0 %v659
        %v727 = vpop.f32.mrf.mxu0
        %v728 = vadd.f32 0.0, %v727
        %v729 = vpop.f32.mrf.mxu0
        %v730 = vadd.f32 0.0, %v729
        %731 = vdwg.mxu0
        %v732 = vadd.f32 %v643, %v728
        %v733 = vadd.f32 %v644, %v730
        %v734 = vsel %vm279, %v561, %v550
        %v735 = vsel %vm280, %v562, %v551
        %s736 = scalar_lea.vmem %s1, 40
        %v737 = vld [vmem:[%s736] sm:$0xff]
        %v739 = vsel %vm314, %v737, 0
        %741 = vmatprep.subr.mxu0 0.0
        %742 = vmatpush1.msra.mxu0 0.0
        %743 = vmatprep.subr.mxu0 0.0
        %744 = vmatpush1.msra.mxu0 0.0
        %745 = vmatprep.subr.mxu0 0.0
        %746 = vmatpush1.msra.mxu0 0.0
        %747 = vmatprep.subr.mxu0 0.0
        %748 = vmatpush1.msra.mxu0 0.0
        %749 = vmatprep.subr.mxu0 0.0
        %750 = vmatpush1.msra.mxu0 0.0
        %751 = vmatprep.subr.mxu0 0.0
        %752 = vmatpush1.msra.mxu0 0.0
        %753 = vmatprep.subr.mxu0 0.0
        %754 = vmatpush1.msra.mxu0 0.0
        %755 = vmatprep.subr.mxu0 0.0
        %756 = vmatpush1.msra.mxu0 0.0
        %757 = vmatprep.subr.mxu0 0.0
        %758 = vmatpush1.msra.mxu0 0.0
        %759 = vmatprep.subr.mxu0 0.0
        %760 = vmatpush1.msra.mxu0 0.0
        %761 = vmatprep.subr.mxu0 0.0
        %762 = vmatpush1.msra.mxu0 0.0
        %763 = vmatprep.subr.mxu0 0.0
        %764 = vmatpush1.msra.mxu0 0.0
        %765 = vmatprep.subr.mxu0 0.0
        %766 = vmatpush1.msra.mxu0 0.0
        %767 = vmatprep.subr.mxu0 0.0
        %768 = vmatpush1.msra.mxu0 0.0
        %769 = vmatprep.subr.mxu0 0.0
        %770 = vmatpush1.msra.mxu0 0.0
        %771 = vmatprep.subr.mxu0 %v735
        %772 = vmatpush1.msra.mxu0 %v734
        %773 = vmatprep.subr.mxu0 0.0
        %774 = vmatpush2.msra.mxu0 0.0
        %775 = vmatprep.subr.mxu0 0.0
        %776 = vmatpush2.msra.mxu0 0.0
        %777 = vmatprep.subr.mxu0 0.0
        %778 = vmatpush2.msra.mxu0 0.0
        %779 = vmatprep.subr.mxu0 0.0
        %780 = vmatpush2.msra.mxu0 0.0
        %781 = vmatprep.subr.mxu0 0.0
        %782 = vmatpush2.msra.mxu0 0.0
        %783 = vmatprep.subr.mxu0 0.0
        %784 = vmatpush2.msra.mxu0 0.0
        %785 = vmatprep.subr.mxu0 0.0
        %786 = vmatpush2.msra.mxu0 0.0
        %787 = vmatprep.subr.mxu0 0.0
        %788 = vmatpush2.msra.mxu0 0.0
        %789 = vmatprep.subr.mxu0 0.0
        %790 = vmatpush2.msra.mxu0 0.0
        %791 = vmatprep.subr.mxu0 0.0
        %792 = vmatpush2.msra.mxu0 0.0
        %793 = vmatprep.subr.mxu0 0.0
        %794 = vmatpush2.msra.mxu0 0.0
        %795 = vmatprep.subr.mxu0 0.0
        %796 = vmatpush2.msra.mxu0 0.0
        %797 = vmatprep.subr.mxu0 0.0
        %798 = vmatpush2.msra.mxu0 0.0
        %799 = vmatprep.subr.mxu0 0.0
        %800 = vmatpush2.msra.mxu0 0.0
        %801 = vmatprep.subr.mxu0 0.0
        %802 = vmatpush2.msra.mxu0 0.0
        %803 = vmatprep.subr.mxu0 0.0
        %804 = vmatpush2.msra.mxu0 0.0
        %805 = vmatprep.mubr.f32.mxu0 0.0
        %806 = vmatmul.mubr.f32.gmra.mxu0 %v739
        %v807 = vpop.f32.mrf.mxu0
        %v808 = vadd.f32 0.0, %v807
        %v809 = vpop.f32.mrf.mxu0
        %v810 = vadd.f32 0.0, %v809
        %811 = vdwg.mxu0
        %v812 = vadd.f32 %v732, %v808
        %v813 = vadd.f32 %v733, %v810
        %814 = vrot.lane.b32.xlu0 %v281, 94
        %v815 = vpop.permute.xlu0 %814
        %816 = vrot.lane.b32.xlu0 %v282, 94
        %v817 = vpop.permute.xlu0 %816
        %818 = vrot.lane.b32.xlu0 %v283, 94
        %v819 = vpop.permute.xlu0 %818
        %vm820 = vcmask 769024
        %v821 = vsel %vm820, %v815, %v817
        %v822 = vsel %vm820, %v817, %v819
        %825 = vrot.lane.b32.xlu0 %v281, 96
        %v826 = vpop.permute.xlu0 %825
        %827 = vrot.lane.b32.xlu0 %v282, 96
        %v828 = vpop.permute.xlu0 %827
        %829 = vrot.lane.b32.xlu0 %v283, 96
        %v830 = vpop.permute.xlu0 %829
        %vm831 = vcmask 785408
        %v832 = vsel %vm831, %v826, %v828
        %v833 = vsel %vm831, %v828, %v830
        %v836 = vsel %vm277, %v821, %v832
        %v837 = vsel %vm278, %v822, %v833
        %s838 = scalar_lea.vmem %s1, 48
        %v839 = vld [vmem:[%s838] sm:$0xff]
        %v841 = vsel %vm314, %v839, 0
        %843 = vmatprep.subr.mxu0 0.0
        %844 = vmatpush1.msra.mxu0 0.0
        %845 = vmatprep.subr.mxu0 0.0
        %846 = vmatpush1.msra.mxu0 0.0
        %847 = vmatprep.subr.mxu0 0.0
        %848 = vmatpush1.msra.mxu0 0.0
        %849 = vmatprep.subr.mxu0 0.0
        %850 = vmatpush1.msra.mxu0 0.0
        %851 = vmatprep.subr.mxu0 0.0
        %852 = vmatpush1.msra.mxu0 0.0
        %853 = vmatprep.subr.mxu0 0.0
        %854 = vmatpush1.msra.mxu0 0.0
        %855 = vmatprep.subr.mxu0 0.0
        %856 = vmatpush1.msra.mxu0 0.0
        %857 = vmatprep.subr.mxu0 0.0
        %858 = vmatpush1.msra.mxu0 0.0
        %859 = vmatprep.subr.mxu0 0.0
        %860 = vmatpush1.msra.mxu0 0.0
        %861 = vmatprep.subr.mxu0 0.0
        %862 = vmatpush1.msra.mxu0 0.0
        %863 = vmatprep.subr.mxu0 0.0
        %864 = vmatpush1.msra.mxu0 0.0
        %865 = vmatprep.subr.mxu0 0.0
        %866 = vmatpush1.msra.mxu0 0.0
        %867 = vmatprep.subr.mxu0 0.0
        %868 = vmatpush1.msra.mxu0 0.0
        %869 = vmatprep.subr.mxu0 0.0
        %870 = vmatpush1.msra.mxu0 0.0
        %871 = vmatprep.subr.mxu0 0.0
        %872 = vmatpush1.msra.mxu0 0.0
        %873 = vmatprep.subr.mxu0 %v837
        %874 = vmatpush1.msra.mxu0 %v836
        %875 = vmatprep.subr.mxu0 0.0
        %876 = vmatpush2.msra.mxu0 0.0
        %877 = vmatprep.subr.mxu0 0.0
        %878 = vmatpush2.msra.mxu0 0.0
        %879 = vmatprep.subr.mxu0 0.0
        %880 = vmatpush2.msra.mxu0 0.0
        %881 = vmatprep.subr.mxu0 0.0
        %882 = vmatpush2.msra.mxu0 0.0
        %883 = vmatprep.subr.mxu0 0.0
        %884 = vmatpush2.msra.mxu0 0.0
        %885 = vmatprep.subr.mxu0 0.0
        %886 = vmatpush2.msra.mxu0 0.0
        %887 = vmatprep.subr.mxu0 0.0
        %888 = vmatpush2.msra.mxu0 0.0
        %889 = vmatprep.subr.mxu0 0.0
        %890 = vmatpush2.msra.mxu0 0.0
        %891 = vmatprep.subr.mxu0 0.0
        %892 = vmatpush2.msra.mxu0 0.0
        %893 = vmatprep.subr.mxu0 0.0
        %894 = vmatpush2.msra.mxu0 0.0
        %895 = vmatprep.subr.mxu0 0.0
        %896 = vmatpush2.msra.mxu0 0.0
        %897 = vmatprep.subr.mxu0 0.0
        %898 = vmatpush2.msra.mxu0 0.0
        %899 = vmatprep.subr.mxu0 0.0
        %900 = vmatpush2.msra.mxu0 0.0
        %901 = vmatprep.subr.mxu0 0.0
        %902 = vmatpush2.msra.mxu0 0.0
        %903 = vmatprep.subr.mxu0 0.0
        %904 = vmatpush2.msra.mxu0 0.0
        %905 = vmatprep.subr.mxu0 0.0
        %906 = vmatpush2.msra.mxu0 0.0
        %907 = vmatprep.mubr.f32.mxu0 0.0
        %908 = vmatmul.mubr.f32.gmra.mxu0 %v841
        %v909 = vpop.f32.mrf.mxu0
        %v910 = vadd.f32 0.0, %v909
        %v911 = vpop.f32.mrf.mxu0
        %v912 = vadd.f32 0.0, %v911
        %913 = vdwg.mxu0
        %v914 = vadd.f32 %v812, %v910
        %v915 = vadd.f32 %v813, %v912
        %s916 = scalar_lea.vmem %s1, 56
        %v917 = vld [vmem:[%s916] sm:$0xff]
        %918 = vrot.lane.b32.xlu0 %v281, 95
        %v919 = vpop.permute.xlu0 %918
        %920 = vrot.lane.b32.xlu0 %v282, 95
        %v921 = vpop.permute.xlu0 %920
        %922 = vrot.lane.b32.xlu0 %v283, 95
        %v923 = vpop.permute.xlu0 %922
        %vm924 = vcmask 777216
        %v925 = vsel %vm924, %v919, %v921
        %v926 = vsel %vm924, %v921, %v923
        %v930 = vsel %vm314, %v917, 0
        %932 = vmatprep.subr.mxu0 0.0
        %933 = vmatpush1.msra.mxu0 0.0
        %934 = vmatprep.subr.mxu0 0.0
        %935 = vmatpush1.msra.mxu0 0.0
        %936 = vmatprep.subr.mxu0 0.0
        %937 = vmatpush1.msra.mxu0 0.0
        %938 = vmatprep.subr.mxu0 0.0
        %939 = vmatpush1.msra.mxu0 0.0
        %940 = vmatprep.subr.mxu0 0.0
        %941 = vmatpush1.msra.mxu0 0.0
        %942 = vmatprep.subr.mxu0 0.0
        %943 = vmatpush1.msra.mxu0 0.0
        %944 = vmatprep.subr.mxu0 0.0
        %945 = vmatpush1.msra.mxu0 0.0
        %946 = vmatprep.subr.mxu0 0.0
        %947 = vmatpush1.msra.mxu0 0.0
        %948 = vmatprep.subr.mxu0 0.0
        %949 = vmatpush1.msra.mxu0 0.0
        %950 = vmatprep.subr.mxu0 0.0
        %951 = vmatpush1.msra.mxu0 0.0
        %952 = vmatprep.subr.mxu0 0.0
        %953 = vmatpush1.msra.mxu0 0.0
        %954 = vmatprep.subr.mxu0 0.0
        %955 = vmatpush1.msra.mxu0 0.0
        %956 = vmatprep.subr.mxu0 0.0
        %957 = vmatpush1.msra.mxu0 0.0
        %958 = vmatprep.subr.mxu0 0.0
        %959 = vmatpush1.msra.mxu0 0.0
        %960 = vmatprep.subr.mxu0 0.0
        %961 = vmatpush1.msra.mxu0 0.0
        %962 = vmatprep.subr.mxu0 %v926
        %963 = vmatpush1.msra.mxu0 %v925
        %964 = vmatprep.subr.mxu0 0.0
        %965 = vmatpush2.msra.mxu0 0.0
        %966 = vmatprep.subr.mxu0 0.0
        %967 = vmatpush2.msra.mxu0 0.0
        %968 = vmatprep.subr.mxu0 0.0
        %969 = vmatpush2.msra.mxu0 0.0
        %970 = vmatprep.subr.mxu0 0.0
        %971 = vmatpush2.msra.mxu0 0.0
        %972 = vmatprep.subr.mxu0 0.0
        %973 = vmatpush2.msra.mxu0 0.0
        %974 = vmatprep.subr.mxu0 0.0
        %975 = vmatpush2.msra.mxu0 0.0
        %976 = vmatprep.subr.mxu0 0.0
        %977 = vmatpush2.msra.mxu0 0.0
        %978 = vmatprep.subr.mxu0 0.0
        %979 = vmatpush2.msra.mxu0 0.0
        %980 = vmatprep.subr.mxu0 0.0
        %981 = vmatpush2.msra.mxu0 0.0
        %982 = vmatprep.subr.mxu0 0.0
        %983 = vmatpush2.msra.mxu0 0.0
        %984 = vmatprep.subr.mxu0 0.0
        %985 = vmatpush2.msra.mxu0 0.0
        %986 = vmatprep.subr.mxu0 0.0
        %987 = vmatpush2.msra.mxu0 0.0
        %988 = vmatprep.subr.mxu0 0.0
        %989 = vmatpush2.msra.mxu0 0.0
        %990 = vmatprep.subr.mxu0 0.0
        %991 = vmatpush2.msra.mxu0 0.0
        %992 = vmatprep.subr.mxu0 0.0
        %993 = vmatpush2.msra.mxu0 0.0
        %994 = vmatprep.subr.mxu0 0.0
        %995 = vmatpush2.msra.mxu0 0.0
        %996 = vmatprep.mubr.f32.mxu0 0.0
        %997 = vmatmul.mubr.f32.gmra.mxu0 %v930
        %v998 = vpop.f32.mrf.mxu0
        %v999 = vadd.f32 0.0, %v998
        %v1000 = vpop.f32.mrf.mxu0
        %v1001 = vadd.f32 0.0, %v1000
        %1002 = vdwg.mxu0
        %v1003 = vadd.f32 %v914, %v999
        %v1004 = vadd.f32 %v915, %v1001
        %v1005 = vsel %vm279, %v832, %v821
        %v1006 = vsel %vm280, %v833, %v822
        %s1007 = scalar_lea.vmem %s1, 64
        %v1008 = vld [vmem:[%s1007] sm:$0xff]
        %v1010 = vsel %vm314, %v1008, 0
        %1012 = vmatprep.subr.mxu0 0.0
        %1013 = vmatpush1.msra.mxu0 0.0
        %1014 = vmatprep.subr.mxu0 0.0
        %1015 = vmatpush1.msra.mxu0 0.0
        %1016 = vmatprep.subr.mxu0 0.0
        %1017 = vmatpush1.msra.mxu0 0.0
        %1018 = vmatprep.subr.mxu0 0.0
        %1019 = vmatpush1.msra.mxu0 0.0
        %1020 = vmatprep.subr.mxu0 0.0
        %1021 = vmatpush1.msra.mxu0 0.0
        %1022 = vmatprep.subr.mxu0 0.0
        %1023 = vmatpush1.msra.mxu0 0.0
        %1024 = vmatprep.subr.mxu0 0.0
        %1025 = vmatpush1.msra.mxu0 0.0
        %1026 = vmatprep.subr.mxu0 0.0
        %1027 = vmatpush1.msra.mxu0 0.0
        %1028 = vmatprep.subr.mxu0 0.0
        %1029 = vmatpush1.msra.mxu0 0.0
        %1030 = vmatprep.subr.mxu0 0.0
        %1031 = vmatpush1.msra.mxu0 0.0
        %1032 = vmatprep.subr.mxu0 0.0
        %1033 = vmatpush1.msra.mxu0 0.0
        %1034 = vmatprep.subr.mxu0 0.0
        %1035 = vmatpush1.msra.mxu0 0.0
        %1036 = vmatprep.subr.mxu0 0.0
        %1037 = vmatpush1.msra.mxu0 0.0
        %1038 = vmatprep.subr.mxu0 0.0
        %1039 = vmatpush1.msra.mxu0 0.0
        %1040 = vmatprep.subr.mxu0 0.0
        %1041 = vmatpush1.msra.mxu0 0.0
        %1042 = vmatprep.subr.mxu0 %v1006
        %1043 = vmatpush1.msra.mxu0 %v1005
        %1044 = vmatprep.subr.mxu0 0.0
        %1045 = vmatpush2.msra.mxu0 0.0
        %1046 = vmatprep.subr.mxu0 0.0
        %1047 = vmatpush2.msra.mxu0 0.0
        %1048 = vmatprep.subr.mxu0 0.0
        %1049 = vmatpush2.msra.mxu0 0.0
        %1050 = vmatprep.subr.mxu0 0.0
        %1051 = vmatpush2.msra.mxu0 0.0
        %1052 = vmatprep.subr.mxu0 0.0
        %1053 = vmatpush2.msra.mxu0 0.0
        %1054 = vmatprep.subr.mxu0 0.0
        %1055 = vmatpush2.msra.mxu0 0.0
        %1056 = vmatprep.subr.mxu0 0.0
        %1057 = vmatpush2.msra.mxu0 0.0
        %1058 = vmatprep.subr.mxu0 0.0
        %1059 = vmatpush2.msra.mxu0 0.0
        %1060 = vmatprep.subr.mxu0 0.0
        %1061 = vmatpush2.msra.mxu0 0.0
        %1062 = vmatprep.subr.mxu0 0.0
        %1063 = vmatpush2.msra.mxu0 0.0
        %1064 = vmatprep.subr.mxu0 0.0
        %1065 = vmatpush2.msra.mxu0 0.0
        %1066 = vmatprep.subr.mxu0 0.0
        %1067 = vmatpush2.msra.mxu0 0.0
        %1068 = vmatprep.subr.mxu0 0.0
        %1069 = vmatpush2.msra.mxu0 0.0
        %1070 = vmatprep.subr.mxu0 0.0
        %1071 = vmatpush2.msra.mxu0 0.0
        %1072 = vmatprep.subr.mxu0 0.0
        %1073 = vmatpush2.msra.mxu0 0.0
        %1074 = vmatprep.subr.mxu0 0.0
        %1075 = vmatpush2.msra.mxu0 0.0
        %1076 = vmatprep.mubr.f32.mxu0 0.0
        %1077 = vmatmul.mubr.f32.gmra.mxu0 %v1010
        %v1078 = vpop.f32.mrf.mxu0
        %v1079 = vadd.f32 0.0, %v1078
        %v1080 = vpop.f32.mrf.mxu0
        %v1081 = vadd.f32 0.0, %v1080
        %1082 = vdwg.mxu0
        %v1083 = vadd.f32 %v1003, %v1079
        %v1084 = vadd.f32 %v1004, %v1081
        %v1085 = vmax.f32 %v1083, 0.0
        %v1086 = vmax.f32 %v1084, 0.0
        %v1087 = vmul.f32 %v1085, 2.0
        %v1088 = vmul.f32 %v1086, 2.0
        %1090 = vrot.lane.b32.xlu0 %v1087, 113
        %v1091 = vpop.permute.xlu0 %1090
        %1093 = vst.msk [vmem:[#allocation2] sm:$0xff] %vm229, %v1091
        %1095 = vrot.lane.b32.xlu0 %v1087, 17
        %v1096 = vpop.permute.xlu0 %1095
        %1097 = vrot.lane.b32.xlu0 %v1088, 17
        %v1098 = vpop.permute.xlu0 %1097
        %v1099 = vsel %vm236, %v1096, %v1098
        %1103 = vst.msk [vmem:[#allocation2] sm:$0xff] %vm241, %v1096
        %1104 = vst [vmem:[#allocation2 + $0x8] sm:$0xff] %v1099
        %1105 = vst.msk [vmem:[#allocation2 + $0x10] sm:$0xff] %vm236, %v1098
        %1106 = vrot.lane.b32.xlu0 %v1088, 49
        %v1107 = vpop.permute.xlu0 %1106
        %1109 = vst.msk [vmem:[#allocation2 + $0x10] sm:$0xff] %vm248, %v1107
        %v1110 = vld [vmem:[#allocation2] sm:$0xff]
        %v1111 = vld [vmem:[#allocation2 + $0x8] sm:$0xff]
        %v1112 = vld [vmem:[#allocation2 + $0x10] sm:$0xff]
        %1116 = vrot.lane.b32.xlu0 %v1110, 126
        %v1117 = vpop.permute.xlu0 %1116
        %1118 = vrot.lane.b32.xlu0 %v1111, 126
        %v1119 = vpop.permute.xlu0 %1118
        %1120 = vrot.lane.b32.xlu0 %v1112, 126
        %v1121 = vpop.permute.xlu0 %1120
        %v1122 = vsel %vm293, %v1117, %v1119
        %v1123 = vsel %vm293, %v1119, %v1121
        %v1126 = vsel %vm277, %v1122, %v1110
        %v1127 = vsel %vm278, %v1123, %v1111
        %v1128 = vld [vmem:[%s2] sm:$0xff]
        %s1129 = scalar_lea.vmem %s2, 8
        %v1130 = vld [vmem:[%s1129] sm:$0xff]
        %1131 = vrot.lane.b32.xlu0 %v1110, 127
        %v1132 = vpop.permute.xlu0 %1131
        %1133 = vrot.lane.b32.xlu0 %v1111, 127
        %v1134 = vpop.permute.xlu0 %1133
        %1135 = vrot.lane.b32.xlu0 %v1112, 127
        %v1136 = vpop.permute.xlu0 %1135
        %v1137 = vsel %vm309, %v1132, %v1134
        %v1138 = vsel %vm309, %v1134, %v1136
        %v1142 = vsel %vm314, %v1130, 0
        %1144 = vmatprep.subr.mxu0 0.0
        %1145 = vmatpush1.msra.mxu0 0.0
        %1146 = vmatprep.subr.mxu0 0.0
        %1147 = vmatpush1.msra.mxu0 0.0
        %1148 = vmatprep.subr.mxu0 0.0
        %1149 = vmatpush1.msra.mxu0 0.0
        %1150 = vmatprep.subr.mxu0 0.0
        %1151 = vmatpush1.msra.mxu0 0.0
        %1152 = vmatprep.subr.mxu0 0.0
        %1153 = vmatpush1.msra.mxu0 0.0
        %1154 = vmatprep.subr.mxu0 0.0
        %1155 = vmatpush1.msra.mxu0 0.0
        %1156 = vmatprep.subr.mxu0 0.0
        %1157 = vmatpush1.msra.mxu0 0.0
        %1158 = vmatprep.subr.mxu0 0.0
        %1159 = vmatpush1.msra.mxu0 0.0
        %1160 = vmatprep.subr.mxu0 0.0
        %1161 = vmatpush1.msra.mxu0 0.0
        %1162 = vmatprep.subr.mxu0 0.0
        %1163 = vmatpush1.msra.mxu0 0.0
        %1164 = vmatprep.subr.mxu0 0.0
        %1165 = vmatpush1.msra.mxu0 0.0
        %1166 = vmatprep.subr.mxu0 0.0
        %1167 = vmatpush1.msra.mxu0 0.0
        %1168 = vmatprep.subr.mxu0 0.0
        %1169 = vmatpush1.msra.mxu0 0.0
        %1170 = vmatprep.subr.mxu0 0.0
        %1171 = vmatpush1.msra.mxu0 0.0
        %1172 = vmatprep.subr.mxu0 0.0
        %1173 = vmatpush1.msra.mxu0 0.0
        %1174 = vmatprep.subr.mxu0 %v1138
        %1175 = vmatpush1.msra.mxu0 %v1137
        %1176 = vmatprep.subr.mxu0 0.0
        %1177 = vmatpush2.msra.mxu0 0.0
        %1178 = vmatprep.subr.mxu0 0.0
        %1179 = vmatpush2.msra.mxu0 0.0
        %1180 = vmatprep.subr.mxu0 0.0
        %1181 = vmatpush2.msra.mxu0 0.0
        %1182 = vmatprep.subr.mxu0 0.0
        %1183 = vmatpush2.msra.mxu0 0.0
        %1184 = vmatprep.subr.mxu0 0.0
        %1185 = vmatpush2.msra.mxu0 0.0
        %1186 = vmatprep.subr.mxu0 0.0
        %1187 = vmatpush2.msra.mxu0 0.0
        %1188 = vmatprep.subr.mxu0 0.0
        %1189 = vmatpush2.msra.mxu0 0.0
        %1190 = vmatprep.subr.mxu0 0.0
        %1191 = vmatpush2.msra.mxu0 0.0
        %1192 = vmatprep.subr.mxu0 0.0
        %1193 = vmatpush2.msra.mxu0 0.0
        %1194 = vmatprep.subr.mxu0 0.0
        %1195 = vmatpush2.msra.mxu0 0.0
        %1196 = vmatprep.subr.mxu0 0.0
        %1197 = vmatpush2.msra.mxu0 0.0
        %1198 = vmatprep.subr.mxu0 0.0
        %1199 = vmatpush2.msra.mxu0 0.0
        %1200 = vmatprep.subr.mxu0 0.0
        %1201 = vmatpush2.msra.mxu0 0.0
        %1202 = vmatprep.subr.mxu0 0.0
        %1203 = vmatpush2.msra.mxu0 0.0
        %1204 = vmatprep.subr.mxu0 0.0
        %1205 = vmatpush2.msra.mxu0 0.0
        %1206 = vmatprep.subr.mxu0 0.0
        %1207 = vmatpush2.msra.mxu0 0.0
        %1208 = vmatprep.mubr.f32.mxu0 0.0
        %1209 = vmatmul.mubr.f32.gmra.mxu0 %v1142
        %v1210 = vpop.f32.mrf.mxu0
        %v1211 = vadd.f32 0.0, %v1210
        %v1212 = vpop.f32.mrf.mxu0
        %v1213 = vadd.f32 0.0, %v1212
        %1214 = vdwg.mxu0
        %v1216 = vsel %vm314, %v1128, 0
        %1218 = vmatprep.subr.mxu0 0.0
        %1219 = vmatpush1.msra.mxu0 0.0
        %1220 = vmatprep.subr.mxu0 0.0
        %1221 = vmatpush1.msra.mxu0 0.0
        %1222 = vmatprep.subr.mxu0 0.0
        %1223 = vmatpush1.msra.mxu0 0.0
        %1224 = vmatprep.subr.mxu0 0.0
        %1225 = vmatpush1.msra.mxu0 0.0
        %1226 = vmatprep.subr.mxu0 0.0
        %1227 = vmatpush1.msra.mxu0 0.0
        %1228 = vmatprep.subr.mxu0 0.0
        %1229 = vmatpush1.msra.mxu0 0.0
        %1230 = vmatprep.subr.mxu0 0.0
        %1231 = vmatpush1.msra.mxu0 0.0
        %1232 = vmatprep.subr.mxu0 0.0
        %1233 = vmatpush1.msra.mxu0 0.0
        %1234 = vmatprep.subr.mxu0 0.0
        %1235 = vmatpush1.msra.mxu0 0.0
        %1236 = vmatprep.subr.mxu0 0.0
        %1237 = vmatpush1.msra.mxu0 0.0
        %1238 = vmatprep.subr.mxu0 0.0
        %1239 = vmatpush1.msra.mxu0 0.0
        %1240 = vmatprep.subr.mxu0 0.0
        %1241 = vmatpush1.msra.mxu0 0.0
        %1242 = vmatprep.subr.mxu0 0.0
        %1243 = vmatpush1.msra.mxu0 0.0
        %1244 = vmatprep.subr.mxu0 0.0
        %1245 = vmatpush1.msra.mxu0 0.0
        %1246 = vmatprep.subr.mxu0 0.0
        %1247 = vmatpush1.msra.mxu0 0.0
        %1248 = vmatprep.subr.mxu0 %v1127
        %1249 = vmatpush1.msra.mxu0 %v1126
        %1250 = vmatprep.subr.mxu0 0.0
        %1251 = vmatpush2.msra.mxu0 0.0
        %1252 = vmatprep.subr.mxu0 0.0
        %1253 = vmatpush2.msra.mxu0 0.0
        %1254 = vmatprep.subr.mxu0 0.0
        %1255 = vmatpush2.msra.mxu0 0.0
        %1256 = vmatprep.subr.mxu0 0.0
        %1257 = vmatpush2.msra.mxu0 0.0
        %1258 = vmatprep.subr.mxu0 0.0
        %1259 = vmatpush2.msra.mxu0 0.0
        %1260 = vmatprep.subr.mxu0 0.0
        %1261 = vmatpush2.msra.mxu0 0.0
        %1262 = vmatprep.subr.mxu0 0.0
        %1263 = vmatpush2.msra.mxu0 0.0
        %1264 = vmatprep.subr.mxu0 0.0
        %1265 = vmatpush2.msra.mxu0 0.0
        %1266 = vmatprep.subr.mxu0 0.0
        %1267 = vmatpush2.msra.mxu0 0.0
        %1268 = vmatprep.subr.mxu0 0.0
        %1269 = vmatpush2.msra.mxu0 0.0
        %1270 = vmatprep.subr.mxu0 0.0
        %1271 = vmatpush2.msra.mxu0 0.0
        %1272 = vmatprep.subr.mxu0 0.0
        %1273 = vmatpush2.msra.mxu0 0.0
        %1274 = vmatprep.subr.mxu0 0.0
        %1275 = vmatpush2.msra.mxu0 0.0
        %1276 = vmatprep.subr.mxu0 0.0
        %1277 = vmatpush2.msra.mxu0 0.0
        %1278 = vmatprep.subr.mxu0 0.0
        %1279 = vmatpush2.msra.mxu0 0.0
        %1280 = vmatprep.subr.mxu0 0.0
        %1281 = vmatpush2.msra.mxu0 0.0
        %1282 = vmatprep.mubr.f32.mxu0 0.0
        %1283 = vmatmul.mubr.f32.gmra.mxu0 %v1216
        %v1284 = vpop.f32.mrf.mxu0
        %v1285 = vadd.f32 %v1211, %v1284
        %v1286 = vpop.f32.mrf.mxu0
        %v1287 = vadd.f32 %v1213, %v1286
        %1288 = vdwg.mxu0
        %v1289 = vsel %vm279, %v1110, %v1122
        %v1290 = vsel %vm280, %v1111, %v1123
        %s1291 = scalar_lea.vmem %s2, 16
        %v1292 = vld [vmem:[%s1291] sm:$0xff]
        %v1294 = vsel %vm314, %v1292, 0
        %1296 = vmatprep.subr.mxu0 0.0
        %1297 = vmatpush1.msra.mxu0 0.0
        %1298 = vmatprep.subr.mxu0 0.0
        %1299 = vmatpush1.msra.mxu0 0.0
        %1300 = vmatprep.subr.mxu0 0.0
        %1301 = vmatpush1.msra.mxu0 0.0
        %1302 = vmatprep.subr.mxu0 0.0
        %1303 = vmatpush1.msra.mxu0 0.0
        %1304 = vmatprep.subr.mxu0 0.0
        %1305 = vmatpush1.msra.mxu0 0.0
        %1306 = vmatprep.subr.mxu0 0.0
        %1307 = vmatpush1.msra.mxu0 0.0
        %1308 = vmatprep.subr.mxu0 0.0
        %1309 = vmatpush1.msra.mxu0 0.0
        %1310 = vmatprep.subr.mxu0 0.0
        %1311 = vmatpush1.msra.mxu0 0.0
        %1312 = vmatprep.subr.mxu0 0.0
        %1313 = vmatpush1.msra.mxu0 0.0
        %1314 = vmatprep.subr.mxu0 0.0
        %1315 = vmatpush1.msra.mxu0 0.0
        %1316 = vmatprep.subr.mxu0 0.0
        %1317 = vmatpush1.msra.mxu0 0.0
        %1318 = vmatprep.subr.mxu0 0.0
        %1319 = vmatpush1.msra.mxu0 0.0
        %1320 = vmatprep.subr.mxu0 0.0
        %1321 = vmatpush1.msra.mxu0 0.0
        %1322 = vmatprep.subr.mxu0 0.0
        %1323 = vmatpush1.msra.mxu0 0.0
        %1324 = vmatprep.subr.mxu0 0.0
        %1325 = vmatpush1.msra.mxu0 0.0
        %1326 = vmatprep.subr.mxu0 %v1290
        %1327 = vmatpush1.msra.mxu0 %v1289
        %1328 = vmatprep.subr.mxu0 0.0
        %1329 = vmatpush2.msra.mxu0 0.0
        %1330 = vmatprep.subr.mxu0 0.0
        %1331 = vmatpush2.msra.mxu0 0.0
        %1332 = vmatprep.subr.mxu0 0.0
        %1333 = vmatpush2.msra.mxu0 0.0
        %1334 = vmatprep.subr.mxu0 0.0
        %1335 = vmatpush2.msra.mxu0 0.0
        %1336 = vmatprep.subr.mxu0 0.0
        %1337 = vmatpush2.msra.mxu0 0.0
        %1338 = vmatprep.subr.mxu0 0.0
        %1339 = vmatpush2.msra.mxu0 0.0
        %1340 = vmatprep.subr.mxu0 0.0
        %1341 = vmatpush2.msra.mxu0 0.0
        %1342 = vmatprep.subr.mxu0 0.0
        %1343 = vmatpush2.msra.mxu0 0.0
        %1344 = vmatprep.subr.mxu0 0.0
        %1345 = vmatpush2.msra.mxu0 0.0
        %1346 = vmatprep.subr.mxu0 0.0
        %1347 = vmatpush2.msra.mxu0 0.0
        %1348 = vmatprep.subr.mxu0 0.0
        %1349 = vmatpush2.msra.mxu0 0.0
        %1350 = vmatprep.subr.mxu0 0.0
        %1351 = vmatpush2.msra.mxu0 0.0
        %1352 = vmatprep.subr.mxu0 0.0
        %1353 = vmatpush2.msra.mxu0 0.0
        %1354 = vmatprep.subr.mxu0 0.0
        %1355 = vmatpush2.msra.mxu0 0.0
        %1356 = vmatprep.subr.mxu0 0.0
        %1357 = vmatpush2.msra.mxu0 0.0
        %1358 = vmatprep.subr.mxu0 0.0
        %1359 = vmatpush2.msra.mxu0 0.0
        %1360 = vmatprep.mubr.f32.mxu0 0.0
        %1361 = vmatmul.mubr.f32.gmra.mxu0 %v1294
        %v1362 = vpop.f32.mrf.mxu0
        %v1363 = vadd.f32 0.0, %v1362
        %v1364 = vpop.f32.mrf.mxu0
        %v1365 = vadd.f32 0.0, %v1364
        %1366 = vdwg.mxu0
        %v1367 = vadd.f32 %v1285, %v1363
        %v1368 = vadd.f32 %v1287, %v1365
        %1369 = vrot.lane.b32.xlu0 %v1110, 110
        %v1370 = vpop.permute.xlu0 %1369
        %1371 = vrot.lane.b32.xlu0 %v1111, 110
        %v1372 = vpop.permute.xlu0 %1371
        %1373 = vrot.lane.b32.xlu0 %v1112, 110
        %v1374 = vpop.permute.xlu0 %1373
        %v1375 = vsel %vm549, %v1370, %v1372
        %v1376 = vsel %vm549, %v1372, %v1374
        %1379 = vrot.lane.b32.xlu0 %v1110, 112
        %v1380 = vpop.permute.xlu0 %1379
        %1381 = vrot.lane.b32.xlu0 %v1111, 112
        %v1382 = vpop.permute.xlu0 %1381
        %1383 = vrot.lane.b32.xlu0 %v1112, 112
        %v1384 = vpop.permute.xlu0 %1383
        %v1385 = vsel %vm560, %v1380, %v1382
        %v1386 = vsel %vm560, %v1382, %v1384
        %v1389 = vsel %vm277, %v1375, %v1385
        %v1390 = vsel %vm278, %v1376, %v1386
        %s1391 = scalar_lea.vmem %s2, 24
        %v1392 = vld [vmem:[%s1391] sm:$0xff]
        %v1394 = vsel %vm314, %v1392, 0
        %1396 = vmatprep.subr.mxu0 0.0
        %1397 = vmatpush1.msra.mxu0 0.0
        %1398 = vmatprep.subr.mxu0 0.0
        %1399 = vmatpush1.msra.mxu0 0.0
        %1400 = vmatprep.subr.mxu0 0.0
        %1401 = vmatpush1.msra.mxu0 0.0
        %1402 = vmatprep.subr.mxu0 0.0
        %1403 = vmatpush1.msra.mxu0 0.0
        %1404 = vmatprep.subr.mxu0 0.0
        %1405 = vmatpush1.msra.mxu0 0.0
        %1406 = vmatprep.subr.mxu0 0.0
        %1407 = vmatpush1.msra.mxu0 0.0
        %1408 = vmatprep.subr.mxu0 0.0
        %1409 = vmatpush1.msra.mxu0 0.0
        %1410 = vmatprep.subr.mxu0 0.0
        %1411 = vmatpush1.msra.mxu0 0.0
        %1412 = vmatprep.subr.mxu0 0.0
        %1413 = vmatpush1.msra.mxu0 0.0
        %1414 = vmatprep.subr.mxu0 0.0
        %1415 = vmatpush1.msra.mxu0 0.0
        %1416 = vmatprep.subr.mxu0 0.0
        %1417 = vmatpush1.msra.mxu0 0.0
        %1418 = vmatprep.subr.mxu0 0.0
        %1419 = vmatpush1.msra.mxu0 0.0
        %1420 = vmatprep.subr.mxu0 0.0
        %1421 = vmatpush1.msra.mxu0 0.0
        %1422 = vmatprep.subr.mxu0 0.0
        %1423 = vmatpush1.msra.mxu0 0.0
        %1424 = vmatprep.subr.mxu0 0.0
        %1425 = vmatpush1.msra.mxu0 0.0
        %1426 = vmatprep.subr.mxu0 %v1390
        %1427 = vmatpush1.msra.mxu0 %v1389
        %1428 = vmatprep.subr.mxu0 0.0
        %1429 = vmatpush2.msra.mxu0 0.0
        %1430 = vmatprep.subr.mxu0 0.0
        %1431 = vmatpush2.msra.mxu0 0.0
        %1432 = vmatprep.subr.mxu0 0.0
        %1433 = vmatpush2.msra.mxu0 0.0
        %1434 = vmatprep.subr.mxu0 0.0
        %1435 = vmatpush2.msra.mxu0 0.0
        %1436 = vmatprep.subr.mxu0 0.0
        %1437 = vmatpush2.msra.mxu0 0.0
        %1438 = vmatprep.subr.mxu0 0.0
        %1439 = vmatpush2.msra.mxu0 0.0
        %1440 = vmatprep.subr.mxu0 0.0
        %1441 = vmatpush2.msra.mxu0 0.0
        %1442 = vmatprep.subr.mxu0 0.0
        %1443 = vmatpush2.msra.mxu0 0.0
        %1444 = vmatprep.subr.mxu0 0.0
        %1445 = vmatpush2.msra.mxu0 0.0
        %1446 = vmatprep.subr.mxu0 0.0
        %1447 = vmatpush2.msra.mxu0 0.0
        %1448 = vmatprep.subr.mxu0 0.0
        %1449 = vmatpush2.msra.mxu0 0.0
        %1450 = vmatprep.subr.mxu0 0.0
        %1451 = vmatpush2.msra.mxu0 0.0
        %1452 = vmatprep.subr.mxu0 0.0
        %1453 = vmatpush2.msra.mxu0 0.0
        %1454 = vmatprep.subr.mxu0 0.0
        %1455 = vmatpush2.msra.mxu0 0.0
        %1456 = vmatprep.subr.mxu0 0.0
        %1457 = vmatpush2.msra.mxu0 0.0
        %1458 = vmatprep.subr.mxu0 0.0
        %1459 = vmatpush2.msra.mxu0 0.0
        %1460 = vmatprep.mubr.f32.mxu0 0.0
        %1461 = vmatmul.mubr.f32.gmra.mxu0 %v1394
        %v1462 = vpop.f32.mrf.mxu0
        %v1463 = vadd.f32 0.0, %v1462
        %v1464 = vpop.f32.mrf.mxu0
        %v1465 = vadd.f32 0.0, %v1464
        %1466 = vdwg.mxu0
        %v1467 = vadd.f32 %v1367, %v1463
        %v1468 = vadd.f32 %v1368, %v1465
        %s1469 = scalar_lea.vmem %s2, 32
        %v1470 = vld [vmem:[%s1469] sm:$0xff]
        %1471 = vrot.lane.b32.xlu0 %v1110, 111
        %v1472 = vpop.permute.xlu0 %1471
        %1473 = vrot.lane.b32.xlu0 %v1111, 111
        %v1474 = vpop.permute.xlu0 %1473
        %1475 = vrot.lane.b32.xlu0 %v1112, 111
        %v1476 = vpop.permute.xlu0 %1475
        %v1477 = vsel %vm653, %v1472, %v1474
        %v1478 = vsel %vm653, %v1474, %v1476
        %v1482 = vsel %vm314, %v1470, 0
        %1484 = vmatprep.subr.mxu0 0.0
        %1485 = vmatpush1.msra.mxu0 0.0
        %1486 = vmatprep.subr.mxu0 0.0
        %1487 = vmatpush1.msra.mxu0 0.0
        %1488 = vmatprep.subr.mxu0 0.0
        %1489 = vmatpush1.msra.mxu0 0.0
        %1490 = vmatprep.subr.mxu0 0.0
        %1491 = vmatpush1.msra.mxu0 0.0
        %1492 = vmatprep.subr.mxu0 0.0
        %1493 = vmatpush1.msra.mxu0 0.0
        %1494 = vmatprep.subr.mxu0 0.0
        %1495 = vmatpush1.msra.mxu0 0.0
        %1496 = vmatprep.subr.mxu0 0.0
        %1497 = vmatpush1.msra.mxu0 0.0
        %1498 = vmatprep.subr.mxu0 0.0
        %1499 = vmatpush1.msra.mxu0 0.0
        %1500 = vmatprep.subr.mxu0 0.0
        %1501 = vmatpush1.msra.mxu0 0.0
        %1502 = vmatprep.subr.mxu0 0.0
        %1503 = vmatpush1.msra.mxu0 0.0
        %1504 = vmatprep.subr.mxu0 0.0
        %1505 = vmatpush1.msra.mxu0 0.0
        %1506 = vmatprep.subr.mxu0 0.0
        %1507 = vmatpush1.msra.mxu0 0.0
        %1508 = vmatprep.subr.mxu0 0.0
        %1509 = vmatpush1.msra.mxu0 0.0
        %1510 = vmatprep.subr.mxu0 0.0
        %1511 = vmatpush1.msra.mxu0 0.0
        %1512 = vmatprep.subr.mxu0 0.0
        %1513 = vmatpush1.msra.mxu0 0.0
        %1514 = vmatprep.subr.mxu0 %v1478
        %1515 = vmatpush1.msra.mxu0 %v1477
        %1516 = vmatprep.subr.mxu0 0.0
        %1517 = vmatpush2.msra.mxu0 0.0
        %1518 = vmatprep.subr.mxu0 0.0
        %1519 = vmatpush2.msra.mxu0 0.0
        %1520 = vmatprep.subr.mxu0 0.0
        %1521 = vmatpush2.msra.mxu0 0.0
        %1522 = vmatprep.subr.mxu0 0.0
        %1523 = vmatpush2.msra.mxu0 0.0
        %1524 = vmatprep.subr.mxu0 0.0
        %1525 = vmatpush2.msra.mxu0 0.0
        %1526 = vmatprep.subr.mxu0 0.0
        %1527 = vmatpush2.msra.mxu0 0.0
        %1528 = vmatprep.subr.mxu0 0.0
        %1529 = vmatpush2.msra.mxu0 0.0
        %1530 = vmatprep.subr.mxu0 0.0
        %1531 = vmatpush2.msra.mxu0 0.0
        %1532 = vmatprep.subr.mxu0 0.0
        %1533 = vmatpush2.msra.mxu0 0.0
        %1534 = vmatprep.subr.mxu0 0.0
        %1535 = vmatpush2.msra.mxu0 0.0
        %1536 = vmatprep.subr.mxu0 0.0
        %1537 = vmatpush2.msra.mxu0 0.0
        %1538 = vmatprep.subr.mxu0 0.0
        %1539 = vmatpush2.msra.mxu0 0.0
        %1540 = vmatprep.subr.mxu0 0.0
        %1541 = vmatpush2.msra.mxu0 0.0
        %1542 = vmatprep.subr.mxu0 0.0
        %1543 = vmatpush2.msra.mxu0 0.0
        %1544 = vmatprep.subr.mxu0 0.0
        %1545 = vmatpush2.msra.mxu0 0.0
        %1546 = vmatprep.subr.mxu0 0.0
        %1547 = vmatpush2.msra.mxu0 0.0
        %1548 = vmatprep.mubr.f32.mxu0 0.0
        %1549 = vmatmul.mubr.f32.gmra.mxu0 %v1482
        %v1550 = vpop.f32.mrf.mxu0
        %v1551 = vadd.f32 0.0, %v1550
        %v1552 = vpop.f32.mrf.mxu0
        %v1553 = vadd.f32 0.0, %v1552
        %1554 = vdwg.mxu0
        %v1555 = vadd.f32 %v1467, %v1551
        %v1556 = vadd.f32 %v1468, %v1553
        %v1557 = vsel %vm279, %v1385, %v1375
        %v1558 = vsel %vm280, %v1386, %v1376
        %s1559 = scalar_lea.vmem %s2, 40
        %v1560 = vld [vmem:[%s1559] sm:$0xff]
        %v1562 = vsel %vm314, %v1560, 0
        %1564 = vmatprep.subr.mxu0 0.0
        %1565 = vmatpush1.msra.mxu0 0.0
        %1566 = vmatprep.subr.mxu0 0.0
        %1567 = vmatpush1.msra.mxu0 0.0
        %1568 = vmatprep.subr.mxu0 0.0
        %1569 = vmatpush1.msra.mxu0 0.0
        %1570 = vmatprep.subr.mxu0 0.0
        %1571 = vmatpush1.msra.mxu0 0.0
        %1572 = vmatprep.subr.mxu0 0.0
        %1573 = vmatpush1.msra.mxu0 0.0
        %1574 = vmatprep.subr.mxu0 0.0
        %1575 = vmatpush1.msra.mxu0 0.0
        %1576 = vmatprep.subr.mxu0 0.0
        %1577 = vmatpush1.msra.mxu0 0.0
        %1578 = vmatprep.subr.mxu0 0.0
        %1579 = vmatpush1.msra.mxu0 0.0
        %1580 = vmatprep.subr.mxu0 0.0
        %1581 = vmatpush1.msra.mxu0 0.0
        %1582 = vmatprep.subr.mxu0 0.0
        %1583 = vmatpush1.msra.mxu0 0.0
        %1584 = vmatprep.subr.mxu0 0.0
        %1585 = vmatpush1.msra.mxu0 0.0
        %1586 = vmatprep.subr.mxu0 0.0
        %1587 = vmatpush1.msra.mxu0 0.0
        %1588 = vmatprep.subr.mxu0 0.0
        %1589 = vmatpush1.msra.mxu0 0.0
        %1590 = vmatprep.subr.mxu0 0.0
        %1591 = vmatpush1.msra.mxu0 0.0
        %1592 = vmatprep.subr.mxu0 0.0
        %1593 = vmatpush1.msra.mxu0 0.0
        %1594 = vmatprep.subr.mxu0 %v1558
        %1595 = vmatpush1.msra.mxu0 %v1557
        %1596 = vmatprep.subr.mxu0 0.0
        %1597 = vmatpush2.msra.mxu0 0.0
        %1598 = vmatprep.subr.mxu0 0.0
        %1599 = vmatpush2.msra.mxu0 0.0
        %1600 = vmatprep.subr.mxu0 0.0
        %1601 = vmatpush2.msra.mxu0 0.0
        %1602 = vmatprep.subr.mxu0 0.0
        %1603 = vmatpush2.msra.mxu0 0.0
        %1604 = vmatprep.subr.mxu0 0.0
        %1605 = vmatpush2.msra.mxu0 0.0
        %1606 = vmatprep.subr.mxu0 0.0
        %1607 = vmatpush2.msra.mxu0 0.0
        %1608 = vmatprep.subr.mxu0 0.0
        %1609 = vmatpush2.msra.mxu0 0.0
        %1610 = vmatprep.subr.mxu0 0.0
        %1611 = vmatpush2.msra.mxu0 0.0
        %1612 = vmatprep.subr.mxu0 0.0
        %1613 = vmatpush2.msra.mxu0 0.0
        %1614 = vmatprep.subr.mxu0 0.0
        %1615 = vmatpush2.msra.mxu0 0.0
        %1616 = vmatprep.subr.mxu0 0.0
        %1617 = vmatpush2.msra.mxu0 0.0
        %1618 = vmatprep.subr.mxu0 0.0
        %1619 = vmatpush2.msra.mxu0 0.0
        %1620 = vmatprep.subr.mxu0 0.0
        %1621 = vmatpush2.msra.mxu0 0.0
        %1622 = vmatprep.subr.mxu0 0.0
        %1623 = vmatpush2.msra.mxu0 0.0
        %1624 = vmatprep.subr.mxu0 0.0
        %1625 = vmatpush2.msra.mxu0 0.0
        %1626 = vmatprep.subr.mxu0 0.0
        %1627 = vmatpush2.msra.mxu0 0.0
        %1628 = vmatprep.mubr.f32.mxu0 0.0
        %1629 = vmatmul.mubr.f32.gmra.mxu0 %v1562
        %v1630 = vpop.f32.mrf.mxu0
        %v1631 = vadd.f32 0.0, %v1630
        %v1632 = vpop.f32.mrf.mxu0
        %v1633 = vadd.f32 0.0, %v1632
        %1634 = vdwg.mxu0
        %v1635 = vadd.f32 %v1555, %v1631
        %v1636 = vadd.f32 %v1556, %v1633
        %1637 = vrot.lane.b32.xlu0 %v1110, 94
        %v1638 = vpop.permute.xlu0 %1637
        %1639 = vrot.lane.b32.xlu0 %v1111, 94
        %v1640 = vpop.permute.xlu0 %1639
        %1641 = vrot.lane.b32.xlu0 %v1112, 94
        %v1642 = vpop.permute.xlu0 %1641
        %v1643 = vsel %vm820, %v1638, %v1640
        %v1644 = vsel %vm820, %v1640, %v1642
        %1647 = vrot.lane.b32.xlu0 %v1110, 96
        %v1648 = vpop.permute.xlu0 %1647
        %1649 = vrot.lane.b32.xlu0 %v1111, 96
        %v1650 = vpop.permute.xlu0 %1649
        %1651 = vrot.lane.b32.xlu0 %v1112, 96
        %v1652 = vpop.permute.xlu0 %1651
        %v1653 = vsel %vm831, %v1648, %v1650
        %v1654 = vsel %vm831, %v1650, %v1652
        %v1657 = vsel %vm277, %v1643, %v1653
        %v1658 = vsel %vm278, %v1644, %v1654
        %s1659 = scalar_lea.vmem %s2, 48
        %v1660 = vld [vmem:[%s1659] sm:$0xff]
        %v1662 = vsel %vm314, %v1660, 0
        %1664 = vmatprep.subr.mxu0 0.0
        %1665 = vmatpush1.msra.mxu0 0.0
        %1666 = vmatprep.subr.mxu0 0.0
        %1667 = vmatpush1.msra.mxu0 0.0
        %1668 = vmatprep.subr.mxu0 0.0
        %1669 = vmatpush1.msra.mxu0 0.0
        %1670 = vmatprep.subr.mxu0 0.0
        %1671 = vmatpush1.msra.mxu0 0.0
        %1672 = vmatprep.subr.mxu0 0.0
        %1673 = vmatpush1.msra.mxu0 0.0
        %1674 = vmatprep.subr.mxu0 0.0
        %1675 = vmatpush1.msra.mxu0 0.0
        %1676 = vmatprep.subr.mxu0 0.0
        %1677 = vmatpush1.msra.mxu0 0.0
        %1678 = vmatprep.subr.mxu0 0.0
        %1679 = vmatpush1.msra.mxu0 0.0
        %1680 = vmatprep.subr.mxu0 0.0
        %1681 = vmatpush1.msra.mxu0 0.0
        %1682 = vmatprep.subr.mxu0 0.0
        %1683 = vmatpush1.msra.mxu0 0.0
        %1684 = vmatprep.subr.mxu0 0.0
        %1685 = vmatpush1.msra.mxu0 0.0
        %1686 = vmatprep.subr.mxu0 0.0
        %1687 = vmatpush1.msra.mxu0 0.0
        %1688 = vmatprep.subr.mxu0 0.0
        %1689 = vmatpush1.msra.mxu0 0.0
        %1690 = vmatprep.subr.mxu0 0.0
        %1691 = vmatpush1.msra.mxu0 0.0
        %1692 = vmatprep.subr.mxu0 0.0
        %1693 = vmatpush1.msra.mxu0 0.0
        %1694 = vmatprep.subr.mxu0 %v1658
        %1695 = vmatpush1.msra.mxu0 %v1657
        %1696 = vmatprep.subr.mxu0 0.0
        %1697 = vmatpush2.msra.mxu0 0.0
        %1698 = vmatprep.subr.mxu0 0.0
        %1699 = vmatpush2.msra.mxu0 0.0
        %1700 = vmatprep.subr.mxu0 0.0
        %1701 = vmatpush2.msra.mxu0 0.0
        %1702 = vmatprep.subr.mxu0 0.0
        %1703 = vmatpush2.msra.mxu0 0.0
        %1704 = vmatprep.subr.mxu0 0.0
        %1705 = vmatpush2.msra.mxu0 0.0
        %1706 = vmatprep.subr.mxu0 0.0
        %1707 = vmatpush2.msra.mxu0 0.0
        %1708 = vmatprep.subr.mxu0 0.0
        %1709 = vmatpush2.msra.mxu0 0.0
        %1710 = vmatprep.subr.mxu0 0.0
        %1711 = vmatpush2.msra.mxu0 0.0
        %1712 = vmatprep.subr.mxu0 0.0
        %1713 = vmatpush2.msra.mxu0 0.0
        %1714 = vmatprep.subr.mxu0 0.0
        %1715 = vmatpush2.msra.mxu0 0.0
        %1716 = vmatprep.subr.mxu0 0.0
        %1717 = vmatpush2.msra.mxu0 0.0
        %1718 = vmatprep.subr.mxu0 0.0
        %1719 = vmatpush2.msra.mxu0 0.0
        %1720 = vmatprep.subr.mxu0 0.0
        %1721 = vmatpush2.msra.mxu0 0.0
        %1722 = vmatprep.subr.mxu0 0.0
        %1723 = vmatpush2.msra.mxu0 0.0
        %1724 = vmatprep.subr.mxu0 0.0
        %1725 = vmatpush2.msra.mxu0 0.0
        %1726 = vmatprep.subr.mxu0 0.0
        %1727 = vmatpush2.msra.mxu0 0.0
        %1728 = vmatprep.mubr.f32.mxu0 0.0
        %1729 = vmatmul.mubr.f32.gmra.mxu0 %v1662
        %v1730 = vpop.f32.mrf.mxu0
        %v1731 = vadd.f32 0.0, %v1730
        %v1732 = vpop.f32.mrf.mxu0
        %v1733 = vadd.f32 0.0, %v1732
        %1734 = vdwg.mxu0
        %v1735 = vadd.f32 %v1635, %v1731
        %v1736 = vadd.f32 %v1636, %v1733
        %s1737 = scalar_lea.vmem %s2, 56
        %v1738 = vld [vmem:[%s1737] sm:$0xff]
        %1739 = vrot.lane.b32.xlu0 %v1110, 95
        %v1740 = vpop.permute.xlu0 %1739
        %1741 = vrot.lane.b32.xlu0 %v1111, 95
        %v1742 = vpop.permute.xlu0 %1741
        %1743 = vrot.lane.b32.xlu0 %v1112, 95
        %v1744 = vpop.permute.xlu0 %1743
        %v1745 = vsel %vm924, %v1740, %v1742
        %v1746 = vsel %vm924, %v1742, %v1744
        %v1750 = vsel %vm314, %v1738, 0
        %1752 = vmatprep.subr.mxu0 0.0
        %1753 = vmatpush1.msra.mxu0 0.0
        %1754 = vmatprep.subr.mxu0 0.0
        %1755 = vmatpush1.msra.mxu0 0.0
        %1756 = vmatprep.subr.mxu0 0.0
        %1757 = vmatpush1.msra.mxu0 0.0
        %1758 = vmatprep.subr.mxu0 0.0
        %1759 = vmatpush1.msra.mxu0 0.0
        %1760 = vmatprep.subr.mxu0 0.0
        %1761 = vmatpush1.msra.mxu0 0.0
        %1762 = vmatprep.subr.mxu0 0.0
        %1763 = vmatpush1.msra.mxu0 0.0
        %1764 = vmatprep.subr.mxu0 0.0
        %1765 = vmatpush1.msra.mxu0 0.0
        %1766 = vmatprep.subr.mxu0 0.0
        %1767 = vmatpush1.msra.mxu0 0.0
        %1768 = vmatprep.subr.mxu0 0.0
        %1769 = vmatpush1.msra.mxu0 0.0
        %1770 = vmatprep.subr.mxu0 0.0
        %1771 = vmatpush1.msra.mxu0 0.0
        %1772 = vmatprep.subr.mxu0 0.0
        %1773 = vmatpush1.msra.mxu0 0.0
        %1774 = vmatprep.subr.mxu0 0.0
        %1775 = vmatpush1.msra.mxu0 0.0
        %1776 = vmatprep.subr.mxu0 0.0
        %1777 = vmatpush1.msra.mxu0 0.0
        %1778 = vmatprep.subr.mxu0 0.0
        %1779 = vmatpush1.msra.mxu0 0.0
        %1780 = vmatprep.subr.mxu0 0.0
        %1781 = vmatpush1.msra.mxu0 0.0
        %1782 = vmatprep.subr.mxu0 %v1746
        %1783 = vmatpush1.msra.mxu0 %v1745
        %1784 = vmatprep.subr.mxu0 0.0
        %1785 = vmatpush2.msra.mxu0 0.0
        %1786 = vmatprep.subr.mxu0 0.0
        %1787 = vmatpush2.msra.mxu0 0.0
        %1788 = vmatprep.subr.mxu0 0.0
        %1789 = vmatpush2.msra.mxu0 0.0
        %1790 = vmatprep.subr.mxu0 0.0
        %1791 = vmatpush2.msra.mxu0 0.0
        %1792 = vmatprep.subr.mxu0 0.0
        %1793 = vmatpush2.msra.mxu0 0.0
        %1794 = vmatprep.subr.mxu0 0.0
        %1795 = vmatpush2.msra.mxu0 0.0
        %1796 = vmatprep.subr.mxu0 0.0
        %1797 = vmatpush2.msra.mxu0 0.0
        %1798 = vmatprep.subr.mxu0 0.0
        %1799 = vmatpush2.msra.mxu0 0.0
        %1800 = vmatprep.subr.mxu0 0.0
        %1801 = vmatpush2.msra.mxu0 0.0
        %1802 = vmatprep.subr.mxu0 0.0
        %1803 = vmatpush2.msra.mxu0 0.0
        %1804 = vmatprep.subr.mxu0 0.0
        %1805 = vmatpush2.msra.mxu0 0.0
        %1806 = vmatprep.subr.mxu0 0.0
        %1807 = vmatpush2.msra.mxu0 0.0
        %1808 = vmatprep.subr.mxu0 0.0
        %1809 = vmatpush2.msra.mxu0 0.0
        %1810 = vmatprep.subr.mxu0 0.0
        %1811 = vmatpush2.msra.mxu0 0.0
        %1812 = vmatprep.subr.mxu0 0.0
        %1813 = vmatpush2.msra.mxu0 0.0
        %1814 = vmatprep.subr.mxu0 0.0
        %1815 = vmatpush2.msra.mxu0 0.0
        %1816 = vmatprep.mubr.f32.mxu0 0.0
        %1817 = vmatmul.mubr.f32.gmra.mxu0 %v1750
        %v1818 = vpop.f32.mrf.mxu0
        %v1819 = vadd.f32 0.0, %v1818
        %v1820 = vpop.f32.mrf.mxu0
        %v1821 = vadd.f32 0.0, %v1820
        %1822 = vdwg.mxu0
        %v1823 = vadd.f32 %v1735, %v1819
        %v1824 = vadd.f32 %v1736, %v1821
        %v1825 = vsel %vm279, %v1653, %v1643
        %v1826 = vsel %vm280, %v1654, %v1644
        %s1827 = scalar_lea.vmem %s2, 64
        %v1828 = vld [vmem:[%s1827] sm:$0xff]
        %v1830 = vsel %vm314, %v1828, 0
        %1832 = vmatprep.subr.mxu0 0.0
        %1833 = vmatpush1.msra.mxu0 0.0
        %1834 = vmatprep.subr.mxu0 0.0
        %1835 = vmatpush1.msra.mxu0 0.0
        %1836 = vmatprep.subr.mxu0 0.0
        %1837 = vmatpush1.msra.mxu0 0.0
        %1838 = vmatprep.subr.mxu0 0.0
        %1839 = vmatpush1.msra.mxu0 0.0
        %1840 = vmatprep.subr.mxu0 0.0
        %1841 = vmatpush1.msra.mxu0 0.0
        %1842 = vmatprep.subr.mxu0 0.0
        %1843 = vmatpush1.msra.mxu0 0.0
        %1844 = vmatprep.subr.mxu0 0.0
        %1845 = vmatpush1.msra.mxu0 0.0
        %1846 = vmatprep.subr.mxu0 0.0
        %1847 = vmatpush1.msra.mxu0 0.0
        %1848 = vmatprep.subr.mxu0 0.0
        %1849 = vmatpush1.msra.mxu0 0.0
        %1850 = vmatprep.subr.mxu0 0.0
        %1851 = vmatpush1.msra.mxu0 0.0
        %1852 = vmatprep.subr.mxu0 0.0
        %1853 = vmatpush1.msra.mxu0 0.0
        %1854 = vmatprep.subr.mxu0 0.0
        %1855 = vmatpush1.msra.mxu0 0.0
        %1856 = vmatprep.subr.mxu0 0.0
        %1857 = vmatpush1.msra.mxu0 0.0
        %1858 = vmatprep.subr.mxu0 0.0
        %1859 = vmatpush1.msra.mxu0 0.0
        %1860 = vmatprep.subr.mxu0 0.0
        %1861 = vmatpush1.msra.mxu0 0.0
        %1862 = vmatprep.subr.mxu0 %v1826
        %1863 = vmatpush1.msra.mxu0 %v1825
        %1864 = vmatprep.subr.mxu0 0.0
        %1865 = vmatpush2.msra.mxu0 0.0
        %1866 = vmatprep.subr.mxu0 0.0
        %1867 = vmatpush2.msra.mxu0 0.0
        %1868 = vmatprep.subr.mxu0 0.0
        %1869 = vmatpush2.msra.mxu0 0.0
        %1870 = vmatprep.subr.mxu0 0.0
        %1871 = vmatpush2.msra.mxu0 0.0
        %1872 = vmatprep.subr.mxu0 0.0
        %1873 = vmatpush2.msra.mxu0 0.0
        %1874 = vmatprep.subr.mxu0 0.0
        %1875 = vmatpush2.msra.mxu0 0.0
        %1876 = vmatprep.subr.mxu0 0.0
        %1877 = vmatpush2.msra.mxu0 0.0
        %1878 = vmatprep.subr.mxu0 0.0
        %1879 = vmatpush2.msra.mxu0 0.0
        %1880 = vmatprep.subr.mxu0 0.0
        %1881 = vmatpush2.msra.mxu0 0.0
        %1882 = vmatprep.subr.mxu0 0.0
        %1883 = vmatpush2.msra.mxu0 0.0
        %1884 = vmatprep.subr.mxu0 0.0
        %1885 = vmatpush2.msra.mxu0 0.0
        %1886 = vmatprep.subr.mxu0 0.0
        %1887 = vmatpush2.msra.mxu0 0.0
        %1888 = vmatprep.subr.mxu0 0.0
        %1889 = vmatpush2.msra.mxu0 0.0
        %1890 = vmatprep.subr.mxu0 0.0
        %1891 = vmatpush2.msra.mxu0 0.0
        %1892 = vmatprep.subr.mxu0 0.0
        %1893 = vmatpush2.msra.mxu0 0.0
        %1894 = vmatprep.subr.mxu0 0.0
        %1895 = vmatpush2.msra.mxu0 0.0
        %1896 = vmatprep.mubr.f32.mxu0 0.0
        %1897 = vmatmul.mubr.f32.gmra.mxu0 %v1830
        %v1898 = vpop.f32.mrf.mxu0
        %v1899 = vadd.f32 0.0, %v1898
        %v1900 = vpop.f32.mrf.mxu0
        %v1901 = vadd.f32 0.0, %v1900
        %1902 = vdwg.mxu0
        %v1903 = vadd.f32 %v1823, %v1899
        %v1904 = vadd.f32 %v1824, %v1901
        %1906 = vrot.lane.b32.xlu0 %v1903, 113
        %v1907 = vpop.permute.xlu0 %1906
        %1909 = vst.msk [vmem:[#allocation2] sm:$0xff] %vm229, %v1907
        %1911 = vrot.lane.b32.xlu0 %v1903, 17
        %v1912 = vpop.permute.xlu0 %1911
        %1913 = vrot.lane.b32.xlu0 %v1904, 17
        %v1914 = vpop.permute.xlu0 %1913
        %v1915 = vsel %vm236, %v1912, %v1914
        %1919 = vst.msk [vmem:[#allocation2] sm:$0xff] %vm241, %v1912
        %1920 = vst [vmem:[#allocation2 + $0x8] sm:$0xff] %v1915
        %1921 = vst.msk [vmem:[#allocation2 + $0x10] sm:$0xff] %vm236, %v1914
        %1922 = vrot.lane.b32.xlu0 %v1904, 49
        %v1923 = vpop.permute.xlu0 %1922
        %1925 = vst.msk [vmem:[#allocation2 + $0x10] sm:$0xff] %vm248, %v1923
        %v1926 = vld [vmem:[#allocation2] sm:$0xff]
        %v1927 = vld [vmem:[#allocation2 + $0x8] sm:$0xff]
        %v1928 = vld [vmem:[#allocation2 + $0x10] sm:$0xff]
        %1932 = vrot.lane.b32.xlu0 %v1926, 126
        %v1933 = vpop.permute.xlu0 %1932
        %1934 = vrot.lane.b32.xlu0 %v1927, 126
        %v1935 = vpop.permute.xlu0 %1934
        %1936 = vrot.lane.b32.xlu0 %v1928, 126
        %v1937 = vpop.permute.xlu0 %1936
        %v1938 = vsel %vm293, %v1933, %v1935
        %v1939 = vsel %vm293, %v1935, %v1937
        %v1942 = vsel %vm277, %v1938, %v1926
        %v1943 = vsel %vm278, %v1939, %v1927
        %v1944 = vld [vmem:[%s3] sm:$0xff]
        %v1945 = vld [vmem:[%s3 + $0x8] sm:$0xff]
        %v1946 = vld [vmem:[%s3 + $0x10] sm:$0xff]
        %v1947 = vld [vmem:[%s3 + $0x18] sm:$0xff]
        %s1948 = scalar_lea.vmem %s3, 32
        %v1949 = vld [vmem:[%s1948] sm:$0xff]
        %v1950 = vld [vmem:[%s1948 + $0x8] sm:$0xff]
        %v1951 = vld [vmem:[%s1948 + $0x10] sm:$0xff]
        %v1952 = vld [vmem:[%s1948 + $0x18] sm:$0xff]
        %1953 = vrot.lane.b32.xlu0 %v1926, 127
        %v1954 = vpop.permute.xlu0 %1953
        %1955 = vrot.lane.b32.xlu0 %v1927, 127
        %v1956 = vpop.permute.xlu0 %1955
        %1957 = vrot.lane.b32.xlu0 %v1928, 127
        %v1958 = vpop.permute.xlu0 %1957
        %v1959 = vsel %vm309, %v1954, %v1956
        %v1960 = vsel %vm309, %v1956, %v1958
        %v1964 = vsel %vm314, %v1949, 0
        %v1967 = vsel %vm314, %v1950, 0
        %v1970 = vsel %vm314, %v1951, 0
        %v1973 = vsel %vm314, %v1952, 0
        %1975 = vmatprep.subr.mxu0 0.0
        %1976 = vmatpush1.msra.mxu0 0.0
        %1977 = vmatprep.subr.mxu0 0.0
        %1978 = vmatpush1.msra.mxu0 0.0
        %1979 = vmatprep.subr.mxu0 0.0
        %1980 = vmatpush1.msra.mxu0 0.0
        %1981 = vmatprep.subr.mxu0 0.0
        %1982 = vmatpush1.msra.mxu0 0.0
        %1983 = vmatprep.subr.mxu0 0.0
        %1984 = vmatpush1.msra.mxu0 0.0
        %1985 = vmatprep.subr.mxu0 0.0
        %1986 = vmatpush1.msra.mxu0 0.0
        %1987 = vmatprep.subr.mxu0 0.0
        %1988 = vmatpush1.msra.mxu0 0.0
        %1989 = vmatprep.subr.mxu0 0.0
        %1990 = vmatpush1.msra.mxu0 0.0
        %1991 = vmatprep.subr.mxu0 0.0
        %1992 = vmatpush1.msra.mxu0 0.0
        %1993 = vmatprep.subr.mxu0 0.0
        %1994 = vmatpush1.msra.mxu0 0.0
        %1995 = vmatprep.subr.mxu0 0.0
        %1996 = vmatpush1.msra.mxu0 0.0
        %1997 = vmatprep.subr.mxu0 0.0
        %1998 = vmatpush1.msra.mxu0 0.0
        %1999 = vmatprep.subr.mxu0 0.0
        %2000 = vmatpush1.msra.mxu0 0.0
        %2001 = vmatprep.subr.mxu0 0.0
        %2002 = vmatpush1.msra.mxu0 0.0
        %2003 = vmatprep.subr.mxu0 0.0
        %2004 = vmatpush1.msra.mxu0 0.0
        %2005 = vmatprep.subr.mxu0 %v1960
        %2006 = vmatpush1.msra.mxu0 %v1959
        %2007 = vmatprep.subr.mxu0 0.0
        %2008 = vmatpush2.msra.mxu0 0.0
        %2009 = vmatprep.subr.mxu0 0.0
        %2010 = vmatpush2.msra.mxu0 0.0
        %2011 = vmatprep.subr.mxu0 0.0
        %2012 = vmatpush2.msra.mxu0 0.0
        %2013 = vmatprep.subr.mxu0 0.0
        %2014 = vmatpush2.msra.mxu0 0.0
        %2015 = vmatprep.subr.mxu0 0.0
        %2016 = vmatpush2.msra.mxu0 0.0
        %2017 = vmatprep.subr.mxu0 0.0
        %2018 = vmatpush2.msra.mxu0 0.0
        %2019 = vmatprep.subr.mxu0 0.0
        %2020 = vmatpush2.msra.mxu0 0.0
        %2021 = vmatprep.subr.mxu0 0.0
        %2022 = vmatpush2.msra.mxu0 0.0
        %2023 = vmatprep.subr.mxu0 0.0
        %2024 = vmatpush2.msra.mxu0 0.0
        %2025 = vmatprep.subr.mxu0 0.0
        %2026 = vmatpush2.msra.mxu0 0.0
        %2027 = vmatprep.subr.mxu0 0.0
        %2028 = vmatpush2.msra.mxu0 0.0
        %2029 = vmatprep.subr.mxu0 0.0
        %2030 = vmatpush2.msra.mxu0 0.0
        %2031 = vmatprep.subr.mxu0 0.0
        %2032 = vmatpush2.msra.mxu0 0.0
        %2033 = vmatprep.subr.mxu0 0.0
        %2034 = vmatpush2.msra.mxu0 0.0
        %2035 = vmatprep.subr.mxu0 0.0
        %2036 = vmatpush2.msra.mxu0 0.0
        %2037 = vmatprep.subr.mxu0 0.0
        %2038 = vmatpush2.msra.mxu0 0.0
        %2039 = vmatprep.mubr.f32.mxu0 0.0
        %2040 = vmatmul.mubr.f32.gmra.mxu0 %v1964
        %v2041 = vpop.f32.mrf.mxu0
        %v2042 = vadd.f32 0.0, %v2041
        %v2043 = vpop.f32.mrf.mxu0
        %v2044 = vadd.f32 0.0, %v2043
        %2045 = vmatprep.mubr.f32.mxu0 0.0
        %2046 = vmatmul.mubr.f32.gmra.mxu0 %v1967
        %v2047 = vpop.f32.mrf.mxu0
        %v2048 = vadd.f32 0.0, %v2047
        %v2049 = vpop.f32.mrf.mxu0
        %v2050 = vadd.f32 0.0, %v2049
        %2051 = vmatprep.mubr.f32.mxu0 0.0
        %2052 = vmatmul.mubr.f32.gmra.mxu0 %v1970
        %v2053 = vpop.f32.mrf.mxu0
        %v2054 = vadd.f32 0.0, %v2053
        %v2055 = vpop.f32.mrf.mxu0
        %v2056 = vadd.f32 0.0, %v2055
        %2057 = vmatprep.mubr.f32.mxu0 0.0
        %2058 = vmatmul.mubr.f32.gmra.mxu0 %v1973
        %v2059 = vpop.f32.mrf.mxu0
        %v2060 = vadd.f32 0.0, %v2059
        %v2061 = vpop.f32.mrf.mxu0
        %v2062 = vadd.f32 0.0, %v2061
        %2063 = vdwg.mxu0
        %v2065 = vsel %vm314, %v1944, 0
        %v2068 = vsel %vm314, %v1945, 0
        %v2071 = vsel %vm314, %v1946, 0
        %v2074 = vsel %vm314, %v1947, 0
        %2076 = vmatprep.subr.mxu0 0.0
        %2077 = vmatpush1.msra.mxu0 0.0
        %2078 = vmatprep.subr.mxu0 0.0
        %2079 = vmatpush1.msra.mxu0 0.0
        %2080 = vmatprep.subr.mxu0 0.0
        %2081 = vmatpush1.msra.mxu0 0.0
        %2082 = vmatprep.subr.mxu0 0.0
        %2083 = vmatpush1.msra.mxu0 0.0
        %2084 = vmatprep.subr.mxu0 0.0
        %2085 = vmatpush1.msra.mxu0 0.0
        %2086 = vmatprep.subr.mxu0 0.0
        %2087 = vmatpush1.msra.mxu0 0.0
        %2088 = vmatprep.subr.mxu0 0.0
        %2089 = vmatpush1.msra.mxu0 0.0
        %2090 = vmatprep.subr.mxu0 0.0
        %2091 = vmatpush1.msra.mxu0 0.0
        %2092 = vmatprep.subr.mxu0 0.0
        %2093 = vmatpush1.msra.mxu0 0.0
        %2094 = vmatprep.subr.mxu0 0.0
        %2095 = vmatpush1.msra.mxu0 0.0
        %2096 = vmatprep.subr.mxu0 0.0
        %2097 = vmatpush1.msra.mxu0 0.0
        %2098 = vmatprep.subr.mxu0 0.0
        %2099 = vmatpush1.msra.mxu0 0.0
        %2100 = vmatprep.subr.mxu0 0.0
        %2101 = vmatpush1.msra.mxu0 0.0
        %2102 = vmatprep.subr.mxu0 0.0
        %2103 = vmatpush1.msra.mxu0 0.0
        %2104 = vmatprep.subr.mxu0 0.0
        %2105 = vmatpush1.msra.mxu0 0.0
        %2106 = vmatprep.subr.mxu0 %v1943
        %2107 = vmatpush1.msra.mxu0 %v1942
        %2108 = vmatprep.subr.mxu0 0.0
        %2109 = vmatpush2.msra.mxu0 0.0
        %2110 = vmatprep.subr.mxu0 0.0
        %2111 = vmatpush2.msra.mxu0 0.0
        %2112 = vmatprep.subr.mxu0 0.0
        %2113 = vmatpush2.msra.mxu0 0.0
        %2114 = vmatprep.subr.mxu0 0.0
        %2115 = vmatpush2.msra.mxu0 0.0
        %2116 = vmatprep.subr.mxu0 0.0
        %2117 = vmatpush2.msra.mxu0 0.0
        %2118 = vmatprep.subr.mxu0 0.0
        %2119 = vmatpush2.msra.mxu0 0.0
        %2120 = vmatprep.subr.mxu0 0.0
        %2121 = vmatpush2.msra.mxu0 0.0
        %2122 = vmatprep.subr.mxu0 0.0
        %2123 = vmatpush2.msra.mxu0 0.0
        %2124 = vmatprep.subr.mxu0 0.0
        %2125 = vmatpush2.msra.mxu0 0.0
        %2126 = vmatprep.subr.mxu0 0.0
        %2127 = vmatpush2.msra.mxu0 0.0
        %2128 = vmatprep.subr.mxu0 0.0
        %2129 = vmatpush2.msra.mxu0 0.0
        %2130 = vmatprep.subr.mxu0 0.0
        %2131 = vmatpush2.msra.mxu0 0.0
        %2132 = vmatprep.subr.mxu0 0.0
        %2133 = vmatpush2.msra.mxu0 0.0
        %2134 = vmatprep.subr.mxu0 0.0
        %2135 = vmatpush2.msra.mxu0 0.0
        %2136 = vmatprep.subr.mxu0 0.0
        %2137 = vmatpush2.msra.mxu0 0.0
        %2138 = vmatprep.subr.mxu0 0.0
        %2139 = vmatpush2.msra.mxu0 0.0
        %2140 = vmatprep.mubr.f32.mxu0 0.0
        %2141 = vmatmul.mubr.f32.gmra.mxu0 %v2065
        %v2142 = vpop.f32.mrf.mxu0
        %v2143 = vadd.f32 %v2042, %v2142
        %v2144 = vpop.f32.mrf.mxu0
        %v2145 = vadd.f32 %v2044, %v2144
        %2146 = vmatprep.mubr.f32.mxu0 0.0
        %2147 = vmatmul.mubr.f32.gmra.mxu0 %v2068
        %v2148 = vpop.f32.mrf.mxu0
        %v2149 = vadd.f32 %v2048, %v2148
        %v2150 = vpop.f32.mrf.mxu0
        %v2151 = vadd.f32 %v2050, %v2150
        %2152 = vmatprep.mubr.f32.mxu0 0.0
        %2153 = vmatmul.mubr.f32.gmra.mxu0 %v2071
        %v2154 = vpop.f32.mrf.mxu0
        %v2155 = vadd.f32 %v2054, %v2154
        %v2156 = vpop.f32.mrf.mxu0
        %v2157 = vadd.f32 %v2056, %v2156
        %2158 = vmatprep.mubr.f32.mxu0 0.0
        %2159 = vmatmul.mubr.f32.gmra.mxu0 %v2074
        %v2160 = vpop.f32.mrf.mxu0
        %v2161 = vadd.f32 %v2060, %v2160
        %v2162 = vpop.f32.mrf.mxu0
        %v2163 = vadd.f32 %v2062, %v2162
        %2164 = vdwg.mxu0
        %v2165 = vsel %vm279, %v1926, %v1938
        %v2166 = vsel %vm280, %v1927, %v1939
        %s2167 = scalar_lea.vmem %s3, 64
        %v2168 = vld [vmem:[%s2167] sm:$0xff]
        %v2169 = vld [vmem:[%s2167 + $0x8] sm:$0xff]
        %v2170 = vld [vmem:[%s2167 + $0x10] sm:$0xff]
        %v2171 = vld [vmem:[%s2167 + $0x18] sm:$0xff]
        %v2173 = vsel %vm314, %v2168, 0
        %v2176 = vsel %vm314, %v2169, 0
        %v2179 = vsel %vm314, %v2170, 0
        %v2182 = vsel %vm314, %v2171, 0
        %2184 = vmatprep.subr.mxu0 0.0
        %2185 = vmatpush1.msra.mxu0 0.0
        %2186 = vmatprep.subr.mxu0 0.0
        %2187 = vmatpush1.msra.mxu0 0.0
        %2188 = vmatprep.subr.mxu0 0.0
        %2189 = vmatpush1.msra.mxu0 0.0
        %2190 = vmatprep.subr.mxu0 0.0
        %2191 = vmatpush1.msra.mxu0 0.0
        %2192 = vmatprep.subr.mxu0 0.0
        %2193 = vmatpush1.msra.mxu0 0.0
        %2194 = vmatprep.subr.mxu0 0.0
        %2195 = vmatpush1.msra.mxu0 0.0
        %2196 = vmatprep.subr.mxu0 0.0
        %2197 = vmatpush1.msra.mxu0 0.0
        %2198 = vmatprep.subr.mxu0 0.0
        %2199 = vmatpush1.msra.mxu0 0.0
        %2200 = vmatprep.subr.mxu0 0.0
        %2201 = vmatpush1.msra.mxu0 0.0
        %2202 = vmatprep.subr.mxu0 0.0
        %2203 = vmatpush1.msra.mxu0 0.0
        %2204 = vmatprep.subr.mxu0 0.0
        %2205 = vmatpush1.msra.mxu0 0.0
        %2206 = vmatprep.subr.mxu0 0.0
        %2207 = vmatpush1.msra.mxu0 0.0
        %2208 = vmatprep.subr.mxu0 0.0
        %2209 = vmatpush1.msra.mxu0 0.0
        %2210 = vmatprep.subr.mxu0 0.0
        %2211 = vmatpush1.msra.mxu0 0.0
        %2212 = vmatprep.subr.mxu0 0.0
        %2213 = vmatpush1.msra.mxu0 0.0
        %2214 = vmatprep.subr.mxu0 %v2166
        %2215 = vmatpush1.msra.mxu0 %v2165
        %2216 = vmatprep.subr.mxu0 0.0
        %2217 = vmatpush2.msra.mxu0 0.0
        %2218 = vmatprep.subr.mxu0 0.0
        %2219 = vmatpush2.msra.mxu0 0.0
        %2220 = vmatprep.subr.mxu0 0.0
        %2221 = vmatpush2.msra.mxu0 0.0
        %2222 = vmatprep.subr.mxu0 0.0
        %2223 = vmatpush2.msra.mxu0 0.0
        %2224 = vmatprep.subr.mxu0 0.0
        %2225 = vmatpush2.msra.mxu0 0.0
        %2226 = vmatprep.subr.mxu0 0.0
        %2227 = vmatpush2.msra.mxu0 0.0
        %2228 = vmatprep.subr.mxu0 0.0
        %2229 = vmatpush2.msra.mxu0 0.0
        %2230 = vmatprep.subr.mxu0 0.0
        %2231 = vmatpush2.msra.mxu0 0.0
        %2232 = vmatprep.subr.mxu0 0.0
        %2233 = vmatpush2.msra.mxu0 0.0
        %2234 = vmatprep.subr.mxu0 0.0
        %2235 = vmatpush2.msra.mxu0 0.0
        %2236 = vmatprep.subr.mxu0 0.0
        %2237 = vmatpush2.msra.mxu0 0.0
        %2238 = vmatprep.subr.mxu0 0.0
        %2239 = vmatpush2.msra.mxu0 0.0
        %2240 = vmatprep.subr.mxu0 0.0
        %2241 = vmatpush2.msra.mxu0 0.0
        %2242 = vmatprep.subr.mxu0 0.0
        %2243 = vmatpush2.msra.mxu0 0.0
        %2244 = vmatprep.subr.mxu0 0.0
        %2245 = vmatpush2.msra.mxu0 0.0
        %2246 = vmatprep.subr.mxu0 0.0
        %2247 = vmatpush2.msra.mxu0 0.0
        %2248 = vmatprep.mubr.f32.mxu0 0.0
        %2249 = vmatmul.mubr.f32.gmra.mxu0 %v2173
        %v2250 = vpop.f32.mrf.mxu0
        %v2251 = vadd.f32 0.0, %v2250
        %v2252 = vpop.f32.mrf.mxu0
        %v2253 = vadd.f32 0.0, %v2252
        %2254 = vmatprep.mubr.f32.mxu0 0.0
        %2255 = vmatmul.mubr.f32.gmra.mxu0 %v2176
        %v2256 = vpop.f32.mrf.mxu0
        %v2257 = vadd.f32 0.0, %v2256
        %v2258 = vpop.f32.mrf.mxu0
        %v2259 = vadd.f32 0.0, %v2258
        %2260 = vmatprep.mubr.f32.mxu0 0.0
        %2261 = vmatmul.mubr.f32.gmra.mxu0 %v2179
        %v2262 = vpop.f32.mrf.mxu0
        %v2263 = vadd.f32 0.0, %v2262
        %v2264 = vpop.f32.mrf.mxu0
        %v2265 = vadd.f32 0.0, %v2264
        %2266 = vmatprep.mubr.f32.mxu0 0.0
        %2267 = vmatmul.mubr.f32.gmra.mxu0 %v2182
        %v2268 = vpop.f32.mrf.mxu0
        %v2269 = vadd.f32 0.0, %v2268
        %v2270 = vpop.f32.mrf.mxu0
        %v2271 = vadd.f32 0.0, %v2270
        %2272 = vdwg.mxu0
        %v2273 = vadd.f32 %v2143, %v2251
        %v2274 = vadd.f32 %v2145, %v2253
        %v2275 = vadd.f32 %v2149, %v2257
        %v2276 = vadd.f32 %v2151, %v2259
        %v2277 = vadd.f32 %v2155, %v2263
        %v2278 = vadd.f32 %v2157, %v2265
        %v2279 = vadd.f32 %v2161, %v2269
        %v2280 = vadd.f32 %v2163, %v2271
        %2281 = vrot.lane.b32.xlu0 %v1926, 110
        %v2282 = vpop.permute.xlu0 %2281
        %2283 = vrot.lane.b32.xlu0 %v1927, 110
        %v2284 = vpop.permute.xlu0 %2283
        %2285 = vrot.lane.b32.xlu0 %v1928, 110
        %v2286 = vpop.permute.xlu0 %2285
        %v2287 = vsel %vm549, %v2282, %v2284
        %v2288 = vsel %vm549, %v2284, %v2286
        %2291 = vrot.lane.b32.xlu0 %v1926, 112
        %v2292 = vpop.permute.xlu0 %2291
        %2293 = vrot.lane.b32.xlu0 %v1927, 112
        %v2294 = vpop.permute.xlu0 %2293
        %2295 = vrot.lane.b32.xlu0 %v1928, 112
        %v2296 = vpop.permute.xlu0 %2295
        %v2297 = vsel %vm560, %v2292, %v2294
        %v2298 = vsel %vm560, %v2294, %v2296
        %v2301 = vsel %vm277, %v2287, %v2297
        %v2302 = vsel %vm278, %v2288, %v2298
        %s2303 = scalar_lea.vmem %s3, 96
        %v2304 = vld [vmem:[%s2303] sm:$0xff]
        %v2305 = vld [vmem:[%s2303 + $0x8] sm:$0xff]
        %v2306 = vld [vmem:[%s2303 + $0x10] sm:$0xff]
        %v2307 = vld [vmem:[%s2303 + $0x18] sm:$0xff]
        %v2309 = vsel %vm314, %v2304, 0
        %v2312 = vsel %vm314, %v2305, 0
        %v2315 = vsel %vm314, %v2306, 0
        %v2318 = vsel %vm314, %v2307, 0
        %2320 = vmatprep.subr.mxu0 0.0
        %2321 = vmatpush1.msra.mxu0 0.0
        %2322 = vmatprep.subr.mxu0 0.0
        %2323 = vmatpush1.msra.mxu0 0.0
        %2324 = vmatprep.subr.mxu0 0.0
        %2325 = vmatpush1.msra.mxu0 0.0
        %2326 = vmatprep.subr.mxu0 0.0
        %2327 = vmatpush1.msra.mxu0 0.0
        %2328 = vmatprep.subr.mxu0 0.0
        %2329 = vmatpush1.msra.mxu0 0.0
        %2330 = vmatprep.subr.mxu0 0.0
        %2331 = vmatpush1.msra.mxu0 0.0
        %2332 = vmatprep.subr.mxu0 0.0
        %2333 = vmatpush1.msra.mxu0 0.0
        %2334 = vmatprep.subr.mxu0 0.0
        %2335 = vmatpush1.msra.mxu0 0.0
        %2336 = vmatprep.subr.mxu0 0.0
        %2337 = vmatpush1.msra.mxu0 0.0
        %2338 = vmatprep.subr.mxu0 0.0
        %2339 = vmatpush1.msra.mxu0 0.0
        %2340 = vmatprep.subr.mxu0 0.0
        %2341 = vmatpush1.msra.mxu0 0.0
        %2342 = vmatprep.subr.mxu0 0.0
        %2343 = vmatpush1.msra.mxu0 0.0
        %2344 = vmatprep.subr.mxu0 0.0
        %2345 = vmatpush1.msra.mxu0 0.0
        %2346 = vmatprep.subr.mxu0 0.0
        %2347 = vmatpush1.msra.mxu0 0.0
        %2348 = vmatprep.subr.mxu0 0.0
        %2349 = vmatpush1.msra.mxu0 0.0
        %2350 = vmatprep.subr.mxu0 %v2302
        %2351 = vmatpush1.msra.mxu0 %v2301
        %2352 = vmatprep.subr.mxu0 0.0
        %2353 = vmatpush2.msra.mxu0 0.0
        %2354 = vmatprep.subr.mxu0 0.0
        %2355 = vmatpush2.msra.mxu0 0.0
        %2356 = vmatprep.subr.mxu0 0.0
        %2357 = vmatpush2.msra.mxu0 0.0
        %2358 = vmatprep.subr.mxu0 0.0
        %2359 = vmatpush2.msra.mxu0 0.0
        %2360 = vmatprep.subr.mxu0 0.0
        %2361 = vmatpush2.msra.mxu0 0.0
        %2362 = vmatprep.subr.mxu0 0.0
        %2363 = vmatpush2.msra.mxu0 0.0
        %2364 = vmatprep.subr.mxu0 0.0
        %2365 = vmatpush2.msra.mxu0 0.0
        %2366 = vmatprep.subr.mxu0 0.0
        %2367 = vmatpush2.msra.mxu0 0.0
        %2368 = vmatprep.subr.mxu0 0.0
        %2369 = vmatpush2.msra.mxu0 0.0
        %2370 = vmatprep.subr.mxu0 0.0
        %2371 = vmatpush2.msra.mxu0 0.0
        %2372 = vmatprep.subr.mxu0 0.0
        %2373 = vmatpush2.msra.mxu0 0.0
        %2374 = vmatprep.subr.mxu0 0.0
        %2375 = vmatpush2.msra.mxu0 0.0
        %2376 = vmatprep.subr.mxu0 0.0
        %2377 = vmatpush2.msra.mxu0 0.0
        %2378 = vmatprep.subr.mxu0 0.0
        %2379 = vmatpush2.msra.mxu0 0.0
        %2380 = vmatprep.subr.mxu0 0.0
        %2381 = vmatpush2.msra.mxu0 0.0
        %2382 = vmatprep.subr.mxu0 0.0
        %2383 = vmatpush2.msra.mxu0 0.0
        %2384 = vmatprep.mubr.f32.mxu0 0.0
        %2385 = vmatmul.mubr.f32.gmra.mxu0 %v2309
        %v2386 = vpop.f32.mrf.mxu0
        %v2387 = vadd.f32 0.0, %v2386
        %v2388 = vpop.f32.mrf.mxu0
        %v2389 = vadd.f32 0.0, %v2388
        %2390 = vmatprep.mubr.f32.mxu0 0.0
        %2391 = vmatmul.mubr.f32.gmra.mxu0 %v2312
        %v2392 = vpop.f32.mrf.mxu0
        %v2393 = vadd.f32 0.0, %v2392
        %v2394 = vpop.f32.mrf.mxu0
        %v2395 = vadd.f32 0.0, %v2394
        %2396 = vmatprep.mubr.f32.mxu0 0.0
        %2397 = vmatmul.mubr.f32.gmra.mxu0 %v2315
        %v2398 = vpop.f32.mrf.mxu0
        %v2399 = vadd.f32 0.0, %v2398
        %v2400 = vpop.f32.mrf.mxu0
        %v2401 = vadd.f32 0.0, %v2400
        %2402 = vmatprep.mubr.f32.mxu0 0.0
        %2403 = vmatmul.mubr.f32.gmra.mxu0 %v2318
        %v2404 = vpop.f32.mrf.mxu0
        %v2405 = vadd.f32 0.0, %v2404
        %v2406 = vpop.f32.mrf.mxu0
        %v2407 = vadd.f32 0.0, %v2406
        %2408 = vdwg.mxu0
        %v2409 = vadd.f32 %v2273, %v2387
        %v2410 = vadd.f32 %v2274, %v2389
        %v2411 = vadd.f32 %v2275, %v2393
        %v2412 = vadd.f32 %v2276, %v2395
        %v2413 = vadd.f32 %v2277, %v2399
        %v2414 = vadd.f32 %v2278, %v2401
        %v2415 = vadd.f32 %v2279, %v2405
        %v2416 = vadd.f32 %v2280, %v2407
        %s2417 = scalar_lea.vmem %s3, 128
        %v2418 = vld [vmem:[%s2417] sm:$0xff]
        %v2419 = vld [vmem:[%s2417 + $0x8] sm:$0xff]
        %v2420 = vld [vmem:[%s2417 + $0x10] sm:$0xff]
        %v2421 = vld [vmem:[%s2417 + $0x18] sm:$0xff]
        %2422 = vrot.lane.b32.xlu0 %v1926, 111
        %v2423 = vpop.permute.xlu0 %2422
        %2424 = vrot.lane.b32.xlu0 %v1927, 111
        %v2425 = vpop.permute.xlu0 %2424
        %2426 = vrot.lane.b32.xlu0 %v1928, 111
        %v2427 = vpop.permute.xlu0 %2426
        %v2428 = vsel %vm653, %v2423, %v2425
        %v2429 = vsel %vm653, %v2425, %v2427
        %v2433 = vsel %vm314, %v2418, 0
        %v2436 = vsel %vm314, %v2419, 0
        %v2439 = vsel %vm314, %v2420, 0
        %v2442 = vsel %vm314, %v2421, 0
        %2444 = vmatprep.subr.mxu0 0.0
        %2445 = vmatpush1.msra.mxu0 0.0
        %2446 = vmatprep.subr.mxu0 0.0
        %2447 = vmatpush1.msra.mxu0 0.0
        %2448 = vmatprep.subr.mxu0 0.0
        %2449 = vmatpush1.msra.mxu0 0.0
        %2450 = vmatprep.subr.mxu0 0.0
        %2451 = vmatpush1.msra.mxu0 0.0
        %2452 = vmatprep.subr.mxu0 0.0
        %2453 = vmatpush1.msra.mxu0 0.0
        %2454 = vmatprep.subr.mxu0 0.0
        %2455 = vmatpush1.msra.mxu0 0.0
        %2456 = vmatprep.subr.mxu0 0.0
        %2457 = vmatpush1.msra.mxu0 0.0
        %2458 = vmatprep.subr.mxu0 0.0
        %2459 = vmatpush1.msra.mxu0 0.0
        %2460 = vmatprep.subr.mxu0 0.0
        %2461 = vmatpush1.msra.mxu0 0.0
        %2462 = vmatprep.subr.mxu0 0.0
        %2463 = vmatpush1.msra.mxu0 0.0
        %2464 = vmatprep.subr.mxu0 0.0
        %2465 = vmatpush1.msra.mxu0 0.0
        %2466 = vmatprep.subr.mxu0 0.0
        %2467 = vmatpush1.msra.mxu0 0.0
        %2468 = vmatprep.subr.mxu0 0.0
        %2469 = vmatpush1.msra.mxu0 0.0
        %2470 = vmatprep.subr.mxu0 0.0
        %2471 = vmatpush1.msra.mxu0 0.0
        %2472 = vmatprep.subr.mxu0 0.0
        %2473 = vmatpush1.msra.mxu0 0.0
        %2474 = vmatprep.subr.mxu0 %v2429
        %2475 = vmatpush1.msra.mxu0 %v2428
        %2476 = vmatprep.subr.mxu0 0.0
        %2477 = vmatpush2.msra.mxu0 0.0
        %2478 = vmatprep.subr.mxu0 0.0
        %2479 = vmatpush2.msra.mxu0 0.0
        %2480 = vmatprep.subr.mxu0 0.0
        %2481 = vmatpush2.msra.mxu0 0.0
        %2482 = vmatprep.subr.mxu0 0.0
        %2483 = vmatpush2.msra.mxu0 0.0
        %2484 = vmatprep.subr.mxu0 0.0
        %2485 = vmatpush2.msra.mxu0 0.0
        %2486 = vmatprep.subr.mxu0 0.0
        %2487 = vmatpush2.msra.mxu0 0.0
        %2488 = vmatprep.subr.mxu0 0.0
        %2489 = vmatpush2.msra.mxu0 0.0
        %2490 = vmatprep.subr.mxu0 0.0
        %2491 = vmatpush2.msra.mxu0 0.0
        %2492 = vmatprep.subr.mxu0 0.0
        %2493 = vmatpush2.msra.mxu0 0.0
        %2494 = vmatprep.subr.mxu0 0.0
        %2495 = vmatpush2.msra.mxu0 0.0
        %2496 = vmatprep.subr.mxu0 0.0
        %2497 = vmatpush2.msra.mxu0 0.0
        %2498 = vmatprep.subr.mxu0 0.0
        %2499 = vmatpush2.msra.mxu0 0.0
        %2500 = vmatprep.subr.mxu0 0.0
        %2501 = vmatpush2.msra.mxu0 0.0
        %2502 = vmatprep.subr.mxu0 0.0
        %2503 = vmatpush2.msra.mxu0 0.0
        %2504 = vmatprep.subr.mxu0 0.0
        %2505 = vmatpush2.msra.mxu0 0.0
        %2506 = vmatprep.subr.mxu0 0.0
        %2507 = vmatpush2.msra.mxu0 0.0
        %2508 = vmatprep.mubr.f32.mxu0 0.0
        %2509 = vmatmul.mubr.f32.gmra.mxu0 %v2433
        %v2510 = vpop.f32.mrf.mxu0
        %v2511 = vadd.f32 0.0, %v2510
        %v2512 = vpop.f32.mrf.mxu0
        %v2513 = vadd.f32 0.0, %v2512
        %2514 = vmatprep.mubr.f32.mxu0 0.0
        %2515 = vmatmul.mubr.f32.gmra.mxu0 %v2436
        %v2516 = vpop.f32.mrf.mxu0
        %v2517 = vadd.f32 0.0, %v2516
        %v2518 = vpop.f32.mrf.mxu0
        %v2519 = vadd.f32 0.0, %v2518
        %2520 = vmatprep.mubr.f32.mxu0 0.0
        %2521 = vmatmul.mubr.f32.gmra.mxu0 %v2439
        %v2522 = vpop.f32.mrf.mxu0
        %v2523 = vadd.f32 0.0, %v2522
        %v2524 = vpop.f32.mrf.mxu0
        %v2525 = vadd.f32 0.0, %v2524
        %2526 = vmatprep.mubr.f32.mxu0 0.0
        %2527 = vmatmul.mubr.f32.gmra.mxu0 %v2442
        %v2528 = vpop.f32.mrf.mxu0
        %v2529 = vadd.f32 0.0, %v2528
        %v2530 = vpop.f32.mrf.mxu0
        %v2531 = vadd.f32 0.0, %v2530
        %2532 = vdwg.mxu0
        %v2533 = vadd.f32 %v2409, %v2511
        %v2534 = vadd.f32 %v2410, %v2513
        %v2535 = vadd.f32 %v2411, %v2517
        %v2536 = vadd.f32 %v2412, %v2519
        %v2537 = vadd.f32 %v2413, %v2523
        %v2538 = vadd.f32 %v2414, %v2525
        %v2539 = vadd.f32 %v2415, %v2529
        %v2540 = vadd.f32 %v2416, %v2531
        %v2541 = vsel %vm279, %v2297, %v2287
        %v2542 = vsel %vm280, %v2298, %v2288
        %s2543 = scalar_lea.vmem %s3, 160
        %v2544 = vld [vmem:[%s2543] sm:$0xff]
        %v2545 = vld [vmem:[%s2543 + $0x8] sm:$0xff]
        %v2546 = vld [vmem:[%s2543 + $0x10] sm:$0xff]
        %v2547 = vld [vmem:[%s2543 + $0x18] sm:$0xff]
        %v2549 = vsel %vm314, %v2544, 0
        %v2552 = vsel %vm314, %v2545, 0
        %v2555 = vsel %vm314, %v2546, 0
        %v2558 = vsel %vm314, %v2547, 0
        %2560 = vmatprep.subr.mxu0 0.0
        %2561 = vmatpush1.msra.mxu0 0.0
        %2562 = vmatprep.subr.mxu0 0.0
        %2563 = vmatpush1.msra.mxu0 0.0
        %2564 = vmatprep.subr.mxu0 0.0
        %2565 = vmatpush1.msra.mxu0 0.0
        %2566 = vmatprep.subr.mxu0 0.0
        %2567 = vmatpush1.msra.mxu0 0.0
        %2568 = vmatprep.subr.mxu0 0.0
        %2569 = vmatpush1.msra.mxu0 0.0
        %2570 = vmatprep.subr.mxu0 0.0
        %2571 = vmatpush1.msra.mxu0 0.0
        %2572 = vmatprep.subr.mxu0 0.0
        %2573 = vmatpush1.msra.mxu0 0.0
        %2574 = vmatprep.subr.mxu0 0.0
        %2575 = vmatpush1.msra.mxu0 0.0
        %2576 = vmatprep.subr.mxu0 0.0
        %2577 = vmatpush1.msra.mxu0 0.0
        %2578 = vmatprep.subr.mxu0 0.0
        %2579 = vmatpush1.msra.mxu0 0.0
        %2580 = vmatprep.subr.mxu0 0.0
        %2581 = vmatpush1.msra.mxu0 0.0
        %2582 = vmatprep.subr.mxu0 0.0
        %2583 = vmatpush1.msra.mxu0 0.0
        %2584 = vmatprep.subr.mxu0 0.0
        %2585 = vmatpush1.msra.mxu0 0.0
        %2586 = vmatprep.subr.mxu0 0.0
        %2587 = vmatpush1.msra.mxu0 0.0
        %2588 = vmatprep.subr.mxu0 0.0
        %2589 = vmatpush1.msra.mxu0 0.0
        %2590 = vmatprep.subr.mxu0 %v2542
        %2591 = vmatpush1.msra.mxu0 %v2541
        %2592 = vmatprep.subr.mxu0 0.0
        %2593 = vmatpush2.msra.mxu0 0.0
        %2594 = vmatprep.subr.mxu0 0.0
        %2595 = vmatpush2.msra.mxu0 0.0
        %2596 = vmatprep.subr.mxu0 0.0
        %2597 = vmatpush2.msra.mxu0 0.0
        %2598 = vmatprep.subr.mxu0 0.0
        %2599 = vmatpush2.msra.mxu0 0.0
        %2600 = vmatprep.subr.mxu0 0.0
        %2601 = vmatpush2.msra.mxu0 0.0
        %2602 = vmatprep.subr.mxu0 0.0
        %2603 = vmatpush2.msra.mxu0 0.0
        %2604 = vmatprep.subr.mxu0 0.0
        %2605 = vmatpush2.msra.mxu0 0.0
        %2606 = vmatprep.subr.mxu0 0.0
        %2607 = vmatpush2.msra.mxu0 0.0
        %2608 = vmatprep.subr.mxu0 0.0
        %2609 = vmatpush2.msra.mxu0 0.0
        %2610 = vmatprep.subr.mxu0 0.0
        %2611 = vmatpush2.msra.mxu0 0.0
        %2612 = vmatprep.subr.mxu0 0.0
        %2613 = vmatpush2.msra.mxu0 0.0
        %2614 = vmatprep.subr.mxu0 0.0
        %2615 = vmatpush2.msra.mxu0 0.0
        %2616 = vmatprep.subr.mxu0 0.0
        %2617 = vmatpush2.msra.mxu0 0.0
        %2618 = vmatprep.subr.mxu0 0.0
        %2619 = vmatpush2.msra.mxu0 0.0
        %2620 = vmatprep.subr.mxu0 0.0
        %2621 = vmatpush2.msra.mxu0 0.0
        %2622 = vmatprep.subr.mxu0 0.0
        %2623 = vmatpush2.msra.mxu0 0.0
        %2624 = vmatprep.mubr.f32.mxu0 0.0
        %2625 = vmatmul.mubr.f32.gmra.mxu0 %v2549
        %v2626 = vpop.f32.mrf.mxu0
        %v2627 = vadd.f32 0.0, %v2626
        %v2628 = vpop.f32.mrf.mxu0
        %v2629 = vadd.f32 0.0, %v2628
        %2630 = vmatprep.mubr.f32.mxu0 0.0
        %2631 = vmatmul.mubr.f32.gmra.mxu0 %v2552
        %v2632 = vpop.f32.mrf.mxu0
        %v2633 = vadd.f32 0.0, %v2632
        %v2634 = vpop.f32.mrf.mxu0
        %v2635 = vadd.f32 0.0, %v2634
        %2636 = vmatprep.mubr.f32.mxu0 0.0
        %2637 = vmatmul.mubr.f32.gmra.mxu0 %v2555
        %v2638 = vpop.f32.mrf.mxu0
        %v2639 = vadd.f32 0.0, %v2638
        %v2640 = vpop.f32.mrf.mxu0
        %v2641 = vadd.f32 0.0, %v2640
        %2642 = vmatprep.mubr.f32.mxu0 0.0
        %2643 = vmatmul.mubr.f32.gmra.mxu0 %v2558
        %v2644 = vpop.f32.mrf.mxu0
        %v2645 = vadd.f32 0.0, %v2644
        %v2646 = vpop.f32.mrf.mxu0
        %v2647 = vadd.f32 0.0, %v2646
        %2648 = vdwg.mxu0
        %v2649 = vadd.f32 %v2533, %v2627
        %v2650 = vadd.f32 %v2534, %v2629
        %v2651 = vadd.f32 %v2535, %v2633
        %v2652 = vadd.f32 %v2536, %v2635
        %v2653 = vadd.f32 %v2537, %v2639
        %v2654 = vadd.f32 %v2538, %v2641
        %v2655 = vadd.f32 %v2539, %v2645
        %v2656 = vadd.f32 %v2540, %v2647
        %2657 = vrot.lane.b32.xlu0 %v1926, 94
        %v2658 = vpop.permute.xlu0 %2657
        %2659 = vrot.lane.b32.xlu0 %v1927, 94
        %v2660 = vpop.permute.xlu0 %2659
        %2661 = vrot.lane.b32.xlu0 %v1928, 94
        %v2662 = vpop.permute.xlu0 %2661
        %v2663 = vsel %vm820, %v2658, %v2660
        %v2664 = vsel %vm820, %v2660, %v2662
        %2667 = vrot.lane.b32.xlu0 %v1926, 96
        %v2668 = vpop.permute.xlu0 %2667
        %2669 = vrot.lane.b32.xlu0 %v1927, 96
        %v2670 = vpop.permute.xlu0 %2669
        %2671 = vrot.lane.b32.xlu0 %v1928, 96
        %v2672 = vpop.permute.xlu0 %2671
        %v2673 = vsel %vm831, %v2668, %v2670
        %v2674 = vsel %vm831, %v2670, %v2672
        %v2677 = vsel %vm277, %v2663, %v2673
        %v2678 = vsel %vm278, %v2664, %v2674
        %s2679 = scalar_lea.vmem %s3, 192
        %v2680 = vld [vmem:[%s2679] sm:$0xff]
        %v2681 = vld [vmem:[%s2679 + $0x8] sm:$0xff]
        %v2682 = vld [vmem:[%s2679 + $0x10] sm:$0xff]
        %v2683 = vld [vmem:[%s2679 + $0x18] sm:$0xff]
        %v2685 = vsel %vm314, %v2680, 0
        %v2688 = vsel %vm314, %v2681, 0
        %v2691 = vsel %vm314, %v2682, 0
        %v2694 = vsel %vm314, %v2683, 0
        %2696 = vmatprep.subr.mxu0 0.0
        %2697 = vmatpush1.msra.mxu0 0.0
        %2698 = vmatprep.subr.mxu0 0.0
        %2699 = vmatpush1.msra.mxu0 0.0
        %2700 = vmatprep.subr.mxu0 0.0
        %2701 = vmatpush1.msra.mxu0 0.0
        %2702 = vmatprep.subr.mxu0 0.0
        %2703 = vmatpush1.msra.mxu0 0.0
        %2704 = vmatprep.subr.mxu0 0.0
        %2705 = vmatpush1.msra.mxu0 0.0
        %2706 = vmatprep.subr.mxu0 0.0
        %2707 = vmatpush1.msra.mxu0 0.0
        %2708 = vmatprep.subr.mxu0 0.0
        %2709 = vmatpush1.msra.mxu0 0.0
        %2710 = vmatprep.subr.mxu0 0.0
        %2711 = vmatpush1.msra.mxu0 0.0
        %2712 = vmatprep.subr.mxu0 0.0
        %2713 = vmatpush1.msra.mxu0 0.0
        %2714 = vmatprep.subr.mxu0 0.0
        %2715 = vmatpush1.msra.mxu0 0.0
        %2716 = vmatprep.subr.mxu0 0.0
        %2717 = vmatpush1.msra.mxu0 0.0
        %2718 = vmatprep.subr.mxu0 0.0
        %2719 = vmatpush1.msra.mxu0 0.0
        %2720 = vmatprep.subr.mxu0 0.0
        %2721 = vmatpush1.msra.mxu0 0.0
        %2722 = vmatprep.subr.mxu0 0.0
        %2723 = vmatpush1.msra.mxu0 0.0
        %2724 = vmatprep.subr.mxu0 0.0
        %2725 = vmatpush1.msra.mxu0 0.0
        %2726 = vmatprep.subr.mxu0 %v2678
        %2727 = vmatpush1.msra.mxu0 %v2677
        %2728 = vmatprep.subr.mxu0 0.0
        %2729 = vmatpush2.msra.mxu0 0.0
        %2730 = vmatprep.subr.mxu0 0.0
        %2731 = vmatpush2.msra.mxu0 0.0
        %2732 = vmatprep.subr.mxu0 0.0
        %2733 = vmatpush2.msra.mxu0 0.0
        %2734 = vmatprep.subr.mxu0 0.0
        %2735 = vmatpush2.msra.mxu0 0.0
        %2736 = vmatprep.subr.mxu0 0.0
        %2737 = vmatpush2.msra.mxu0 0.0
        %2738 = vmatprep.subr.mxu0 0.0
        %2739 = vmatpush2.msra.mxu0 0.0
        %2740 = vmatprep.subr.mxu0 0.0
        %2741 = vmatpush2.msra.mxu0 0.0
        %2742 = vmatprep.subr.mxu0 0.0
        %2743 = vmatpush2.msra.mxu0 0.0
        %2744 = vmatprep.subr.mxu0 0.0
        %2745 = vmatpush2.msra.mxu0 0.0
        %2746 = vmatprep.subr.mxu0 0.0
        %2747 = vmatpush2.msra.mxu0 0.0
        %2748 = vmatprep.subr.mxu0 0.0
        %2749 = vmatpush2.msra.mxu0 0.0
        %2750 = vmatprep.subr.mxu0 0.0
        %2751 = vmatpush2.msra.mxu0 0.0
        %2752 = vmatprep.subr.mxu0 0.0
        %2753 = vmatpush2.msra.mxu0 0.0
        %2754 = vmatprep.subr.mxu0 0.0
        %2755 = vmatpush2.msra.mxu0 0.0
        %2756 = vmatprep.subr.mxu0 0.0
        %2757 = vmatpush2.msra.mxu0 0.0
        %2758 = vmatprep.subr.mxu0 0.0
        %2759 = vmatpush2.msra.mxu0 0.0
        %2760 = vmatprep.mubr.f32.mxu0 0.0
        %2761 = vmatmul.mubr.f32.gmra.mxu0 %v2685
        %v2762 = vpop.f32.mrf.mxu0
        %v2763 = vadd.f32 0.0, %v2762
        %v2764 = vpop.f32.mrf.mxu0
        %v2765 = vadd.f32 0.0, %v2764
        %2766 = vmatprep.mubr.f32.mxu0 0.0
        %2767 = vmatmul.mubr.f32.gmra.mxu0 %v2688
        %v2768 = vpop.f32.mrf.mxu0
        %v2769 = vadd.f32 0.0, %v2768
        %v2770 = vpop.f32.mrf.mxu0
        %v2771 = vadd.f32 0.0, %v2770
        %2772 = vmatprep.mubr.f32.mxu0 0.0
        %2773 = vmatmul.mubr.f32.gmra.mxu0 %v2691
        %v2774 = vpop.f32.mrf.mxu0
        %v2775 = vadd.f32 0.0, %v2774
        %v2776 = vpop.f32.mrf.mxu0
        %v2777 = vadd.f32 0.0, %v2776
        %2778 = vmatprep.mubr.f32.mxu0 0.0
        %2779 = vmatmul.mubr.f32.gmra.mxu0 %v2694
        %v2780 = vpop.f32.mrf.mxu0
        %v2781 = vadd.f32 0.0, %v2780
        %v2782 = vpop.f32.mrf.mxu0
        %v2783 = vadd.f32 0.0, %v2782
        %2784 = vdwg.mxu0
        %v2785 = vadd.f32 %v2649, %v2763
        %v2786 = vadd.f32 %v2650, %v2765
        %v2787 = vadd.f32 %v2651, %v2769
        %v2788 = vadd.f32 %v2652, %v2771
        %v2789 = vadd.f32 %v2653, %v2775
        %v2790 = vadd.f32 %v2654, %v2777
        %v2791 = vadd.f32 %v2655, %v2781
        %v2792 = vadd.f32 %v2656, %v2783
        %s2793 = scalar_lea.vmem %s3, 224
        %v2794 = vld [vmem:[%s2793] sm:$0xff]
        %v2795 = vld [vmem:[%s2793 + $0x8] sm:$0xff]
        %v2796 = vld [vmem:[%s2793 + $0x10] sm:$0xff]
        %v2797 = vld [vmem:[%s2793 + $0x18] sm:$0xff]
        %2798 = vrot.lane.b32.xlu0 %v1926, 95
        %v2799 = vpop.permute.xlu0 %2798
        %2800 = vrot.lane.b32.xlu0 %v1927, 95
        %v2801 = vpop.permute.xlu0 %2800
        %2802 = vrot.lane.b32.xlu0 %v1928, 95
        %v2803 = vpop.permute.xlu0 %2802
        %v2804 = vsel %vm924, %v2799, %v2801
        %v2805 = vsel %vm924, %v2801, %v2803
        %v2809 = vsel %vm314, %v2794, 0
        %v2812 = vsel %vm314, %v2795, 0
        %v2815 = vsel %vm314, %v2796, 0
        %v2818 = vsel %vm314, %v2797, 0
        %2820 = vmatprep.subr.mxu0 0.0
        %2821 = vmatpush1.msra.mxu0 0.0
        %2822 = vmatprep.subr.mxu0 0.0
        %2823 = vmatpush1.msra.mxu0 0.0
        %2824 = vmatprep.subr.mxu0 0.0
        %2825 = vmatpush1.msra.mxu0 0.0
        %2826 = vmatprep.subr.mxu0 0.0
        %2827 = vmatpush1.msra.mxu0 0.0
        %2828 = vmatprep.subr.mxu0 0.0
        %2829 = vmatpush1.msra.mxu0 0.0
        %2830 = vmatprep.subr.mxu0 0.0
        %2831 = vmatpush1.msra.mxu0 0.0
        %2832 = vmatprep.subr.mxu0 0.0
        %2833 = vmatpush1.msra.mxu0 0.0
        %2834 = vmatprep.subr.mxu0 0.0
        %2835 = vmatpush1.msra.mxu0 0.0
        %2836 = vmatprep.subr.mxu0 0.0
        %2837 = vmatpush1.msra.mxu0 0.0
        %2838 = vmatprep.subr.mxu0 0.0
        %2839 = vmatpush1.msra.mxu0 0.0
        %2840 = vmatprep.subr.mxu0 0.0
        %2841 = vmatpush1.msra.mxu0 0.0
        %2842 = vmatprep.subr.mxu0 0.0
        %2843 = vmatpush1.msra.mxu0 0.0
        %2844 = vmatprep.subr.mxu0 0.0
        %2845 = vmatpush1.msra.mxu0 0.0
        %2846 = vmatprep.subr.mxu0 0.0
        %2847 = vmatpush1.msra.mxu0 0.0
        %2848 = vmatprep.subr.mxu0 0.0
        %2849 = vmatpush1.msra.mxu0 0.0
        %2850 = vmatprep.subr.mxu0 %v2805
        %2851 = vmatpush1.msra.mxu0 %v2804
        %2852 = vmatprep.subr.mxu0 0.0
        %2853 = vmatpush2.msra.mxu0 0.0
        %2854 = vmatprep.subr.mxu0 0.0
        %2855 = vmatpush2.msra.mxu0 0.0
        %2856 = vmatprep.subr.mxu0 0.0
        %2857 = vmatpush2.msra.mxu0 0.0
        %2858 = vmatprep.subr.mxu0 0.0
        %2859 = vmatpush2.msra.mxu0 0.0
        %2860 = vmatprep.subr.mxu0 0.0
        %2861 = vmatpush2.msra.mxu0 0.0
        %2862 = vmatprep.subr.mxu0 0.0
        %2863 = vmatpush2.msra.mxu0 0.0
        %2864 = vmatprep.subr.mxu0 0.0
        %2865 = vmatpush2.msra.mxu0 0.0
        %2866 = vmatprep.subr.mxu0 0.0
        %2867 = vmatpush2.msra.mxu0 0.0
        %2868 = vmatprep.subr.mxu0 0.0
        %2869 = vmatpush2.msra.mxu0 0.0
        %2870 = vmatprep.subr.mxu0 0.0
        %2871 = vmatpush2.msra.mxu0 0.0
        %2872 = vmatprep.subr.mxu0 0.0
        %2873 = vmatpush2.msra.mxu0 0.0
        %2874 = vmatprep.subr.mxu0 0.0
        %2875 = vmatpush2.msra.mxu0 0.0
        %2876 = vmatprep.subr.mxu0 0.0
        %2877 = vmatpush2.msra.mxu0 0.0
        %2878 = vmatprep.subr.mxu0 0.0
        %2879 = vmatpush2.msra.mxu0 0.0
        %2880 = vmatprep.subr.mxu0 0.0
        %2881 = vmatpush2.msra.mxu0 0.0
        %2882 = vmatprep.subr.mxu0 0.0
        %2883 = vmatpush2.msra.mxu0 0.0
        %2884 = vmatprep.mubr.f32.mxu0 0.0
        %2885 = vmatmul.mubr.f32.gmra.mxu0 %v2809
        %v2886 = vpop.f32.mrf.mxu0
        %v2887 = vadd.f32 0.0, %v2886
        %v2888 = vpop.f32.mrf.mxu0
        %v2889 = vadd.f32 0.0, %v2888
        %2890 = vmatprep.mubr.f32.mxu0 0.0
        %2891 = vmatmul.mubr.f32.gmra.mxu0 %v2812
        %v2892 = vpop.f32.mrf.mxu0
        %v2893 = vadd.f32 0.0, %v2892
        %v2894 = vpop.f32.mrf.mxu0
        %v2895 = vadd.f32 0.0, %v2894
        %2896 = vmatprep.mubr.f32.mxu0 0.0
        %2897 = vmatmul.mubr.f32.gmra.mxu0 %v2815
        %v2898 = vpop.f32.mrf.mxu0
        %v2899 = vadd.f32 0.0, %v2898
        %v2900 = vpop.f32.mrf.mxu0
        %v2901 = vadd.f32 0.0, %v2900
        %2902 = vmatprep.mubr.f32.mxu0 0.0
        %2903 = vmatmul.mubr.f32.gmra.mxu0 %v2818
        %v2904 = vpop.f32.mrf.mxu0
        %v2905 = vadd.f32 0.0, %v2904
        %v2906 = vpop.f32.mrf.mxu0
        %v2907 = vadd.f32 0.0, %v2906
        %2908 = vdwg.mxu0
        %v2909 = vadd.f32 %v2785, %v2887
        %v2910 = vadd.f32 %v2786, %v2889
        %v2911 = vadd.f32 %v2787, %v2893
        %v2912 = vadd.f32 %v2788, %v2895
        %v2913 = vadd.f32 %v2789, %v2899
        %v2914 = vadd.f32 %v2790, %v2901
        %v2915 = vadd.f32 %v2791, %v2905
        %v2916 = vadd.f32 %v2792, %v2907
        %v2917 = vsel %vm279, %v2673, %v2663
        %v2918 = vsel %vm280, %v2674, %v2664
        %s2919 = scalar_lea.vmem %s3, 256
        %v2920 = vld [vmem:[%s2919] sm:$0xff]
        %v2921 = vld [vmem:[%s2919 + $0x8] sm:$0xff]
        %v2922 = vld [vmem:[%s2919 + $0x10] sm:$0xff]
        %v2923 = vld [vmem:[%s2919 + $0x18] sm:$0xff]
        %v2925 = vsel %vm314, %v2920, 0
        %v2928 = vsel %vm314, %v2921, 0
        %v2931 = vsel %vm314, %v2922, 0
        %v2934 = vsel %vm314, %v2923, 0
        %2936 = vmatprep.subr.mxu0 0.0
        %2937 = vmatpush1.msra.mxu0 0.0
        %2938 = vmatprep.subr.mxu0 0.0
        %2939 = vmatpush1.msra.mxu0 0.0
        %2940 = vmatprep.subr.mxu0 0.0
        %2941 = vmatpush1.msra.mxu0 0.0
        %2942 = vmatprep.subr.mxu0 0.0
        %2943 = vmatpush1.msra.mxu0 0.0
        %2944 = vmatprep.subr.mxu0 0.0
        %2945 = vmatpush1.msra.mxu0 0.0
        %2946 = vmatprep.subr.mxu0 0.0
        %2947 = vmatpush1.msra.mxu0 0.0
        %2948 = vmatprep.subr.mxu0 0.0
        %2949 = vmatpush1.msra.mxu0 0.0
        %2950 = vmatprep.subr.mxu0 0.0
        %2951 = vmatpush1.msra.mxu0 0.0
        %2952 = vmatprep.subr.mxu0 0.0
        %2953 = vmatpush1.msra.mxu0 0.0
        %2954 = vmatprep.subr.mxu0 0.0
        %2955 = vmatpush1.msra.mxu0 0.0
        %2956 = vmatprep.subr.mxu0 0.0
        %2957 = vmatpush1.msra.mxu0 0.0
        %2958 = vmatprep.subr.mxu0 0.0
        %2959 = vmatpush1.msra.mxu0 0.0
        %2960 = vmatprep.subr.mxu0 0.0
        %2961 = vmatpush1.msra.mxu0 0.0
        %2962 = vmatprep.subr.mxu0 0.0
        %2963 = vmatpush1.msra.mxu0 0.0
        %2964 = vmatprep.subr.mxu0 0.0
        %2965 = vmatpush1.msra.mxu0 0.0
        %2966 = vmatprep.subr.mxu0 %v2918
        %2967 = vmatpush1.msra.mxu0 %v2917
        %2968 = vmatprep.subr.mxu0 0.0
        %2969 = vmatpush2.msra.mxu0 0.0
        %2970 = vmatprep.subr.mxu0 0.0
        %2971 = vmatpush2.msra.mxu0 0.0
        %2972 = vmatprep.subr.mxu0 0.0
        %2973 = vmatpush2.msra.mxu0 0.0
        %2974 = vmatprep.subr.mxu0 0.0
        %2975 = vmatpush2.msra.mxu0 0.0
        %2976 = vmatprep.subr.mxu0 0.0
        %2977 = vmatpush2.msra.mxu0 0.0
        %2978 = vmatprep.subr.mxu0 0.0
        %2979 = vmatpush2.msra.mxu0 0.0
        %2980 = vmatprep.subr.mxu0 0.0
        %2981 = vmatpush2.msra.mxu0 0.0
        %2982 = vmatprep.subr.mxu0 0.0
        %2983 = vmatpush2.msra.mxu0 0.0
        %2984 = vmatprep.subr.mxu0 0.0
        %2985 = vmatpush2.msra.mxu0 0.0
        %2986 = vmatprep.subr.mxu0 0.0
        %2987 = vmatpush2.msra.mxu0 0.0
        %2988 = vmatprep.subr.mxu0 0.0
        %2989 = vmatpush2.msra.mxu0 0.0
        %2990 = vmatprep.subr.mxu0 0.0
        %2991 = vmatpush2.msra.mxu0 0.0
        %2992 = vmatprep.subr.mxu0 0.0
        %2993 = vmatpush2.msra.mxu0 0.0
        %2994 = vmatprep.subr.mxu0 0.0
        %2995 = vmatpush2.msra.mxu0 0.0
        %2996 = vmatprep.subr.mxu0 0.0
        %2997 = vmatpush2.msra.mxu0 0.0
        %2998 = vmatprep.subr.mxu0 0.0
        %2999 = vmatpush2.msra.mxu0 0.0
        %3000 = vmatprep.mubr.f32.mxu0 0.0
        %3001 = vmatmul.mubr.f32.gmra.mxu0 %v2925
        %v3002 = vpop.f32.mrf.mxu0
        %v3003 = vadd.f32 0.0, %v3002
        %v3004 = vpop.f32.mrf.mxu0
        %v3005 = vadd.f32 0.0, %v3004
        %3006 = vmatprep.mubr.f32.mxu0 0.0
        %3007 = vmatmul.mubr.f32.gmra.mxu0 %v2928
        %v3008 = vpop.f32.mrf.mxu0
        %v3009 = vadd.f32 0.0, %v3008
        %v3010 = vpop.f32.mrf.mxu0
        %v3011 = vadd.f32 0.0, %v3010
        %3012 = vmatprep.mubr.f32.mxu0 0.0
        %3013 = vmatmul.mubr.f32.gmra.mxu0 %v2931
        %v3014 = vpop.f32.mrf.mxu0
        %v3015 = vadd.f32 0.0, %v3014
        %v3016 = vpop.f32.mrf.mxu0
        %v3017 = vadd.f32 0.0, %v3016
        %3018 = vmatprep.mubr.f32.mxu0 0.0
        %3019 = vmatmul.mubr.f32.gmra.mxu0 %v2934
        %v3020 = vpop.f32.mrf.mxu0
        %v3021 = vadd.f32 0.0, %v3020
        %v3022 = vpop.f32.mrf.mxu0
        %v3023 = vadd.f32 0.0, %v3022
        %3024 = vdwg.mxu0
        %v3025 = vadd.f32 %v2909, %v3003
        %v3026 = vadd.f32 %v2910, %v3005
        %v3027 = vadd.f32 %v2911, %v3009
        %v3028 = vadd.f32 %v2912, %v3011
        %v3029 = vadd.f32 %v2913, %v3015
        %v3030 = vadd.f32 %v2914, %v3017
        %v3031 = vadd.f32 %v2915, %v3021
        %v3032 = vadd.f32 %v2916, %v3023
        %v3033 = vmax.f32 %v3025, 0.0
        %v3034 = vmax.f32 %v3026, 0.0
        %v3035 = vmax.f32 %v3027, 0.0
        %v3036 = vmax.f32 %v3028, 0.0
        %v3037 = vmax.f32 %v3029, 0.0
        %v3038 = vmax.f32 %v3030, 0.0
        %v3039 = vmax.f32 %v3031, 0.0
        %v3040 = vmax.f32 %v3032, 0.0
        %3045 = vrot.lane.b32.xlu0 %v3033, 113
        %v3046 = vpop.permute.xlu0 %3045
        %3047 = vrot.lane.b32.xlu0 %v3035, 113
        %v3048 = vpop.permute.xlu0 %3047
        %3049 = vrot.lane.b32.xlu0 %v3037, 113
        %v3050 = vpop.permute.xlu0 %3049
        %3051 = vrot.lane.b32.xlu0 %v3039, 113
        %v3052 = vpop.permute.xlu0 %3051
        %3057 = vst.msk [vmem:[#allocation2] sm:$0xff] %vm229, %v3046
        %3058 = vst.msk [vmem:[#allocation2 + $0x18] sm:$0xff] %vm229, %v3048
        %3059 = vst.msk [vmem:[#allocation2 + $0x30] sm:$0xff] %vm229, %v3050
        %3060 = vst.msk [vmem:[#allocation2 + $0x48] sm:$0xff] %vm229, %v3052
        %3065 = vrot.lane.b32.xlu0 %v3033, 17
        %v3066 = vpop.permute.xlu0 %3065
        %3067 = vrot.lane.b32.xlu0 %v3034, 17
        %v3068 = vpop.permute.xlu0 %3067
        %3069 = vrot.lane.b32.xlu0 %v3035, 17
        %v3070 = vpop.permute.xlu0 %3069
        %3071 = vrot.lane.b32.xlu0 %v3036, 17
        %v3072 = vpop.permute.xlu0 %3071
        %3073 = vrot.lane.b32.xlu0 %v3037, 17
        %v3074 = vpop.permute.xlu0 %3073
        %3075 = vrot.lane.b32.xlu0 %v3038, 17
        %v3076 = vpop.permute.xlu0 %3075
        %3077 = vrot.lane.b32.xlu0 %v3039, 17
        %v3078 = vpop.permute.xlu0 %3077
        %3079 = vrot.lane.b32.xlu0 %v3040, 17
        %v3080 = vpop.permute.xlu0 %3079
        %v3081 = vsel %vm236, %v3066, %v3068
        %v3082 = vsel %vm236, %v3070, %v3072
        %v3083 = vsel %vm236, %v3074, %v3076
        %v3084 = vsel %vm236, %v3078, %v3080
        %3097 = vst.msk [vmem:[#allocation2] sm:$0xff] %vm241, %v3066
        %3098 = vst [vmem:[#allocation2 + $0x8] sm:$0xff] %v3081
        %3099 = vst.msk [vmem:[#allocation2 + $0x10] sm:$0xff] %vm236, %v3068
        %3100 = vst.msk [vmem:[#allocation2 + $0x18] sm:$0xff] %vm241, %v3070
        %3101 = vst [vmem:[#allocation2 + $0x20] sm:$0xff] %v3082
        %3102 = vst.msk [vmem:[#allocation2 + $0x28] sm:$0xff] %vm236, %v3072
        %3103 = vst.msk [vmem:[#allocation2 + $0x30] sm:$0xff] %vm241, %v3074
        %3104 = vst [vmem:[#allocation2 + $0x38] sm:$0xff] %v3083
        %3105 = vst.msk [vmem:[#allocation2 + $0x40] sm:$0xff] %vm236, %v3076
        %3106 = vst.msk [vmem:[#allocation2 + $0x48] sm:$0xff] %vm241, %v3078
        %3107 = vst [vmem:[#allocation2 + $0x50] sm:$0xff] %v3084
        %3108 = vst.msk [vmem:[#allocation2 + $0x58] sm:$0xff] %vm236, %v3080
        %3109 = vrot.lane.b32.xlu0 %v3034, 49
        %v3110 = vpop.permute.xlu0 %3109
        %3111 = vrot.lane.b32.xlu0 %v3036, 49
        %v3112 = vpop.permute.xlu0 %3111
        %3113 = vrot.lane.b32.xlu0 %v3038, 49
        %v3114 = vpop.permute.xlu0 %3113
        %3115 = vrot.lane.b32.xlu0 %v3040, 49
        %v3116 = vpop.permute.xlu0 %3115
        %3121 = vst.msk [vmem:[#allocation2 + $0x10] sm:$0xff] %vm248, %v3110
        %3122 = vst.msk [vmem:[#allocation2 + $0x28] sm:$0xff] %vm248, %v3112
        %3123 = vst.msk [vmem:[#allocation2 + $0x40] sm:$0xff] %vm248, %v3114
        %3124 = vst.msk [vmem:[#allocation2 + $0x58] sm:$0xff] %vm248, %v3116
        %v3125 = vld [vmem:[#allocation2] sm:$0xff]
        %v3126 = vld [vmem:[#allocation2 + $0x8] sm:$0xff]
        %v3127 = vld [vmem:[#allocation2 + $0x18] sm:$0xff]
        %v3128 = vld [vmem:[#allocation2 + $0x20] sm:$0xff]
        %v3129 = vld [vmem:[#allocation2 + $0x30] sm:$0xff]
        %v3130 = vld [vmem:[#allocation2 + $0x38] sm:$0xff]
        %v3131 = vld [vmem:[#allocation2 + $0x48] sm:$0xff]
        %v3132 = vld [vmem:[#allocation2 + $0x50] sm:$0xff]
        %v3133 = vld [vmem:[#allocation2 + $0x10] sm:$0xff]
        %v3134 = vld [vmem:[#allocation2 + $0x28] sm:$0xff]
        %v3135 = vld [vmem:[#allocation2 + $0x40] sm:$0xff]
        %v3136 = vld [vmem:[#allocation2 + $0x58] sm:$0xff]
        %3149 = vrot.lane.b32.xlu0 %v3125, 126
        %v3150 = vpop.permute.xlu0 %3149
        %3151 = vrot.lane.b32.xlu0 %v3126, 126
        %v3152 = vpop.permute.xlu0 %3151
        %3153 = vrot.lane.b32.xlu0 %v3133, 126
        %v3154 = vpop.permute.xlu0 %3153
        %3155 = vrot.lane.b32.xlu0 %v3127, 126
        %v3156 = vpop.permute.xlu0 %3155
        %3157 = vrot.lane.b32.xlu0 %v3128, 126
        %v3158 = vpop.permute.xlu0 %3157
        %3159 = vrot.lane.b32.xlu0 %v3134, 126
        %v3160 = vpop.permute.xlu0 %3159
        %3161 = vrot.lane.b32.xlu0 %v3129, 126
        %v3162 = vpop.permute.xlu0 %3161
        %3163 = vrot.lane.b32.xlu0 %v3130, 126
        %v3164 = vpop.permute.xlu0 %3163
        %3165 = vrot.lane.b32.xlu0 %v3135, 126
        %v3166 = vpop.permute.xlu0 %3165
        %3167 = vrot.lane.b32.xlu0 %v3131, 126
        %v3168 = vpop.permute.xlu0 %3167
        %3169 = vrot.lane.b32.xlu0 %v3132, 126
        %v3170 = vpop.permute.xlu0 %3169
        %3171 = vrot.lane.b32.xlu0 %v3136, 126
        %v3172 = vpop.permute.xlu0 %3171
        %v3173 = vsel %vm293, %v3150, %v3152
        %v3174 = vsel %vm293, %v3152, %v3154
        %v3175 = vsel %vm293, %v3156, %v3158
        %v3176 = vsel %vm293, %v3158, %v3160
        %v3177 = vsel %vm293, %v3162, %v3164
        %v3178 = vsel %vm293, %v3164, %v3166
        %v3179 = vsel %vm293, %v3168, %v3170
        %v3180 = vsel %vm293, %v3170, %v3172
        %v3189 = vsel %vm277, %v3173, %v3125
        %v3190 = vsel %vm278, %v3174, %v3126
        %v3191 = vsel %vm277, %v3175, %v3127
        %v3192 = vsel %vm278, %v3176, %v3128
        %v3193 = vsel %vm277, %v3177, %v3129
        %v3194 = vsel %vm278, %v3178, %v3130
        %v3195 = vsel %vm277, %v3179, %v3131
        %v3196 = vsel %vm278, %v3180, %v3132
        %v3197 = vld [vmem:[%s4] sm:$0xff]
        %s3198 = scalar_lea.vmem %s4, 8
        %v3199 = vld [vmem:[%s3198] sm:$0xff]
        %3200 = vrot.lane.b32.xlu0 %v3125, 127
        %v3201 = vpop.permute.xlu0 %3200
        %3202 = vrot.lane.b32.xlu0 %v3126, 127
        %v3203 = vpop.permute.xlu0 %3202
        %3204 = vrot.lane.b32.xlu0 %v3133, 127
        %v3205 = vpop.permute.xlu0 %3204
        %3206 = vrot.lane.b32.xlu0 %v3127, 127
        %v3207 = vpop.permute.xlu0 %3206
        %3208 = vrot.lane.b32.xlu0 %v3128, 127
        %v3209 = vpop.permute.xlu0 %3208
        %3210 = vrot.lane.b32.xlu0 %v3134, 127
        %v3211 = vpop.permute.xlu0 %3210
        %3212 = vrot.lane.b32.xlu0 %v3129, 127
        %v3213 = vpop.permute.xlu0 %3212
        %3214 = vrot.lane.b32.xlu0 %v3130, 127
        %v3215 = vpop.permute.xlu0 %3214
        %3216 = vrot.lane.b32.xlu0 %v3135, 127
        %v3217 = vpop.permute.xlu0 %3216
        %3218 = vrot.lane.b32.xlu0 %v3131, 127
        %v3219 = vpop.permute.xlu0 %3218
        %3220 = vrot.lane.b32.xlu0 %v3132, 127
        %v3221 = vpop.permute.xlu0 %3220
        %3222 = vrot.lane.b32.xlu0 %v3136, 127
        %v3223 = vpop.permute.xlu0 %3222
        %v3224 = vsel %vm309, %v3201, %v3203
        %v3225 = vsel %vm309, %v3203, %v3205
        %v3226 = vsel %vm309, %v3207, %v3209
        %v3227 = vsel %vm309, %v3209, %v3211
        %v3228 = vsel %vm309, %v3213, %v3215
        %v3229 = vsel %vm309, %v3215, %v3217
        %v3230 = vsel %vm309, %v3219, %v3221
        %v3231 = vsel %vm309, %v3221, %v3223
        %vm3240 = vcmask 261120
        %v3242 = vsel %vm3240, %v3199, 0
        %3244 = vmatprep.subr.mxu0 0.0
        %3245 = vmatpush1.msra.mxu0 0.0
        %3246 = vmatprep.subr.mxu0 0.0
        %3247 = vmatpush1.msra.mxu0 0.0
        %3248 = vmatprep.subr.mxu0 0.0
        %3249 = vmatpush1.msra.mxu0 0.0
        %3250 = vmatprep.subr.mxu0 0.0
        %3251 = vmatpush1.msra.mxu0 0.0
        %3252 = vmatprep.subr.mxu0 0.0
        %3253 = vmatpush1.msra.mxu0 0.0
        %3254 = vmatprep.subr.mxu0 0.0
        %3255 = vmatpush1.msra.mxu0 0.0
        %3256 = vmatprep.subr.mxu0 0.0
        %3257 = vmatpush1.msra.mxu0 0.0
        %3258 = vmatprep.subr.mxu0 0.0
        %3259 = vmatpush1.msra.mxu0 0.0
        %3260 = vmatprep.subr.mxu0 0.0
        %3261 = vmatpush1.msra.mxu0 0.0
        %3262 = vmatprep.subr.mxu0 0.0
        %3263 = vmatpush1.msra.mxu0 0.0
        %3264 = vmatprep.subr.mxu0 0.0
        %3265 = vmatpush1.msra.mxu0 0.0
        %3266 = vmatprep.subr.mxu0 0.0
        %3267 = vmatpush1.msra.mxu0 0.0
        %3268 = vmatprep.subr.mxu0 %v3231
        %3269 = vmatpush1.msra.mxu0 %v3230
        %3270 = vmatprep.subr.mxu0 %v3229
        %3271 = vmatpush1.msra.mxu0 %v3228
        %3272 = vmatprep.subr.mxu0 %v3227
        %3273 = vmatpush1.msra.mxu0 %v3226
        %3274 = vmatprep.subr.mxu0 %v3225
        %3275 = vmatpush1.msra.mxu0 %v3224
        %3276 = vmatprep.subr.mxu0 0.0
        %3277 = vmatpush2.msra.mxu0 0.0
        %3278 = vmatprep.subr.mxu0 0.0
        %3279 = vmatpush2.msra.mxu0 0.0
        %3280 = vmatprep.subr.mxu0 0.0
        %3281 = vmatpush2.msra.mxu0 0.0
        %3282 = vmatprep.subr.mxu0 0.0
        %3283 = vmatpush2.msra.mxu0 0.0
        %3284 = vmatprep.subr.mxu0 0.0
        %3285 = vmatpush2.msra.mxu0 0.0
        %3286 = vmatprep.subr.mxu0 0.0
        %3287 = vmatpush2.msra.mxu0 0.0
        %3288 = vmatprep.subr.mxu0 0.0
        %3289 = vmatpush2.msra.mxu0 0.0
        %3290 = vmatprep.subr.mxu0 0.0
        %3291 = vmatpush2.msra.mxu0 0.0
        %3292 = vmatprep.subr.mxu0 0.0
        %3293 = vmatpush2.msra.mxu0 0.0
        %3294 = vmatprep.subr.mxu0 0.0
        %3295 = vmatpush2.msra.mxu0 0.0
        %3296 = vmatprep.subr.mxu0 0.0
        %3297 = vmatpush2.msra.mxu0 0.0
        %3298 = vmatprep.subr.mxu0 0.0
        %3299 = vmatpush2.msra.mxu0 0.0
        %3300 = vmatprep.subr.mxu0 0.0
        %3301 = vmatpush2.msra.mxu0 0.0
        %3302 = vmatprep.subr.mxu0 0.0
        %3303 = vmatpush2.msra.mxu0 0.0
        %3304 = vmatprep.subr.mxu0 0.0
        %3305 = vmatpush2.msra.mxu0 0.0
        %3306 = vmatprep.subr.mxu0 0.0
        %3307 = vmatpush2.msra.mxu0 0.0
        %3308 = vmatprep.mubr.f32.mxu0 0.0
        %3309 = vmatmul.mubr.f32.gmra.mxu0 %v3242
        %v3310 = vpop.f32.mrf.mxu0
        %v3311 = vadd.f32 0.0, %v3310
        %v3312 = vpop.f32.mrf.mxu0
        %v3313 = vadd.f32 0.0, %v3312
        %3314 = vdwg.mxu0
        %v3316 = vsel %vm3240, %v3197, 0
        %3318 = vmatprep.subr.mxu0 0.0
        %3319 = vmatpush1.msra.mxu0 0.0
        %3320 = vmatprep.subr.mxu0 0.0
        %3321 = vmatpush1.msra.mxu0 0.0
        %3322 = vmatprep.subr.mxu0 0.0
        %3323 = vmatpush1.msra.mxu0 0.0
        %3324 = vmatprep.subr.mxu0 0.0
        %3325 = vmatpush1.msra.mxu0 0.0
        %3326 = vmatprep.subr.mxu0 0.0
        %3327 = vmatpush1.msra.mxu0 0.0
        %3328 = vmatprep.subr.mxu0 0.0
        %3329 = vmatpush1.msra.mxu0 0.0
        %3330 = vmatprep.subr.mxu0 0.0
        %3331 = vmatpush1.msra.mxu0 0.0
        %3332 = vmatprep.subr.mxu0 0.0
        %3333 = vmatpush1.msra.mxu0 0.0
        %3334 = vmatprep.subr.mxu0 0.0
        %3335 = vmatpush1.msra.mxu0 0.0
        %3336 = vmatprep.subr.mxu0 0.0
        %3337 = vmatpush1.msra.mxu0 0.0
        %3338 = vmatprep.subr.mxu0 0.0
        %3339 = vmatpush1.msra.mxu0 0.0
        %3340 = vmatprep.subr.mxu0 0.0
        %3341 = vmatpush1.msra.mxu0 0.0
        %3342 = vmatprep.subr.mxu0 %v3196
        %3343 = vmatpush1.msra.mxu0 %v3195
        %3344 = vmatprep.subr.mxu0 %v3194
        %3345 = vmatpush1.msra.mxu0 %v3193
        %3346 = vmatprep.subr.mxu0 %v3192
        %3347 = vmatpush1.msra.mxu0 %v3191
        %3348 = vmatprep.subr.mxu0 %v3190
        %3349 = vmatpush1.msra.mxu0 %v3189
        %3350 = vmatprep.subr.mxu0 0.0
        %3351 = vmatpush2.msra.mxu0 0.0
        %3352 = vmatprep.subr.mxu0 0.0
        %3353 = vmatpush2.msra.mxu0 0.0
        %3354 = vmatprep.subr.mxu0 0.0
        %3355 = vmatpush2.msra.mxu0 0.0
        %3356 = vmatprep.subr.mxu0 0.0
        %3357 = vmatpush2.msra.mxu0 0.0
        %3358 = vmatprep.subr.mxu0 0.0
        %3359 = vmatpush2.msra.mxu0 0.0
        %3360 = vmatprep.subr.mxu0 0.0
        %3361 = vmatpush2.msra.mxu0 0.0
        %3362 = vmatprep.subr.mxu0 0.0
        %3363 = vmatpush2.msra.mxu0 0.0
        %3364 = vmatprep.subr.mxu0 0.0
        %3365 = vmatpush2.msra.mxu0 0.0
        %3366 = vmatprep.subr.mxu0 0.0
        %3367 = vmatpush2.msra.mxu0 0.0
        %3368 = vmatprep.subr.mxu0 0.0
        %3369 = vmatpush2.msra.mxu0 0.0
        %3370 = vmatprep.subr.mxu0 0.0
        %3371 = vmatpush2.msra.mxu0 0.0
        %3372 = vmatprep.subr.mxu0 0.0
        %3373 = vmatpush2.msra.mxu0 0.0
        %3374 = vmatprep.subr.mxu0 0.0
        %3375 = vmatpush2.msra.mxu0 0.0
        %3376 = vmatprep.subr.mxu0 0.0
        %3377 = vmatpush2.msra.mxu0 0.0
        %3378 = vmatprep.subr.mxu0 0.0
        %3379 = vmatpush2.msra.mxu0 0.0
        %3380 = vmatprep.subr.mxu0 0.0
        %3381 = vmatpush2.msra.mxu0 0.0
        %3382 = vmatprep.mubr.f32.mxu0 0.0
        %3383 = vmatmul.mubr.f32.gmra.mxu0 %v3316
        %v3384 = vpop.f32.mrf.mxu0
        %v3385 = vadd.f32 %v3311, %v3384
        %v3386 = vpop.f32.mrf.mxu0
        %v3387 = vadd.f32 %v3313, %v3386
        %3388 = vdwg.mxu0
        %v3389 = vsel %vm279, %v3125, %v3173
        %v3390 = vsel %vm280, %v3126, %v3174
        %v3391 = vsel %vm279, %v3127, %v3175
        %v3392 = vsel %vm280, %v3128, %v3176
        %v3393 = vsel %vm279, %v3129, %v3177
        %v3394 = vsel %vm280, %v3130, %v3178
        %v3395 = vsel %vm279, %v3131, %v3179
        %v3396 = vsel %vm280, %v3132, %v3180
        %s3397 = scalar_lea.vmem %s4, 16
        %v3398 = vld [vmem:[%s3397] sm:$0xff]
        %v3400 = vsel %vm3240, %v3398, 0
        %3402 = vmatprep.subr.mxu0 0.0
        %3403 = vmatpush1.msra.mxu0 0.0
        %3404 = vmatprep.subr.mxu0 0.0
        %3405 = vmatpush1.msra.mxu0 0.0
        %3406 = vmatprep.subr.mxu0 0.0
        %3407 = vmatpush1.msra.mxu0 0.0
        %3408 = vmatprep.subr.mxu0 0.0
        %3409 = vmatpush1.msra.mxu0 0.0
        %3410 = vmatprep.subr.mxu0 0.0
        %3411 = vmatpush1.msra.mxu0 0.0
        %3412 = vmatprep.subr.mxu0 0.0
        %3413 = vmatpush1.msra.mxu0 0.0
        %3414 = vmatprep.subr.mxu0 0.0
        %3415 = vmatpush1.msra.mxu0 0.0
        %3416 = vmatprep.subr.mxu0 0.0
        %3417 = vmatpush1.msra.mxu0 0.0
        %3418 = vmatprep.subr.mxu0 0.0
        %3419 = vmatpush1.msra.mxu0 0.0
        %3420 = vmatprep.subr.mxu0 0.0
        %3421 = vmatpush1.msra.mxu0 0.0
        %3422 = vmatprep.subr.mxu0 0.0
        %3423 = vmatpush1.msra.mxu0 0.0
        %3424 = vmatprep.subr.mxu0 0.0
        %3425 = vmatpush1.msra.mxu0 0.0
        %3426 = vmatprep.subr.mxu0 %v3396
        %3427 = vmatpush1.msra.mxu0 %v3395
        %3428 = vmatprep.subr.mxu0 %v3394
        %3429 = vmatpush1.msra.mxu0 %v3393
        %3430 = vmatprep.subr.mxu0 %v3392
        %3431 = vmatpush1.msra.mxu0 %v3391
        %3432 = vmatprep.subr.mxu0 %v3390
        %3433 = vmatpush1.msra.mxu0 %v3389
        %3434 = vmatprep.subr.mxu0 0.0
        %3435 = vmatpush2.msra.mxu0 0.0
        %3436 = vmatprep.subr.mxu0 0.0
        %3437 = vmatpush2.msra.mxu0 0.0
        %3438 = vmatprep.subr.mxu0 0.0
        %3439 = vmatpush2.msra.mxu0 0.0
        %3440 = vmatprep.subr.mxu0 0.0
        %3441 = vmatpush2.msra.mxu0 0.0
        %3442 = vmatprep.subr.mxu0 0.0
        %3443 = vmatpush2.msra.mxu0 0.0
        %3444 = vmatprep.subr.mxu0 0.0
        %3445 = vmatpush2.msra.mxu0 0.0
        %3446 = vmatprep.subr.mxu0 0.0
        %3447 = vmatpush2.msra.mxu0 0.0
        %3448 = vmatprep.subr.mxu0 0.0
        %3449 = vmatpush2.msra.mxu0 0.0
        %3450 = vmatprep.subr.mxu0 0.0
        %3451 = vmatpush2.msra.mxu0 0.0
        %3452 = vmatprep.subr.mxu0 0.0
        %3453 = vmatpush2.msra.mxu0 0.0
        %3454 = vmatprep.subr.mxu0 0.0
        %3455 = vmatpush2.msra.mxu0 0.0
        %3456 = vmatprep.subr.mxu0 0.0
        %3457 = vmatpush2.msra.mxu0 0.0
        %3458 = vmatprep.subr.mxu0 0.0
        %3459 = vmatpush2.msra.mxu0 0.0
        %3460 = vmatprep.subr.mxu0 0.0
        %3461 = vmatpush2.msra.mxu0 0.0
        %3462 = vmatprep.subr.mxu0 0.0
        %3463 = vmatpush2.msra.mxu0 0.0
        %3464 = vmatprep.subr.mxu0 0.0
        %3465 = vmatpush2.msra.mxu0 0.0
        %3466 = vmatprep.mubr.f32.mxu0 0.0
        %3467 = vmatmul.mubr.f32.gmra.mxu0 %v3400
        %v3468 = vpop.f32.mrf.mxu0
        %v3469 = vadd.f32 0.0, %v3468
        %v3470 = vpop.f32.mrf.mxu0
        %v3471 = vadd.f32 0.0, %v3470
        %3472 = vdwg.mxu0
        %v3473 = vadd.f32 %v3385, %v3469
        %v3474 = vadd.f32 %v3387, %v3471
        %3475 = vrot.lane.b32.xlu0 %v3125, 110
        %v3476 = vpop.permute.xlu0 %3475
        %3477 = vrot.lane.b32.xlu0 %v3126, 110
        %v3478 = vpop.permute.xlu0 %3477
        %3479 = vrot.lane.b32.xlu0 %v3133, 110
        %v3480 = vpop.permute.xlu0 %3479
        %3481 = vrot.lane.b32.xlu0 %v3127, 110
        %v3482 = vpop.permute.xlu0 %3481
        %3483 = vrot.lane.b32.xlu0 %v3128, 110
        %v3484 = vpop.permute.xlu0 %3483
        %3485 = vrot.lane.b32.xlu0 %v3134, 110
        %v3486 = vpop.permute.xlu0 %3485
        %3487 = vrot.lane.b32.xlu0 %v3129, 110
        %v3488 = vpop.permute.xlu0 %3487
        %3489 = vrot.lane.b32.xlu0 %v3130, 110
        %v3490 = vpop.permute.xlu0 %3489
        %3491 = vrot.lane.b32.xlu0 %v3135, 110
        %v3492 = vpop.permute.xlu0 %3491
        %3493 = vrot.lane.b32.xlu0 %v3131, 110
        %v3494 = vpop.permute.xlu0 %3493
        %3495 = vrot.lane.b32.xlu0 %v3132, 110
        %v3496 = vpop.permute.xlu0 %3495
        %3497 = vrot.lane.b32.xlu0 %v3136, 110
        %v3498 = vpop.permute.xlu0 %3497
        %v3499 = vsel %vm549, %v3476, %v3478
        %v3500 = vsel %vm549, %v3478, %v3480
        %v3501 = vsel %vm549, %v3482, %v3484
        %v3502 = vsel %vm549, %v3484, %v3486
        %v3503 = vsel %vm549, %v3488, %v3490
        %v3504 = vsel %vm549, %v3490, %v3492
        %v3505 = vsel %vm549, %v3494, %v3496
        %v3506 = vsel %vm549, %v3496, %v3498
        %3515 = vrot.lane.b32.xlu0 %v3125, 112
        %v3516 = vpop.permute.xlu0 %3515
        %3517 = vrot.lane.b32.xlu0 %v3126, 112
        %v3518 = vpop.permute.xlu0 %3517
        %3519 = vrot.lane.b32.xlu0 %v3133, 112
        %v3520 = vpop.permute.xlu0 %3519
        %3521 = vrot.lane.b32.xlu0 %v3127, 112
        %v3522 = vpop.permute.xlu0 %3521
        %3523 = vrot.lane.b32.xlu0 %v3128, 112
        %v3524 = vpop.permute.xlu0 %3523
        %3525 = vrot.lane.b32.xlu0 %v3134, 112
        %v3526 = vpop.permute.xlu0 %3525
        %3527 = vrot.lane.b32.xlu0 %v3129, 112
        %v3528 = vpop.permute.xlu0 %3527
        %3529 = vrot.lane.b32.xlu0 %v3130, 112
        %v3530 = vpop.permute.xlu0 %3529
        %3531 = vrot.lane.b32.xlu0 %v3135, 112
        %v3532 = vpop.permute.xlu0 %3531
        %3533 = vrot.lane.b32.xlu0 %v3131, 112
        %v3534 = vpop.permute.xlu0 %3533
        %3535 = vrot.lane.b32.xlu0 %v3132, 112
        %v3536 = vpop.permute.xlu0 %3535
        %3537 = vrot.lane.b32.xlu0 %v3136, 112
        %v3538 = vpop.permute.xlu0 %3537
        %v3539 = vsel %vm560, %v3516, %v3518
        %v3540 = vsel %vm560, %v3518, %v3520
        %v3541 = vsel %vm560, %v3522, %v3524
        %v3542 = vsel %vm560, %v3524, %v3526
        %v3543 = vsel %vm560, %v3528, %v3530
        %v3544 = vsel %vm560, %v3530, %v3532
        %v3545 = vsel %vm560, %v3534, %v3536
        %v3546 = vsel %vm560, %v3536, %v3538
        %v3555 = vsel %vm277, %v3499, %v3539
        %v3556 = vsel %vm278, %v3500, %v3540
        %v3557 = vsel %vm277, %v3501, %v3541
        %v3558 = vsel %vm278, %v3502, %v3542
        %v3559 = vsel %vm277, %v3503, %v3543
        %v3560 = vsel %vm278, %v3504, %v3544
        %v3561 = vsel %vm277, %v3505, %v3545
        %v3562 = vsel %vm278, %v3506, %v3546
        %s3563 = scalar_lea.vmem %s4, 24
        %v3564 = vld [vmem:[%s3563] sm:$0xff]
        %v3566 = vsel %vm3240, %v3564, 0
        %3568 = vmatprep.subr.mxu0 0.0
        %3569 = vmatpush1.msra.mxu0 0.0
        %3570 = vmatprep.subr.mxu0 0.0
        %3571 = vmatpush1.msra.mxu0 0.0
        %3572 = vmatprep.subr.mxu0 0.0
        %3573 = vmatpush1.msra.mxu0 0.0
        %3574 = vmatprep.subr.mxu0 0.0
        %3575 = vmatpush1.msra.mxu0 0.0
        %3576 = vmatprep.subr.mxu0 0.0
        %3577 = vmatpush1.msra.mxu0 0.0
        %3578 = vmatprep.subr.mxu0 0.0
        %3579 = vmatpush1.msra.mxu0 0.0
        %3580 = vmatprep.subr.mxu0 0.0
        %3581 = vmatpush1.msra.mxu0 0.0
        %3582 = vmatprep.subr.mxu0 0.0
        %3583 = vmatpush1.msra.mxu0 0.0
        %3584 = vmatprep.subr.mxu0 0.0
        %3585 = vmatpush1.msra.mxu0 0.0
        %3586 = vmatprep.subr.mxu0 0.0
        %3587 = vmatpush1.msra.mxu0 0.0
        %3588 = vmatprep.subr.mxu0 0.0
        %3589 = vmatpush1.msra.mxu0 0.0
        %3590 = vmatprep.subr.mxu0 0.0
        %3591 = vmatpush1.msra.mxu0 0.0
        %3592 = vmatprep.subr.mxu0 %v3562
        %3593 = vmatpush1.msra.mxu0 %v3561
        %3594 = vmatprep.subr.mxu0 %v3560
        %3595 = vmatpush1.msra.mxu0 %v3559
        %3596 = vmatprep.subr.mxu0 %v3558
        %3597 = vmatpush1.msra.mxu0 %v3557
        %3598 = vmatprep.subr.mxu0 %v3556
        %3599 = vmatpush1.msra.mxu0 %v3555
        %3600 = vmatprep.subr.mxu0 0.0
        %3601 = vmatpush2.msra.mxu0 0.0
        %3602 = vmatprep.subr.mxu0 0.0
        %3603 = vmatpush2.msra.mxu0 0.0
        %3604 = vmatprep.subr.mxu0 0.0
        %3605 = vmatpush2.msra.mxu0 0.0
        %3606 = vmatprep.subr.mxu0 0.0
        %3607 = vmatpush2.msra.mxu0 0.0
        %3608 = vmatprep.subr.mxu0 0.0
        %3609 = vmatpush2.msra.mxu0 0.0
        %3610 = vmatprep.subr.mxu0 0.0
        %3611 = vmatpush2.msra.mxu0 0.0
        %3612 = vmatprep.subr.mxu0 0.0
        %3613 = vmatpush2.msra.mxu0 0.0
        %3614 = vmatprep.subr.mxu0 0.0
        %3615 = vmatpush2.msra.mxu0 0.0
        %3616 = vmatprep.subr.mxu0 0.0
        %3617 = vmatpush2.msra.mxu0 0.0
        %3618 = vmatprep.subr.mxu0 0.0
        %3619 = vmatpush2.msra.mxu0 0.0
        %3620 = vmatprep.subr.mxu0 0.0
        %3621 = vmatpush2.msra.mxu0 0.0
        %3622 = vmatprep.subr.mxu0 0.0
        %3623 = vmatpush2.msra.mxu0 0.0
        %3624 = vmatprep.subr.mxu0 0.0
        %3625 = vmatpush2.msra.mxu0 0.0
        %3626 = vmatprep.subr.mxu0 0.0
        %3627 = vmatpush2.msra.mxu0 0.0
        %3628 = vmatprep.subr.mxu0 0.0
        %3629 = vmatpush2.msra.mxu0 0.0
        %3630 = vmatprep.subr.mxu0 0.0
        %3631 = vmatpush2.msra.mxu0 0.0
        %3632 = vmatprep.mubr.f32.mxu0 0.0
        %3633 = vmatmul.mubr.f32.gmra.mxu0 %v3566
        %v3634 = vpop.f32.mrf.mxu0
        %v3635 = vadd.f32 0.0, %v3634
        %v3636 = vpop.f32.mrf.mxu0
        %v3637 = vadd.f32 0.0, %v3636
        %3638 = vdwg.mxu0
        %v3639 = vadd.f32 %v3473, %v3635
        %v3640 = vadd.f32 %v3474, %v3637
        %s3641 = scalar_lea.vmem %s4, 32
        %v3642 = vld [vmem:[%s3641] sm:$0xff]
        %3643 = vrot.lane.b32.xlu0 %v3125, 111
        %v3644 = vpop.permute.xlu0 %3643
        %3645 = vrot.lane.b32.xlu0 %v3126, 111
        %v3646 = vpop.permute.xlu0 %3645
        %3647 = vrot.lane.b32.xlu0 %v3133, 111
        %v3648 = vpop.permute.xlu0 %3647
        %3649 = vrot.lane.b32.xlu0 %v3127, 111
        %v3650 = vpop.permute.xlu0 %3649
        %3651 = vrot.lane.b32.xlu0 %v3128, 111
        %v3652 = vpop.permute.xlu0 %3651
        %3653 = vrot.lane.b32.xlu0 %v3134, 111
        %v3654 = vpop.permute.xlu0 %3653
        %3655 = vrot.lane.b32.xlu0 %v3129, 111
        %v3656 = vpop.permute.xlu0 %3655
        %3657 = vrot.lane.b32.xlu0 %v3130, 111
        %v3658 = vpop.permute.xlu0 %3657
        %3659 = vrot.lane.b32.xlu0 %v3135, 111
        %v3660 = vpop.permute.xlu0 %3659
        %3661 = vrot.lane.b32.xlu0 %v3131, 111
        %v3662 = vpop.permute.xlu0 %3661
        %3663 = vrot.lane.b32.xlu0 %v3132, 111
        %v3664 = vpop.permute.xlu0 %3663
        %3665 = vrot.lane.b32.xlu0 %v3136, 111
        %v3666 = vpop.permute.xlu0 %3665
        %v3667 = vsel %vm653, %v3644, %v3646
        %v3668 = vsel %vm653, %v3646, %v3648
        %v3669 = vsel %vm653, %v3650, %v3652
        %v3670 = vsel %vm653, %v3652, %v3654
        %v3671 = vsel %vm653, %v3656, %v3658
        %v3672 = vsel %vm653, %v3658, %v3660
        %v3673 = vsel %vm653, %v3662, %v3664
        %v3674 = vsel %vm653, %v3664, %v3666
        %v3684 = vsel %vm3240, %v3642, 0
        %3686 = vmatprep.subr.mxu0 0.0
        %3687 = vmatpush1.msra.mxu0 0.0
        %3688 = vmatprep.subr.mxu0 0.0
        %3689 = vmatpush1.msra.mxu0 0.0
        %3690 = vmatprep.subr.mxu0 0.0
        %3691 = vmatpush1.msra.mxu0 0.0
        %3692 = vmatprep.subr.mxu0 0.0
        %3693 = vmatpush1.msra.mxu0 0.0
        %3694 = vmatprep.subr.mxu0 0.0
        %3695 = vmatpush1.msra.mxu0 0.0
        %3696 = vmatprep.subr.mxu0 0.0
        %3697 = vmatpush1.msra.mxu0 0.0
        %3698 = vmatprep.subr.mxu0 0.0
        %3699 = vmatpush1.msra.mxu0 0.0
        %3700 = vmatprep.subr.mxu0 0.0
        %3701 = vmatpush1.msra.mxu0 0.0
        %3702 = vmatprep.subr.mxu0 0.0
        %3703 = vmatpush1.msra.mxu0 0.0
        %3704 = vmatprep.subr.mxu0 0.0
        %3705 = vmatpush1.msra.mxu0 0.0
        %3706 = vmatprep.subr.mxu0 0.0
        %3707 = vmatpush1.msra.mxu0 0.0
        %3708 = vmatprep.subr.mxu0 0.0
        %3709 = vmatpush1.msra.mxu0 0.0
        %3710 = vmatprep.subr.mxu0 %v3674
        %3711 = vmatpush1.msra.mxu0 %v3673
        %3712 = vmatprep.subr.mxu0 %v3672
        %3713 = vmatpush1.msra.mxu0 %v3671
        %3714 = vmatprep.subr.mxu0 %v3670
        %3715 = vmatpush1.msra.mxu0 %v3669
        %3716 = vmatprep.subr.mxu0 %v3668
        %3717 = vmatpush1.msra.mxu0 %v3667
        %3718 = vmatprep.subr.mxu0 0.0
        %3719 = vmatpush2.msra.mxu0 0.0
        %3720 = vmatprep.subr.mxu0 0.0
        %3721 = vmatpush2.msra.mxu0 0.0
        %3722 = vmatprep.subr.mxu0 0.0
        %3723 = vmatpush2.msra.mxu0 0.0
        %3724 = vmatprep.subr.mxu0 0.0
        %3725 = vmatpush2.msra.mxu0 0.0
        %3726 = vmatprep.subr.mxu0 0.0
        %3727 = vmatpush2.msra.mxu0 0.0
        %3728 = vmatprep.subr.mxu0 0.0
        %3729 = vmatpush2.msra.mxu0 0.0
        %3730 = vmatprep.subr.mxu0 0.0
        %3731 = vmatpush2.msra.mxu0 0.0
        %3732 = vmatprep.subr.mxu0 0.0
        %3733 = vmatpush2.msra.mxu0 0.0
        %3734 = vmatprep.subr.mxu0 0.0
        %3735 = vmatpush2.msra.mxu0 0.0
        %3736 = vmatprep.subr.mxu0 0.0
        %3737 = vmatpush2.msra.mxu0 0.0
        %3738 = vmatprep.subr.mxu0 0.0
        %3739 = vmatpush2.msra.mxu0 0.0
        %3740 = vmatprep.subr.mxu0 0.0
        %3741 = vmatpush2.msra.mxu0 0.0
        %3742 = vmatprep.subr.mxu0 0.0
        %3743 = vmatpush2.msra.mxu0 0.0
        %3744 = vmatprep.subr.mxu0 0.0
        %3745 = vmatpush2.msra.mxu0 0.0
        %3746 = vmatprep.subr.mxu0 0.0
        %3747 = vmatpush2.msra.mxu0 0.0
        %3748 = vmatprep.subr.mxu0 0.0
        %3749 = vmatpush2.msra.mxu0 0.0
        %3750 = vmatprep.mubr.f32.mxu0 0.0
        %3751 = vmatmul.mubr.f32.gmra.mxu0 %v3684
        %v3752 = vpop.f32.mrf.mxu0
        %v3753 = vadd.f32 0.0, %v3752
        %v3754 = vpop.f32.mrf.mxu0
        %v3755 = vadd.f32 0.0, %v3754
        %3756 = vdwg.mxu0
        %v3757 = vadd.f32 %v3639, %v3753
        %v3758 = vadd.f32 %v3640, %v3755
        %v3759 = vsel %vm279, %v3539, %v3499
        %v3760 = vsel %vm280, %v3540, %v3500
        %v3761 = vsel %vm279, %v3541, %v3501
        %v3762 = vsel %vm280, %v3542, %v3502
        %v3763 = vsel %vm279, %v3543, %v3503
        %v3764 = vsel %vm280, %v3544, %v3504
        %v3765 = vsel %vm279, %v3545, %v3505
        %v3766 = vsel %vm280, %v3546, %v3506
        %s3767 = scalar_lea.vmem %s4, 40
        %v3768 = vld [vmem:[%s3767] sm:$0xff]
        %v3770 = vsel %vm3240, %v3768, 0
        %3772 = vmatprep.subr.mxu0 0.0
        %3773 = vmatpush1.msra.mxu0 0.0
        %3774 = vmatprep.subr.mxu0 0.0
        %3775 = vmatpush1.msra.mxu0 0.0
        %3776 = vmatprep.subr.mxu0 0.0
        %3777 = vmatpush1.msra.mxu0 0.0
        %3778 = vmatprep.subr.mxu0 0.0
        %3779 = vmatpush1.msra.mxu0 0.0
        %3780 = vmatprep.subr.mxu0 0.0
        %3781 = vmatpush1.msra.mxu0 0.0
        %3782 = vmatprep.subr.mxu0 0.0
        %3783 = vmatpush1.msra.mxu0 0.0
        %3784 = vmatprep.subr.mxu0 0.0
        %3785 = vmatpush1.msra.mxu0 0.0
        %3786 = vmatprep.subr.mxu0 0.0
        %3787 = vmatpush1.msra.mxu0 0.0
        %3788 = vmatprep.subr.mxu0 0.0
        %3789 = vmatpush1.msra.mxu0 0.0
        %3790 = vmatprep.subr.mxu0 0.0
        %3791 = vmatpush1.msra.mxu0 0.0
        %3792 = vmatprep.subr.mxu0 0.0
        %3793 = vmatpush1.msra.mxu0 0.0
        %3794 = vmatprep.subr.mxu0 0.0
        %3795 = vmatpush1.msra.mxu0 0.0
        %3796 = vmatprep.subr.mxu0 %v3766
        %3797 = vmatpush1.msra.mxu0 %v3765
        %3798 = vmatprep.subr.mxu0 %v3764
        %3799 = vmatpush1.msra.mxu0 %v3763
        %3800 = vmatprep.subr.mxu0 %v3762
        %3801 = vmatpush1.msra.mxu0 %v3761
        %3802 = vmatprep.subr.mxu0 %v3760
        %3803 = vmatpush1.msra.mxu0 %v3759
        %3804 = vmatprep.subr.mxu0 0.0
        %3805 = vmatpush2.msra.mxu0 0.0
        %3806 = vmatprep.subr.mxu0 0.0
        %3807 = vmatpush2.msra.mxu0 0.0
        %3808 = vmatprep.subr.mxu0 0.0
        %3809 = vmatpush2.msra.mxu0 0.0
        %3810 = vmatprep.subr.mxu0 0.0
        %3811 = vmatpush2.msra.mxu0 0.0
        %3812 = vmatprep.subr.mxu0 0.0
        %3813 = vmatpush2.msra.mxu0 0.0
        %3814 = vmatprep.subr.mxu0 0.0
        %3815 = vmatpush2.msra.mxu0 0.0
        %3816 = vmatprep.subr.mxu0 0.0
        %3817 = vmatpush2.msra.mxu0 0.0
        %3818 = vmatprep.subr.mxu0 0.0
        %3819 = vmatpush2.msra.mxu0 0.0
        %3820 = vmatprep.subr.mxu0 0.0
        %3821 = vmatpush2.msra.mxu0 0.0
        %3822 = vmatprep.subr.mxu0 0.0
        %3823 = vmatpush2.msra.mxu0 0.0
        %3824 = vmatprep.subr.mxu0 0.0
        %3825 = vmatpush2.msra.mxu0 0.0
        %3826 = vmatprep.subr.mxu0 0.0
        %3827 = vmatpush2.msra.mxu0 0.0
        %3828 = vmatprep.subr.mxu0 0.0
        %3829 = vmatpush2.msra.mxu0 0.0
        %3830 = vmatprep.subr.mxu0 0.0
        %3831 = vmatpush2.msra.mxu0 0.0
        %3832 = vmatprep.subr.mxu0 0.0
        %3833 = vmatpush2.msra.mxu0 0.0
        %3834 = vmatprep.subr.mxu0 0.0
        %3835 = vmatpush2.msra.mxu0 0.0
        %3836 = vmatprep.mubr.f32.mxu0 0.0
        %3837 = vmatmul.mubr.f32.gmra.mxu0 %v3770
        %v3838 = vpop.f32.mrf.mxu0
        %v3839 = vadd.f32 0.0, %v3838
        %v3840 = vpop.f32.mrf.mxu0
        %v3841 = vadd.f32 0.0, %v3840
        %3842 = vdwg.mxu0
        %v3843 = vadd.f32 %v3757, %v3839
        %v3844 = vadd.f32 %v3758, %v3841
        %3845 = vrot.lane.b32.xlu0 %v3125, 94
        %v3846 = vpop.permute.xlu0 %3845
        %3847 = vrot.lane.b32.xlu0 %v3126, 94
        %v3848 = vpop.permute.xlu0 %3847
        %3849 = vrot.lane.b32.xlu0 %v3133, 94
        %v3850 = vpop.permute.xlu0 %3849
        %3851 = vrot.lane.b32.xlu0 %v3127, 94
        %v3852 = vpop.permute.xlu0 %3851
        %3853 = vrot.lane.b32.xlu0 %v3128, 94
        %v3854 = vpop.permute.xlu0 %3853
        %3855 = vrot.lane.b32.xlu0 %v3134, 94
        %v3856 = vpop.permute.xlu0 %3855
        %3857 = vrot.lane.b32.xlu0 %v3129, 94
        %v3858 = vpop.permute.xlu0 %3857
        %3859 = vrot.lane.b32.xlu0 %v3130, 94
        %v3860 = vpop.permute.xlu0 %3859
        %3861 = vrot.lane.b32.xlu0 %v3135, 94
        %v3862 = vpop.permute.xlu0 %3861
        %3863 = vrot.lane.b32.xlu0 %v3131, 94
        %v3864 = vpop.permute.xlu0 %3863
        %3865 = vrot.lane.b32.xlu0 %v3132, 94
        %v3866 = vpop.permute.xlu0 %3865
        %3867 = vrot.lane.b32.xlu0 %v3136, 94
        %v3868 = vpop.permute.xlu0 %3867
        %v3869 = vsel %vm820, %v3846, %v3848
        %v3870 = vsel %vm820, %v3848, %v3850
        %v3871 = vsel %vm820, %v3852, %v3854
        %v3872 = vsel %vm820, %v3854, %v3856
        %v3873 = vsel %vm820, %v3858, %v3860
        %v3874 = vsel %vm820, %v3860, %v3862
        %v3875 = vsel %vm820, %v3864, %v3866
        %v3876 = vsel %vm820, %v3866, %v3868
        %3885 = vrot.lane.b32.xlu0 %v3125, 96
        %v3886 = vpop.permute.xlu0 %3885
        %3887 = vrot.lane.b32.xlu0 %v3126, 96
        %v3888 = vpop.permute.xlu0 %3887
        %3889 = vrot.lane.b32.xlu0 %v3133, 96
        %v3890 = vpop.permute.xlu0 %3889
        %3891 = vrot.lane.b32.xlu0 %v3127, 96
        %v3892 = vpop.permute.xlu0 %3891
        %3893 = vrot.lane.b32.xlu0 %v3128, 96
        %v3894 = vpop.permute.xlu0 %3893
        %3895 = vrot.lane.b32.xlu0 %v3134, 96
        %v3896 = vpop.permute.xlu0 %3895
        %3897 = vrot.lane.b32.xlu0 %v3129, 96
        %v3898 = vpop.permute.xlu0 %3897
        %3899 = vrot.lane.b32.xlu0 %v3130, 96
        %v3900 = vpop.permute.xlu0 %3899
        %3901 = vrot.lane.b32.xlu0 %v3135, 96
        %v3902 = vpop.permute.xlu0 %3901
        %3903 = vrot.lane.b32.xlu0 %v3131, 96
        %v3904 = vpop.permute.xlu0 %3903
        %3905 = vrot.lane.b32.xlu0 %v3132, 96
        %v3906 = vpop.permute.xlu0 %3905
        %3907 = vrot.lane.b32.xlu0 %v3136, 96
        %v3908 = vpop.permute.xlu0 %3907
        %v3909 = vsel %vm831, %v3886, %v3888
        %v3910 = vsel %vm831, %v3888, %v3890
        %v3911 = vsel %vm831, %v3892, %v3894
        %v3912 = vsel %vm831, %v3894, %v3896
        %v3913 = vsel %vm831, %v3898, %v3900
        %v3914 = vsel %vm831, %v3900, %v3902
        %v3915 = vsel %vm831, %v3904, %v3906
        %v3916 = vsel %vm831, %v3906, %v3908
        %v3925 = vsel %vm277, %v3869, %v3909
        %v3926 = vsel %vm278, %v3870, %v3910
        %v3927 = vsel %vm277, %v3871, %v3911
        %v3928 = vsel %vm278, %v3872, %v3912
        %v3929 = vsel %vm277, %v3873, %v3913
        %v3930 = vsel %vm278, %v3874, %v3914
        %v3931 = vsel %vm277, %v3875, %v3915
        %v3932 = vsel %vm278, %v3876, %v3916
        %s3933 = scalar_lea.vmem %s4, 48
        %v3934 = vld [vmem:[%s3933] sm:$0xff]
        %v3936 = vsel %vm3240, %v3934, 0
        %3938 = vmatprep.subr.mxu0 0.0
        %3939 = vmatpush1.msra.mxu0 0.0
        %3940 = vmatprep.subr.mxu0 0.0
        %3941 = vmatpush1.msra.mxu0 0.0
        %3942 = vmatprep.subr.mxu0 0.0
        %3943 = vmatpush1.msra.mxu0 0.0
        %3944 = vmatprep.subr.mxu0 0.0
        %3945 = vmatpush1.msra.mxu0 0.0
        %3946 = vmatprep.subr.mxu0 0.0
        %3947 = vmatpush1.msra.mxu0 0.0
        %3948 = vmatprep.subr.mxu0 0.0
        %3949 = vmatpush1.msra.mxu0 0.0
        %3950 = vmatprep.subr.mxu0 0.0
        %3951 = vmatpush1.msra.mxu0 0.0
        %3952 = vmatprep.subr.mxu0 0.0
        %3953 = vmatpush1.msra.mxu0 0.0
        %3954 = vmatprep.subr.mxu0 0.0
        %3955 = vmatpush1.msra.mxu0 0.0
        %3956 = vmatprep.subr.mxu0 0.0
        %3957 = vmatpush1.msra.mxu0 0.0
        %3958 = vmatprep.subr.mxu0 0.0
        %3959 = vmatpush1.msra.mxu0 0.0
        %3960 = vmatprep.subr.mxu0 0.0
        %3961 = vmatpush1.msra.mxu0 0.0
        %3962 = vmatprep.subr.mxu0 %v3932
        %3963 = vmatpush1.msra.mxu0 %v3931
        %3964 = vmatprep.subr.mxu0 %v3930
        %3965 = vmatpush1.msra.mxu0 %v3929
        %3966 = vmatprep.subr.mxu0 %v3928
        %3967 = vmatpush1.msra.mxu0 %v3927
        %3968 = vmatprep.subr.mxu0 %v3926
        %3969 = vmatpush1.msra.mxu0 %v3925
        %3970 = vmatprep.subr.mxu0 0.0
        %3971 = vmatpush2.msra.mxu0 0.0
        %3972 = vmatprep.subr.mxu0 0.0
        %3973 = vmatpush2.msra.mxu0 0.0
        %3974 = vmatprep.subr.mxu0 0.0
        %3975 = vmatpush2.msra.mxu0 0.0
        %3976 = vmatprep.subr.mxu0 0.0
        %3977 = vmatpush2.msra.mxu0 0.0
        %3978 = vmatprep.subr.mxu0 0.0
        %3979 = vmatpush2.msra.mxu0 0.0
        %3980 = vmatprep.subr.mxu0 0.0
        %3981 = vmatpush2.msra.mxu0 0.0
        %3982 = vmatprep.subr.mxu0 0.0
        %3983 = vmatpush2.msra.mxu0 0.0
        %3984 = vmatprep.subr.mxu0 0.0
        %3985 = vmatpush2.msra.mxu0 0.0
        %3986 = vmatprep.subr.mxu0 0.0
        %3987 = vmatpush2.msra.mxu0 0.0
        %3988 = vmatprep.subr.mxu0 0.0
        %3989 = vmatpush2.msra.mxu0 0.0
        %3990 = vmatprep.subr.mxu0 0.0
        %3991 = vmatpush2.msra.mxu0 0.0
        %3992 = vmatprep.subr.mxu0 0.0
        %3993 = vmatpush2.msra.mxu0 0.0
        %3994 = vmatprep.subr.mxu0 0.0
        %3995 = vmatpush2.msra.mxu0 0.0
        %3996 = vmatprep.subr.mxu0 0.0
        %3997 = vmatpush2.msra.mxu0 0.0
        %3998 = vmatprep.subr.mxu0 0.0
        %3999 = vmatpush2.msra.mxu0 0.0
        %4000 = vmatprep.subr.mxu0 0.0
        %4001 = vmatpush2.msra.mxu0 0.0
        %4002 = vmatprep.mubr.f32.mxu0 0.0
        %4003 = vmatmul.mubr.f32.gmra.mxu0 %v3936
        %v4004 = vpop.f32.mrf.mxu0
        %v4005 = vadd.f32 0.0, %v4004
        %v4006 = vpop.f32.mrf.mxu0
        %v4007 = vadd.f32 0.0, %v4006
        %4008 = vdwg.mxu0
        %v4009 = vadd.f32 %v3843, %v4005
        %v4010 = vadd.f32 %v3844, %v4007
        %s4011 = scalar_lea.vmem %s4, 56
        %v4012 = vld [vmem:[%s4011] sm:$0xff]
        %4013 = vrot.lane.b32.xlu0 %v3125, 95
        %v4014 = vpop.permute.xlu0 %4013
        %4015 = vrot.lane.b32.xlu0 %v3126, 95
        %v4016 = vpop.permute.xlu0 %4015
        %4017 = vrot.lane.b32.xlu0 %v3133, 95
        %v4018 = vpop.permute.xlu0 %4017
        %4019 = vrot.lane.b32.xlu0 %v3127, 95
        %v4020 = vpop.permute.xlu0 %4019
        %4021 = vrot.lane.b32.xlu0 %v3128, 95
        %v4022 = vpop.permute.xlu0 %4021
        %4023 = vrot.lane.b32.xlu0 %v3134, 95
        %v4024 = vpop.permute.xlu0 %4023
        %4025 = vrot.lane.b32.xlu0 %v3129, 95
        %v4026 = vpop.permute.xlu0 %4025
        %4027 = vrot.lane.b32.xlu0 %v3130, 95
        %v4028 = vpop.permute.xlu0 %4027
        %4029 = vrot.lane.b32.xlu0 %v3135, 95
        %v4030 = vpop.permute.xlu0 %4029
        %4031 = vrot.lane.b32.xlu0 %v3131, 95
        %v4032 = vpop.permute.xlu0 %4031
        %4033 = vrot.lane.b32.xlu0 %v3132, 95
        %v4034 = vpop.permute.xlu0 %4033
        %4035 = vrot.lane.b32.xlu0 %v3136, 95
        %v4036 = vpop.permute.xlu0 %4035
        %v4037 = vsel %vm924, %v4014, %v4016
        %v4038 = vsel %vm924, %v4016, %v4018
        %v4039 = vsel %vm924, %v4020, %v4022
        %v4040 = vsel %vm924, %v4022, %v4024
        %v4041 = vsel %vm924, %v4026, %v4028
        %v4042 = vsel %vm924, %v4028, %v4030
        %v4043 = vsel %vm924, %v4032, %v4034
        %v4044 = vsel %vm924, %v4034, %v4036
        %v4054 = vsel %vm3240, %v4012, 0
        %4056 = vmatprep.subr.mxu0 0.0
        %4057 = vmatpush1.msra.mxu0 0.0
        %4058 = vmatprep.subr.mxu0 0.0
        %4059 = vmatpush1.msra.mxu0 0.0
        %4060 = vmatprep.subr.mxu0 0.0
        %4061 = vmatpush1.msra.mxu0 0.0
        %4062 = vmatprep.subr.mxu0 0.0
        %4063 = vmatpush1.msra.mxu0 0.0
        %4064 = vmatprep.subr.mxu0 0.0
        %4065 = vmatpush1.msra.mxu0 0.0
        %4066 = vmatprep.subr.mxu0 0.0
        %4067 = vmatpush1.msra.mxu0 0.0
        %4068 = vmatprep.subr.mxu0 0.0
        %4069 = vmatpush1.msra.mxu0 0.0
        %4070 = vmatprep.subr.mxu0 0.0
        %4071 = vmatpush1.msra.mxu0 0.0
        %4072 = vmatprep.subr.mxu0 0.0
        %4073 = vmatpush1.msra.mxu0 0.0
        %4074 = vmatprep.subr.mxu0 0.0
        %4075 = vmatpush1.msra.mxu0 0.0
        %4076 = vmatprep.subr.mxu0 0.0
        %4077 = vmatpush1.msra.mxu0 0.0
        %4078 = vmatprep.subr.mxu0 0.0
        %4079 = vmatpush1.msra.mxu0 0.0
        %4080 = vmatprep.subr.mxu0 %v4044
        %4081 = vmatpush1.msra.mxu0 %v4043
        %4082 = vmatprep.subr.mxu0 %v4042
        %4083 = vmatpush1.msra.mxu0 %v4041
        %4084 = vmatprep.subr.mxu0 %v4040
        %4085 = vmatpush1.msra.mxu0 %v4039
        %4086 = vmatprep.subr.mxu0 %v4038
        %4087 = vmatpush1.msra.mxu0 %v4037
        %4088 = vmatprep.subr.mxu0 0.0
        %4089 = vmatpush2.msra.mxu0 0.0
        %4090 = vmatprep.subr.mxu0 0.0
        %4091 = vmatpush2.msra.mxu0 0.0
        %4092 = vmatprep.subr.mxu0 0.0
        %4093 = vmatpush2.msra.mxu0 0.0
        %4094 = vmatprep.subr.mxu0 0.0
        %4095 = vmatpush2.msra.mxu0 0.0
        %4096 = vmatprep.subr.mxu0 0.0
        %4097 = vmatpush2.msra.mxu0 0.0
        %4098 = vmatprep.subr.mxu0 0.0
        %4099 = vmatpush2.msra.mxu0 0.0
        %4100 = vmatprep.subr.mxu0 0.0
        %4101 = vmatpush2.msra.mxu0 0.0
        %4102 = vmatprep.subr.mxu0 0.0
        %4103 = vmatpush2.msra.mxu0 0.0
        %4104 = vmatprep.subr.mxu0 0.0
        %4105 = vmatpush2.msra.mxu0 0.0
        %4106 = vmatprep.subr.mxu0 0.0
        %4107 = vmatpush2.msra.mxu0 0.0
        %4108 = vmatprep.subr.mxu0 0.0
        %4109 = vmatpush2.msra.mxu0 0.0
        %4110 = vmatprep.subr.mxu0 0.0
        %4111 = vmatpush2.msra.mxu0 0.0
        %4112 = vmatprep.subr.mxu0 0.0
        %4113 = vmatpush2.msra.mxu0 0.0
        %4114 = vmatprep.subr.mxu0 0.0
        %4115 = vmatpush2.msra.mxu0 0.0
        %4116 = vmatprep.subr.mxu0 0.0
        %4117 = vmatpush2.msra.mxu0 0.0
        %4118 = vmatprep.subr.mxu0 0.0
        %4119 = vmatpush2.msra.mxu0 0.0
        %4120 = vmatprep.mubr.f32.mxu0 0.0
        %4121 = vmatmul.mubr.f32.gmra.mxu0 %v4054
        %v4122 = vpop.f32.mrf.mxu0
        %v4123 = vadd.f32 0.0, %v4122
        %v4124 = vpop.f32.mrf.mxu0
        %v4125 = vadd.f32 0.0, %v4124
        %4126 = vdwg.mxu0
        %v4127 = vadd.f32 %v4009, %v4123
        %v4128 = vadd.f32 %v4010, %v4125
        %v4129 = vsel %vm279, %v3909, %v3869
        %v4130 = vsel %vm280, %v3910, %v3870
        %v4131 = vsel %vm279, %v3911, %v3871
        %v4132 = vsel %vm280, %v3912, %v3872
        %v4133 = vsel %vm279, %v3913, %v3873
        %v4134 = vsel %vm280, %v3914, %v3874
        %v4135 = vsel %vm279, %v3915, %v3875
        %v4136 = vsel %vm280, %v3916, %v3876
        %s4137 = scalar_lea.vmem %s4, 64
        %v4138 = vld [vmem:[%s4137] sm:$0xff]
        %v4140 = vsel %vm3240, %v4138, 0
        %4142 = vmatprep.subr.mxu0 0.0
        %4143 = vmatpush1.msra.mxu0 0.0
        %4144 = vmatprep.subr.mxu0 0.0
        %4145 = vmatpush1.msra.mxu0 0.0
        %4146 = vmatprep.subr.mxu0 0.0
        %4147 = vmatpush1.msra.mxu0 0.0
        %4148 = vmatprep.subr.mxu0 0.0
        %4149 = vmatpush1.msra.mxu0 0.0
        %4150 = vmatprep.subr.mxu0 0.0
        %4151 = vmatpush1.msra.mxu0 0.0
        %4152 = vmatprep.subr.mxu0 0.0
        %4153 = vmatpush1.msra.mxu0 0.0
        %4154 = vmatprep.subr.mxu0 0.0
        %4155 = vmatpush1.msra.mxu0 0.0
        %4156 = vmatprep.subr.mxu0 0.0
        %4157 = vmatpush1.msra.mxu0 0.0
        %4158 = vmatprep.subr.mxu0 0.0
        %4159 = vmatpush1.msra.mxu0 0.0
        %4160 = vmatprep.subr.mxu0 0.0
        %4161 = vmatpush1.msra.mxu0 0.0
        %4162 = vmatprep.subr.mxu0 0.0
        %4163 = vmatpush1.msra.mxu0 0.0
        %4164 = vmatprep.subr.mxu0 0.0
        %4165 = vmatpush1.msra.mxu0 0.0
        %4166 = vmatprep.subr.mxu0 %v4136
        %4167 = vmatpush1.msra.mxu0 %v4135
        %4168 = vmatprep.subr.mxu0 %v4134
        %4169 = vmatpush1.msra.mxu0 %v4133
        %4170 = vmatprep.subr.mxu0 %v4132
        %4171 = vmatpush1.msra.mxu0 %v4131
        %4172 = vmatprep.subr.mxu0 %v4130
        %4173 = vmatpush1.msra.mxu0 %v4129
        %4174 = vmatprep.subr.mxu0 0.0
        %4175 = vmatpush2.msra.mxu0 0.0
        %4176 = vmatprep.subr.mxu0 0.0
        %4177 = vmatpush2.msra.mxu0 0.0
        %4178 = vmatprep.subr.mxu0 0.0
        %4179 = vmatpush2.msra.mxu0 0.0
        %4180 = vmatprep.subr.mxu0 0.0
        %4181 = vmatpush2.msra.mxu0 0.0
        %4182 = vmatprep.subr.mxu0 0.0
        %4183 = vmatpush2.msra.mxu0 0.0
        %4184 = vmatprep.subr.mxu0 0.0
        %4185 = vmatpush2.msra.mxu0 0.0
        %4186 = vmatprep.subr.mxu0 0.0
        %4187 = vmatpush2.msra.mxu0 0.0
        %4188 = vmatprep.subr.mxu0 0.0
        %4189 = vmatpush2.msra.mxu0 0.0
        %4190 = vmatprep.subr.mxu0 0.0
        %4191 = vmatpush2.msra.mxu0 0.0
        %4192 = vmatprep.subr.mxu0 0.0
        %4193 = vmatpush2.msra.mxu0 0.0
        %4194 = vmatprep.subr.mxu0 0.0
        %4195 = vmatpush2.msra.mxu0 0.0
        %4196 = vmatprep.subr.mxu0 0.0
        %4197 = vmatpush2.msra.mxu0 0.0
        %4198 = vmatprep.subr.mxu0 0.0
        %4199 = vmatpush2.msra.mxu0 0.0
        %4200 = vmatprep.subr.mxu0 0.0
        %4201 = vmatpush2.msra.mxu0 0.0
        %4202 = vmatprep.subr.mxu0 0.0
        %4203 = vmatpush2.msra.mxu0 0.0
        %4204 = vmatprep.subr.mxu0 0.0
        %4205 = vmatpush2.msra.mxu0 0.0
        %4206 = vmatprep.mubr.f32.mxu0 0.0
        %4207 = vmatmul.mubr.f32.gmra.mxu0 %v4140
        %v4208 = vpop.f32.mrf.mxu0
        %v4209 = vadd.f32 0.0, %v4208
        %v4210 = vpop.f32.mrf.mxu0
        %v4211 = vadd.f32 0.0, %v4210
        %4212 = vdwg.mxu0
        %v4213 = vadd.f32 %v4127, %v4209
        %v4214 = vadd.f32 %v4128, %v4211
        %v4215 = vadd.f32 %v4213, %v1903
        %v4216 = vadd.f32 %v4214, %v1904
        %4217 = vst [vmem:[%s217] sm:$0xff] %v4215
        %4218 = vst [vmem:[%s217 + $0x8] sm:$0xff] %v4216
        %s4219 = sand.u32 %s137, 1
        %s4220 = scalar_lea.sflag [#allocation4], %s4219
        %s4221 = sand.u32 %s137, 1
        %s4222 = smul.addr %s4221, 16
        %s4223 = scalar_lea.vmem [#allocation3], %s4222
        // Predicated region
        $region41: #{tpu_custom_call.1} parent=39 // pred_check
          %p4224 = pneg %p147
        $region42: #{tpu_custom_call.1} parent=39 // pred_check_branch
          %4226 = sbr.rel (%p4224) target = $region44
        $region43: #{tpu_custom_call.1} parent=39 // pred_region
          %s4228 = ssub.s32 256, 256
          %4229 = vsyncadd %s4220, %s4228
          %s4230 = smul.addr %s19, 2
          %s4231 = smul.addr %s4230, 128
          %s4232 = scalar_lea.hbm %s5, %s4231
          %s4234 = sshll.u32 %s4223, 4
          %s4235 = int_to_ptr.vmem [resolvable:$true] %s4234
          %4237 = dma.vmem_to_hbm [thread:$0]  %s4235, 256, %s4232, %s4220
        $region44: #{tpu_custom_call.1} parent=39 // pred_fallthru
          _
      $region40: #{tpu_custom_call.1} parent=5 // pred_fallthru
        _
      %p4238 = scmp.le.s32.totalorder 2, %s14
      // Predicated region
      $region45: #{tpu_custom_call.1} parent=5 // pred_check
        %p4239 = pneg %p4238
      $region46: #{tpu_custom_call.1} parent=5 // pred_check_branch
        %4241 = sbr.rel (%p4239) target = $region48
      $region47: #{tpu_custom_call.1} parent=5 // pred_region
        %s4242 = ssub.s32 %s14, 2
        // Predicated region
        $region49: #{tpu_custom_call.1} parent=47 // pred_check
          %p4243 = pneg %p153
        $region50: #{tpu_custom_call.1} parent=47 // pred_check_branch
          %4245 = sbr.rel (%p4243) target = $region52
        $region51: #{tpu_custom_call.1} parent=47 // pred_region
          %s4246 = sand.u32 %s138, 1
          %s4247 = scalar_lea.sflag [#allocation4], %s4246
          %s4248 = sand.u32 %s138, 1
          %s4249 = smul.addr %s4248, 16
          %s4250 = scalar_lea.vmem [#allocation3], %s4249
          %4251 = dma.done %s4247, 256
        $region52: #{tpu_custom_call.1} parent=47 // pred_fallthru
          _
      $region48: #{tpu_custom_call.1} parent=5 // pred_fallthru
        _
    $region6: #{tpu_custom_call.1} parent=1 // loop_footer
      %s18 = sadd.s32 1, %s14
    $region7: #{tpu_custom_call.1} parent=1 // loop_footer_branch
      %13 = sbr.rel target = $region3
    $region8: #{tpu_custom_call.1} parent=1 // loop_exit
      _
    %4252 = vsyncpa [#allocation4], 1
    %s4253 = scalar_lea.sflag [#allocation4], 1
    %4254 = vsyncpa %s4253, 1

</llo_original>
